<compile_context>
chip_gen: v6e
topology: v6e:2x2x1
jax: 0.10.0
libtpu: 0.0.40
codegen_flags: <defaults>
</compile_context>

<pallas_src>
import math
import jax
import jax.numpy as jnp
from jax.experimental import pallas as pl
from jax.experimental.pallas import tpu as pltpu

# ----------------------------- configuration ------------------------------
IMAGE_SIZE = 16
OUT_IMG_SIZE = 16
OUT_CH = 4
BATCH = 2
PREDICT_FC_MULTY_COEFF = 2
SPECTRAL_FACTOR = 2.0
NEGATIVE_SLOPE = 0.01          # PyTorch nn.LeakyReLU default
SUBLANE = 8                    # f32 sublane count

IN_FEATURES = IMAGE_SIZE * IMAGE_SIZE                      # 256
INTER_CH = OUT_CH                                          # 4
INTER_FEATURES = INTER_CH * OUT_IMG_SIZE * OUT_IMG_SIZE    # 1024

# deep_fc as computed in __init__ (deep_predict_fc is None)
_deep_fc = int(math.floor(math.log(INTER_FEATURES / IN_FEATURES,
                                   PREDICT_FC_MULTY_COEFF))) + 1
DEEP_FC = max(3, _deep_fc)                                 # 3

# FC layer sizes: 256 -> 512 -> 1024 -> 1024
FC_DIMS = []
_in_fc = IN_FEATURES
for _ind in range(DEEP_FC):
    _out_fc = INTER_FEATURES if _ind == DEEP_FC - 1 else int(
        math.floor(_in_fc * PREDICT_FC_MULTY_COEFF))
    FC_DIMS.append((_in_fc, _out_fc))
    _in_fc = _out_fc
assert FC_DIMS == [(256, 512), (512, 1024), (1024, 1024)]
W2_IN, W2_OUT = FC_DIMS[-1]


# ------------------------------- kernel -----------------------------------
def _mlp_kernel(x_ref,
                w0_ref, b0_ref,
                w1_ref, b1_ref,
                w2_hbm, b2_ref,
                out_ref,
                w2_vmem, w2_sem):
    """Fused FC stack + scale + sigmoid.

    x_ref:   (Bp, 256)  bf16 (Bp = batch padded to multiple of 8)
    wN:      (in, out)  bf16 (already in kernel layout, no per-call transpose)
    bN_ref:  (1, out)   f32
    w2_hbm:  raw HBM ref, streamed manually into w2_vmem scratch
    out_ref: (Bp, 1024) f32
    """
    # Start streaming the big last-layer weight (2 MB bf16) now; its DMA
    # overlaps the first two (small) matmuls + activations.
    w2_copy = pltpu.make_async_copy(w2_hbm, w2_vmem, w2_sem)
    w2_copy.start()

    def leaky_relu(h):
        return jnp.where(h >= 0, h, NEGATIVE_SLOPE * h)

    h = jnp.dot(x_ref[...], w0_ref[...], preferred_element_type=jnp.float32)
    h = leaky_relu(h + b0_ref[...]).astype(jnp.bfloat16)

    h = jnp.dot(h, w1_ref[...], preferred_element_type=jnp.float32)
    h = leaky_relu(h + b1_ref[...]).astype(jnp.bfloat16)

    w2_copy.wait()
    h = jnp.dot(h, w2_vmem[...], preferred_element_type=jnp.float32)
    h = leaky_relu(h + b2_ref[...])

    out_ref[...] = jax.nn.sigmoid((1.0 / SPECTRAL_FACTOR) * h)


def _full_vmem_spec(shape):
    # whole array as a single block (block == full array satisfies tiling rule)
    return pl.BlockSpec(shape, lambda: tuple(0 for _ in shape))


# ------------------------------ wrapper ------------------------------------
def pack_params(params_f32):
    """One-time conversion from PyTorch layout [(W(out,in) f32, b(out,) f32)]
    to kernel layout [(W(in,out) bf16, b(1,out) f32)].  Done once at load
    time, NOT per forward call."""
    packed = []
    for w, b in params_f32:
        packed.append((jnp.asarray(w, jnp.float32).T.astype(jnp.bfloat16),
                       jnp.asarray(b, jnp.float32).reshape(1, -1)))
    return tuple(packed)


@jax.jit
def phase_retrieval_predictor_forward(magnitude, packed_params):
    """magnitude: (B, 1, H, W) float32 -> (out_features, intermediate_features),
    both of shape (B, out_ch, out_img_size, out_img_size)."""
    (w0, b0), (w1, b1), (w2, b2) = packed_params
    b = magnitude.shape[0]

    # input_norm is identity (magnitude_norm=None); crop is identity
    # (add_pad=0 -> input_mag_size_2d == (H, W)).
    mag_flat = magnitude.reshape(b, IN_FEATURES).astype(jnp.bfloat16)

    # Pad batch to a multiple of 8 sublanes -> no masked partial stores.
    pad_rows = (-b) % SUBLANE
    if pad_rows:
        mag_flat = jnp.pad(mag_flat, ((0, pad_rows), (0, 0)))
    bp = b + pad_rows

    fc_out = pl.pallas_call(
        _mlp_kernel,
        out_shape=jax.ShapeDtypeStruct((bp, INTER_FEATURES), jnp.float32),
        in_specs=[
            _full_vmem_spec((bp, IN_FEATURES)),
            _full_vmem_spec(w0.shape), _full_vmem_spec(b0.shape),
            _full_vmem_spec(w1.shape), _full_vmem_spec(b1.shape),
            pl.BlockSpec(memory_space=pl.ANY),   # w2 stays in HBM, DMA'd in-kernel
            _full_vmem_spec(b2.shape),
        ],
        out_specs=_full_vmem_spec((bp, INTER_FEATURES)),
        scratch_shapes=[
            pltpu.VMEM((W2_IN, W2_OUT), jnp.bfloat16),
            pltpu.SemaphoreType.DMA(()),
        ],
        compiler_params=pltpu.CompilerParams(vmem_limit_bytes=16 << 20),
    )(mag_flat, w0, b0, w1, b1, w2, b2)

    intermediate_features = fc_out[:b].reshape(
        b, INTER_CH, OUT_IMG_SIZE, OUT_IMG_SIZE)
    # use_conv_block_predictor == False -> out_features is intermediate_features
    out_features = intermediate_features
    return out_features, intermediate_features


# --------------------------- deterministic init ----------------------------
def init_params(key):
    """PyTorch-layout f32 parameters (reference ground truth)."""
    params = []
    for fin, fout in FC_DIMS:
        kw, kb, key = jax.random.split(key, 3)
        bound = 1.0 / math.sqrt(fin)  # PyTorch Linear default init range
        w = jax.random.uniform(kw, (fout, fin), jnp.float32, -bound, bound)
        bias = jax.random.uniform(kb, (fout,), jnp.float32, -bound, bound)
        params.append((w, bias))
    return params


# ------------------------------ reference ----------------------------------
def _reference_forward(magnitude, params_f32):
    b = magnitude.shape[0]
    h = magnitude.reshape(b, IN_FEATURES).astype(jnp.float32)
    for w, bias in params_f32:
        h = h @ w.T + bias
        h = jnp.where(h >= 0, h, NEGATIVE_SLOPE * h)
    h = jax.nn.sigmoid(h / SPECTRAL_FACTOR)
    inter = h.reshape(b, INTER_CH, OUT_IMG_SIZE, OUT_IMG_SIZE)
    return inter, inter


# -------------------------------- main --------------------------------------
if __name__ == "__main__":
    key = jax.random.PRNGKey(0)
    k_x, k_p = jax.random.split(key)
    # magnitude input, NCHW with a single channel
    magnitude = jax.random.uniform(k_x, (BATCH, 1, IMAGE_SIZE, IMAGE_SIZE),
                                   jnp.float32)
    params_f32 = init_params(k_p)
    kernel_params = pack_params(params_f32)   # one-time (in,out) bf16 packing

    out_features, intermediate_features = phase_retrieval_predictor_forward(
        magnitude, kernel_params)
    jax.block_until_ready((out_features, intermediate_features))

    ref_out, ref_inter = _reference_forward(magnitude, params_f32)
    assert out_features.shape == (BATCH, OUT_CH, OUT_IMG_SIZE, OUT_IMG_SIZE)
    # bf16 weights/activations through 3 layers -> relaxed tolerance vs f32 ref.
    assert jnp.allclose(out_features, ref_out, rtol=1e-2, atol=1e-2)
    assert jnp.allclose(intermediate_features, ref_inter, rtol=1e-2, atol=1e-2)

    print("KERNEL_OK")
</pallas_src>

<mosaic_0001>
module attributes {stable_mosaic.version = 11 : i64} {
  func.func @_mlp_kernel(%arg0: memref<8x256xbf16, #tpu.memory_space<vmem>>, %arg1: memref<256x512xbf16, #tpu.memory_space<vmem>>, %arg2: memref<1x512xf32, #tpu.memory_space<vmem>>, %arg3: memref<512x1024xbf16, #tpu.memory_space<vmem>>, %arg4: memref<1x1024xf32, #tpu.memory_space<vmem>>, %arg5: memref<1024x1024xbf16, #tpu.memory_space<any>>, %arg6: memref<1x1024xf32, #tpu.memory_space<vmem>>, %arg7: memref<8x1024xf32, #tpu.memory_space<vmem>>, %arg8: memref<1024x1024xbf16, #tpu.memory_space<vmem>>, %arg9: memref<!tpu.dma_semaphore, #tpu.memory_space<semaphore_mem>>) attributes {dimension_semantics = [], scalar_prefetch = 0 : i64, scratch_operands = 2 : i64, tpu.core_type = #tpu.core_type<tc>} {
    tpu.enqueue_dma source(%arg5 : memref<1024x1024xbf16, #tpu.memory_space<any>>) target(%arg8 : memref<1024x1024xbf16, #tpu.memory_space<vmem>>) target_semaphore(%arg9 : memref<!tpu.dma_semaphore, #tpu.memory_space<semaphore_mem>>)
    %c0 = arith.constant 0 : index
    %c0_0 = arith.constant 0 : index
    %0 = vector.load %arg0[%c0, %c0_0] : memref<8x256xbf16, #tpu.memory_space<vmem>>, vector<8x256xbf16>
    %c0_1 = arith.constant 0 : index
    %c0_2 = arith.constant 0 : index
    %1 = vector.load %arg1[%c0_1, %c0_2] : memref<256x512xbf16, #tpu.memory_space<vmem>>, vector<256x512xbf16>
    %cst = arith.constant dense<0.000000e+00> : vector<8x512xf32>
    %2 = tpu.matmul %0, %1, %cst {dimension_numbers = #tpu.dot_dimension_numbers<[1], [0], [0], [1], [0, 0, 1, 1], [], []>} : vector<8x256xbf16>, vector<256x512xbf16>, vector<8x512xf32> -> vector<8x512xf32>
    %c0_3 = arith.constant 0 : index
    %c0_4 = arith.constant 0 : index
    %3 = vector.load %arg2[%c0_3, %c0_4] : memref<1x512xf32, #tpu.memory_space<vmem>>, vector<1x512xf32>
    %4 = vector.broadcast %3 : vector<1x512xf32> to vector<8x512xf32>
    %5 = arith.addf %2, %4 : vector<8x512xf32>
    %cst_5 = arith.constant 0.000000e+00 : f32
    %6 = vector.broadcast %cst_5 : f32 to vector<8x512xf32>
    %7 = arith.cmpf oge, %5, %6 : vector<8x512xf32>
    %cst_6 = arith.constant 0.00999999977 : f32
    %8 = vector.broadcast %cst_6 : f32 to vector<8x512xf32>
    %9 = arith.mulf %8, %5 : vector<8x512xf32>
    %10 = arith.select %7, %5, %9 : vector<8x512xi1>, vector<8x512xf32>
    %11 = arith.truncf %10 : vector<8x512xf32> to vector<8x512xbf16>
    %c0_7 = arith.constant 0 : index
    %c0_8 = arith.constant 0 : index
    %12 = vector.load %arg3[%c0_7, %c0_8] : memref<512x1024xbf16, #tpu.memory_space<vmem>>, vector<512x1024xbf16>
    %cst_9 = arith.constant dense<0.000000e+00> : vector<8x1024xf32>
    %13 = tpu.matmul %11, %12, %cst_9 {dimension_numbers = #tpu.dot_dimension_numbers<[1], [0], [0], [1], [0, 0, 1, 1], [], []>} : vector<8x512xbf16>, vector<512x1024xbf16>, vector<8x1024xf32> -> vector<8x1024xf32>
    %c0_10 = arith.constant 0 : index
    %c0_11 = arith.constant 0 : index
    %14 = vector.load %arg4[%c0_10, %c0_11] : memref<1x1024xf32, #tpu.memory_space<vmem>>, vector<1x1024xf32>
    %15 = vector.broadcast %14 : vector<1x1024xf32> to vector<8x1024xf32>
    %16 = arith.addf %13, %15 : vector<8x1024xf32>
    %cst_12 = arith.constant 0.000000e+00 : f32
    %17 = vector.broadcast %cst_12 : f32 to vector<8x1024xf32>
    %18 = arith.cmpf oge, %16, %17 : vector<8x1024xf32>
    %cst_13 = arith.constant 0.00999999977 : f32
    %19 = vector.broadcast %cst_13 : f32 to vector<8x1024xf32>
    %20 = arith.mulf %19, %16 : vector<8x1024xf32>
    %21 = arith.select %18, %16, %20 : vector<8x1024xi1>, vector<8x1024xf32>
    %22 = arith.truncf %21 : vector<8x1024xf32> to vector<8x1024xbf16>
    tpu.wait_dma2 semaphore(%arg9 : memref<!tpu.dma_semaphore, #tpu.memory_space<semaphore_mem>>) src(%arg5 : memref<1024x1024xbf16, #tpu.memory_space<any>>) dst(%arg8 : memref<1024x1024xbf16, #tpu.memory_space<vmem>>)
    %c0_14 = arith.constant 0 : index
    %c0_15 = arith.constant 0 : index
    %23 = vector.load %arg8[%c0_14, %c0_15] : memref<1024x1024xbf16, #tpu.memory_space<vmem>>, vector<1024x1024xbf16>
    %cst_16 = arith.constant dense<0.000000e+00> : vector<8x1024xf32>
    %24 = tpu.matmul %22, %23, %cst_16 {dimension_numbers = #tpu.dot_dimension_numbers<[1], [0], [0], [1], [0, 0, 1, 1], [], []>} : vector<8x1024xbf16>, vector<1024x1024xbf16>, vector<8x1024xf32> -> vector<8x1024xf32>
    %c0_17 = arith.constant 0 : index
    %c0_18 = arith.constant 0 : index
    %25 = vector.load %arg6[%c0_17, %c0_18] : memref<1x1024xf32, #tpu.memory_space<vmem>>, vector<1x1024xf32>
    %26 = vector.broadcast %25 : vector<1x1024xf32> to vector<8x1024xf32>
    %27 = arith.addf %24, %26 : vector<8x1024xf32>
    %cst_19 = arith.constant 0.000000e+00 : f32
    %28 = vector.broadcast %cst_19 : f32 to vector<8x1024xf32>
    %29 = arith.cmpf oge, %27, %28 : vector<8x1024xf32>
    %cst_20 = arith.constant 0.00999999977 : f32
    %30 = vector.broadcast %cst_20 : f32 to vector<8x1024xf32>
    %31 = arith.mulf %30, %27 : vector<8x1024xf32>
    %32 = arith.select %29, %27, %31 : vector<8x1024xi1>, vector<8x1024xf32>
    %cst_21 = arith.constant 5.000000e-01 : f32
    %33 = vector.broadcast %cst_21 : f32 to vector<8x1024xf32>
    %34 = arith.mulf %33, %32 : vector<8x1024xf32>
    %35 = arith.negf %34 : vector<8x1024xf32>
    %36 = math.exp %35 : vector<8x1024xf32>
    %cst_22 = arith.constant 1.000000e+00 : f32
    %37 = vector.broadcast %cst_22 : f32 to vector<8x1024xf32>
    %38 = arith.addf %37, %36 : vector<8x1024xf32>
    %39 = arith.divf %37, %38 : vector<8x1024xf32>
    %c0_23 = arith.constant 0 : index
    %c0_24 = arith.constant 0 : index
    %40 = vector.load %arg7[%c0_23, %c0_24] : memref<8x1024xf32, #tpu.memory_space<vmem>>, vector<8x1024xf32>
    tpu.vector_store %arg7[%c0_23, %c0_24], %39 {strides = array<i32>} : memref<8x1024xf32, #tpu.memory_space<vmem>>, vector<8x1024xf32>,
    return
  }
}

</mosaic_0001>

<llo_original>
// kernel: phase_retrieval_predictor_forward.1
$region0: #{phase_retrieval_predictor_forward.1}
  #allocation0 [shape = 'u32[]', space=smem, size = 0x4, offset = 0x4, fixed_abs, tag = 'smem constant byte address 0x4 - core index']
  #allocation1 [shape = 'u32[144,128]{1,0:T(1,128)}', space=vmem, size = 0x12000, scoped, tag = 'internal scratch']
  #allocation2 [shape = 'bf16[1024,1024]{1,0:T(8,128)(2,1)}', space=vmem, size = 0x200000, scoped, tag = 'scratch operand']
  #allocation3 [shape = 's32[1]{0}', space=sflag, size = 0x4, scoped, tag = 'scratch operand']
  #allocation12 [shape = 's32[]', space=sflag, size = 0x4, offset = 0, fixed_abs, tag = 'sflag constant byte address 0x0 - dummy sync flag']
  #allocation13 [shape = 's32[]', space=sflag, size = 0x4, offset = 0, fixed_abs, tag = 'sflag constant byte address 0x0 - dummy sync flag']
  #allocation14 [shape = 'u32[]', space=smem, size = 0x4, offset = 0x44, fixed_abs, tag = 'smem constant byte address 0x44 - assertion arg 0']
  #allocation15 [shape = 'u32[]', space=smem, size = 0x4, offset = 0x48, fixed_abs, tag = 'smem constant byte address 0x48 - assertion arg 1']
  %s0 = inlined_call_operand.vmem [shape: bf16[8,256], index: 0, kind: input, shape index: {}]
  %s1 = inlined_call_operand.hbm [shape: bf16[256,512], index: 1, kind: input, shape index: {}]
  %s2 = inlined_call_operand.hbm [shape: f32[1,512], index: 2, kind: input, shape index: {}]
  %s3 = inlined_call_operand.hbm [shape: bf16[512,1024], index: 3, kind: input, shape index: {}]
  %s4 = inlined_call_operand.hbm [shape: f32[1,1024], index: 4, kind: input, shape index: {}]
  %s5 = inlined_call_operand.hbm [shape: bf16[1024,1024], index: 5, kind: input, shape index: {}]
  %s6 = inlined_call_operand.hbm [shape: f32[1,1024], index: 6, kind: input, shape index: {}]
  %s7 = inlined_call_operand.vmem [shape: f32[8,1024], index: 7, kind: output, shape index: {}]
  %s8 = sld [smem:[#allocation0]]
  $region58: #{phase_retrieval_predictor_forward.1} parent=0
    _
  %s10 = ssub.s32 1, %s8
  %s11 = scalar_select 0, %s10, %s8
  $region1: #{phase_retrieval_predictor_forward.1} parent=0
    #allocation4 [shape = 'u8[262144]{0}', space=vmem, size = 0x40000, scoped, tag = 'input window, operand 1, single buffered']
    #allocation5 [shape = 's32[1]{0}', space=sflag, size = 0x4, scoped, tag = 'scoped memory for phase_retrieval_predictor_forward.1']
    #allocation6 [shape = 'u8[2048]{0}', space=vmem, size = 0x800, scoped, tag = 'input window, operand 2, single buffered']
    #allocation7 [shape = 's32[1]{0}', space=sflag, size = 0x4, scoped, tag = 'scoped memory for phase_retrieval_predictor_forward.1']
    #allocation8 [shape = 'u8[1048576]{0}', space=vmem, size = 0x100000, scoped, tag = 'input window, operand 3, single buffered']
    #allocation9 [shape = 'u8[4096]{0}', space=vmem, size = 0x1000, scoped, tag = 'input window, operand 4, single buffered']
    #allocation10 [shape = 's32[1]{0}', space=sflag, size = 0x4, scoped, tag = 'scoped memory for phase_retrieval_predictor_forward.1']
    #allocation11 [shape = 'u8[4096]{0}', space=vmem, size = 0x1000, scoped, tag = 'input window, operand 6, single buffered']
    %12 = vsyncpa [#allocation5], 0
    %13 = vsyncpa [#allocation7], 0
    %14 = vsyncpa [#allocation10], 0
    // Predicated region
    $region2: #{phase_retrieval_predictor_forward.1} parent=1 // pred_check
      _
    $region3: #{phase_retrieval_predictor_forward.1} parent=1 // pred_check_branch
      %16 = sbr.rel (0) target = $region5
    $region4: #{phase_retrieval_predictor_forward.1} parent=1 // pred_region
      _
    $region5: #{phase_retrieval_predictor_forward.1} parent=1 // pred_fallthru
      _
    // Predicated region
    $region6: #{phase_retrieval_predictor_forward.1} parent=1 // pred_check
      _
    $region7: #{phase_retrieval_predictor_forward.1} parent=1 // pred_check_branch
      %18 = sbr.rel (0) target = $region9
    $region8: #{phase_retrieval_predictor_forward.1} parent=1 // pred_region
      %s20 = ssub.s32 8192, 8192
      %21 = vsyncadd [#allocation5], %s20
      %s22 = sshll.u32 [#allocation4], 4
      %s23 = int_to_ptr.vmem [resolvable:$true] %s22
      %28 = dma.hbm_to_vmem [thread:$0]  %s1, 8192, %s23, [#allocation5], 256, 256, 16
    $region9: #{phase_retrieval_predictor_forward.1} parent=1 // pred_fallthru
      _
    // Predicated region
    $region10: #{phase_retrieval_predictor_forward.1} parent=1 // pred_check
      _
    $region11: #{phase_retrieval_predictor_forward.1} parent=1 // pred_check_branch
      %30 = sbr.rel (0) target = $region13
    $region12: #{phase_retrieval_predictor_forward.1} parent=1 // pred_region
      %s32 = ssub.s32 64, 64
      %33 = vsyncadd [#allocation7], %s32
      %s35 = sshll.u32 [#allocation6], 4
      %s36 = int_to_ptr.vmem [resolvable:$true] %s35
      %38 = dma.hbm_to_vmem [thread:$0]  %s2, 64, %s36, [#allocation7]
    $region13: #{phase_retrieval_predictor_forward.1} parent=1 // pred_fallthru
      _
    // Predicated region
    $region14: #{phase_retrieval_predictor_forward.1} parent=1 // pred_check
      _
    $region15: #{phase_retrieval_predictor_forward.1} parent=1 // pred_check_branch
      %40 = sbr.rel (0) target = $region17
    $region16: #{phase_retrieval_predictor_forward.1} parent=1 // pred_region
      %s42 = ssub.s32 32768, 32768
      %43 = vsyncadd [#allocation7], %s42
      %s44 = sshll.u32 [#allocation8], 4
      %s45 = int_to_ptr.vmem [resolvable:$true] %s44
      %50 = dma.hbm_to_vmem [thread:$0]  %s3, 32768, %s45, [#allocation7], 512, 512, 32
    $region17: #{phase_retrieval_predictor_forward.1} parent=1 // pred_fallthru
      _
    // Predicated region
    $region18: #{phase_retrieval_predictor_forward.1} parent=1 // pred_check
      _
    $region19: #{phase_retrieval_predictor_forward.1} parent=1 // pred_check_branch
      %52 = sbr.rel (0) target = $region21
    $region20: #{phase_retrieval_predictor_forward.1} parent=1 // pred_region
      %s54 = ssub.s32 128, 128
      %55 = vsyncadd [#allocation10], %s54
      %s57 = sshll.u32 [#allocation9], 4
      %s58 = int_to_ptr.vmem [resolvable:$true] %s57
      %60 = dma.hbm_to_vmem [thread:$0]  %s4, 128, %s58, [#allocation10]
    $region21: #{phase_retrieval_predictor_forward.1} parent=1 // pred_fallthru
      _
    // Predicated region
    $region22: #{phase_retrieval_predictor_forward.1} parent=1 // pred_check
      _
    $region23: #{phase_retrieval_predictor_forward.1} parent=1 // pred_check_branch
      %62 = sbr.rel (0) target = $region25
    $region24: #{phase_retrieval_predictor_forward.1} parent=1 // pred_region
      %s64 = ssub.s32 128, 128
      %65 = vsyncadd [#allocation10], %s64
      %s67 = sshll.u32 [#allocation11], 4
      %s68 = int_to_ptr.vmem [resolvable:$true] %s67
      %70 = dma.hbm_to_vmem [thread:$0]  %s6, 128, %s68, [#allocation10]
    $region25: #{phase_retrieval_predictor_forward.1} parent=1 // pred_fallthru
      _
    // Predicated region
    $region26: #{phase_retrieval_predictor_forward.1} parent=1 // pred_check
      _
    $region27: #{phase_retrieval_predictor_forward.1} parent=1 // pred_check_branch
      %72 = sbr.rel (0) target = $region29
    $region28: #{phase_retrieval_predictor_forward.1} parent=1 // pred_region
      %73 = dma.done [#allocation5], 8192
    $region29: #{phase_retrieval_predictor_forward.1} parent=1 // pred_fallthru
      _
    // Predicated region
    $region30: #{phase_retrieval_predictor_forward.1} parent=1 // pred_check
      _
    $region31: #{phase_retrieval_predictor_forward.1} parent=1 // pred_check_branch
      %75 = sbr.rel (0) target = $region33
    $region32: #{phase_retrieval_predictor_forward.1} parent=1 // pred_region
      %76 = dma.done [#allocation7], 64
    $region33: #{phase_retrieval_predictor_forward.1} parent=1 // pred_fallthru
      _
    // Predicated region
    $region34: #{phase_retrieval_predictor_forward.1} parent=1 // pred_check
      _
    $region35: #{phase_retrieval_predictor_forward.1} parent=1 // pred_check_branch
      %78 = sbr.rel (0) target = $region37
    $region36: #{phase_retrieval_predictor_forward.1} parent=1 // pred_region
      %79 = dma.done [#allocation7], 32768
    $region37: #{phase_retrieval_predictor_forward.1} parent=1 // pred_fallthru
      _
    // Predicated region
    $region38: #{phase_retrieval_predictor_forward.1} parent=1 // pred_check
      _
    $region39: #{phase_retrieval_predictor_forward.1} parent=1 // pred_check_branch
      %81 = sbr.rel (0) target = $region41
    $region40: #{phase_retrieval_predictor_forward.1} parent=1 // pred_region
      %82 = dma.done [#allocation10], 128
    $region41: #{phase_retrieval_predictor_forward.1} parent=1 // pred_fallthru
      _
    // Predicated region
    $region42: #{phase_retrieval_predictor_forward.1} parent=1 // pred_check
      _
    $region43: #{phase_retrieval_predictor_forward.1} parent=1 // pred_check_branch
      %84 = sbr.rel (0) target = $region45
    $region44: #{phase_retrieval_predictor_forward.1} parent=1 // pred_region
      %85 = dma.done [#allocation10], 128
    $region45: #{phase_retrieval_predictor_forward.1} parent=1 // pred_fallthru
      _
    // Predicated region
    $region46: #{phase_retrieval_predictor_forward.1} parent=1 // pred_check
      _
    $region47: #{phase_retrieval_predictor_forward.1} parent=1 // pred_check_branch
      %87 = sbr.rel target = $region49
    $region48: #{phase_retrieval_predictor_forward.1} parent=1 // pred_region
      %88 = sst [smem:[#allocation14]] [#allocation13]
      %89 = sst [smem:[#allocation15]] [#allocation12]
    $region49: #{phase_retrieval_predictor_forward.1} parent=1 // pred_fallthru
      _
    %91 = shalt.err (0)
    %s93 = sshll.u32 [#allocation2], 4
    %s94 = int_to_ptr.vmem [resolvable:$true] %s93
    %96 = dma.hbm_to_vmem [thread:$0]  %s5, 65536, %s94, [#allocation3]
    %v97 = vld [vmem:[%s0] sm:$0xff]
    %v98 = vld [vmem:[#allocation4] sm:$0xff]
    %v99 = vld [vmem:[#allocation4 + $0x8] sm:$0xff]
    %v100 = vld [vmem:[#allocation4 + $0x10] sm:$0xff]
    %v101 = vld [vmem:[#allocation4 + $0x18] sm:$0xff]
    %v102 = vld [vmem:[#allocation4 + $0x20] sm:$0xff]
    %v103 = vld [vmem:[#allocation4 + $0x28] sm:$0xff]
    %v104 = vld [vmem:[#allocation4 + $0x30] sm:$0xff]
    %v105 = vld [vmem:[#allocation4 + $0x38] sm:$0xff]
    %v106 = vld [vmem:[#allocation4 + $0x40] sm:$0xff]
    %v107 = vld [vmem:[#allocation4 + $0x48] sm:$0xff]
    %v108 = vld [vmem:[#allocation4 + $0x50] sm:$0xff]
    %v109 = vld [vmem:[#allocation4 + $0x58] sm:$0xff]
    %v110 = vld [vmem:[#allocation4 + $0x60] sm:$0xff]
    %v111 = vld [vmem:[#allocation4 + $0x68] sm:$0xff]
    %v112 = vld [vmem:[#allocation4 + $0x70] sm:$0xff]
    %v113 = vld [vmem:[#allocation4 + $0x78] sm:$0xff]
    %v114 = vld [vmem:[#allocation4 + $0x80] sm:$0xff]
    %v115 = vld [vmem:[#allocation4 + $0x88] sm:$0xff]
    %v116 = vld [vmem:[#allocation4 + $0x90] sm:$0xff]
    %v117 = vld [vmem:[#allocation4 + $0x98] sm:$0xff]
    %v118 = vld [vmem:[#allocation4 + $0xa0] sm:$0xff]
    %v119 = vld [vmem:[#allocation4 + $0xa8] sm:$0xff]
    %v120 = vld [vmem:[#allocation4 + $0xb0] sm:$0xff]
    %v121 = vld [vmem:[#allocation4 + $0xb8] sm:$0xff]
    %v122 = vld [vmem:[#allocation4 + $0xc0] sm:$0xff]
    %v123 = vld [vmem:[#allocation4 + $0xc8] sm:$0xff]
    %v124 = vld [vmem:[#allocation4 + $0xd0] sm:$0xff]
    %v125 = vld [vmem:[#allocation4 + $0xd8] sm:$0xff]
    %v126 = vld [vmem:[#allocation4 + $0xe0] sm:$0xff]
    %v127 = vld [vmem:[#allocation4 + $0xe8] sm:$0xff]
    %v128 = vld [vmem:[#allocation4 + $0xf0] sm:$0xff]
    %v129 = vld [vmem:[#allocation4 + $0xf8] sm:$0xff]
    %v130 = vld [vmem:[#allocation4 + $0x100] sm:$0xff]
    %v131 = vld [vmem:[#allocation4 + $0x108] sm:$0xff]
    %v132 = vld [vmem:[#allocation4 + $0x110] sm:$0xff]
    %v133 = vld [vmem:[#allocation4 + $0x118] sm:$0xff]
    %v134 = vld [vmem:[#allocation4 + $0x120] sm:$0xff]
    %v135 = vld [vmem:[#allocation4 + $0x128] sm:$0xff]
    %v136 = vld [vmem:[#allocation4 + $0x130] sm:$0xff]
    %v137 = vld [vmem:[#allocation4 + $0x138] sm:$0xff]
    %v138 = vld [vmem:[#allocation4 + $0x140] sm:$0xff]
    %v139 = vld [vmem:[#allocation4 + $0x148] sm:$0xff]
    %v140 = vld [vmem:[#allocation4 + $0x150] sm:$0xff]
    %v141 = vld [vmem:[#allocation4 + $0x158] sm:$0xff]
    %v142 = vld [vmem:[#allocation4 + $0x160] sm:$0xff]
    %v143 = vld [vmem:[#allocation4 + $0x168] sm:$0xff]
    %v144 = vld [vmem:[#allocation4 + $0x170] sm:$0xff]
    %v145 = vld [vmem:[#allocation4 + $0x178] sm:$0xff]
    %v146 = vld [vmem:[#allocation4 + $0x180] sm:$0xff]
    %v147 = vld [vmem:[#allocation4 + $0x188] sm:$0xff]
    %v148 = vld [vmem:[#allocation4 + $0x190] sm:$0xff]
    %v149 = vld [vmem:[#allocation4 + $0x198] sm:$0xff]
    %v150 = vld [vmem:[#allocation4 + $0x1a0] sm:$0xff]
    %v151 = vld [vmem:[#allocation4 + $0x1a8] sm:$0xff]
    %v152 = vld [vmem:[#allocation4 + $0x1b0] sm:$0xff]
    %v153 = vld [vmem:[#allocation4 + $0x1b8] sm:$0xff]
    %v154 = vld [vmem:[#allocation4 + $0x1c0] sm:$0xff]
    %v155 = vld [vmem:[#allocation4 + $0x1c8] sm:$0xff]
    %v156 = vld [vmem:[#allocation4 + $0x1d0] sm:$0xff]
    %v157 = vld [vmem:[#allocation4 + $0x1d8] sm:$0xff]
    %v158 = vld [vmem:[#allocation4 + $0x1e0] sm:$0xff]
    %v159 = vld [vmem:[#allocation4 + $0x1e8] sm:$0xff]
    %v160 = vld [vmem:[#allocation4 + $0x1f0] sm:$0xff]
    %v161 = vld [vmem:[#allocation4 + $0x1f8] sm:$0xff]
    %v162 = vld [vmem:[#allocation6] sm:$0xf]
    %v164 = vlaneseq
    %v165 = vshrl.u32 %v164, 7
    %v166 = vsub.s32 0, %v165
    %v167 = vrot.slane %v162, %v166
    %v168 = vlaneseq
    %v169 = vshrl.u32 %v168, 7
    %v170 = vsub.s32 1, %v169
    %v171 = vrot.slane %v162, %v170
    %v172 = vlaneseq
    %v173 = vshrl.u32 %v172, 7
    %v174 = vsub.s32 2, %v173
    %v175 = vrot.slane %v162, %v174
    %v176 = vlaneseq
    %v177 = vshrl.u32 %v176, 7
    %v178 = vsub.s32 3, %v177
    %v179 = vrot.slane %v162, %v178
    %v185 = vunpack.c.l.b16 %v97
    %v186 = vunpack.c.h.b16 %v97
    %v187 = vpack.c.b16 %v185, %v185
    %v188 = vpack.c.b16 %v186, %v186
    %v255 = vunpack.c.l.b16 %v98
    %v256 = vunpack.c.h.b16 %v98
    %v257 = vunpack.c.l.b16 %v99
    %v258 = vunpack.c.h.b16 %v99
    %v259 = vunpack.c.l.b16 %v100
    %v260 = vunpack.c.h.b16 %v100
    %v261 = vunpack.c.l.b16 %v101
    %v262 = vunpack.c.h.b16 %v101
    %v263 = vunpack.c.l.b16 %v102
    %v264 = vunpack.c.h.b16 %v102
    %v265 = vunpack.c.l.b16 %v103
    %v266 = vunpack.c.h.b16 %v103
    %v267 = vunpack.c.l.b16 %v104
    %v268 = vunpack.c.h.b16 %v104
    %v269 = vunpack.c.l.b16 %v105
    %v270 = vunpack.c.h.b16 %v105
    %v271 = vunpack.c.l.b16 %v106
    %v272 = vunpack.c.h.b16 %v106
    %v273 = vunpack.c.l.b16 %v107
    %v274 = vunpack.c.h.b16 %v107
    %v275 = vunpack.c.l.b16 %v108
    %v276 = vunpack.c.h.b16 %v108
    %v277 = vunpack.c.l.b16 %v109
    %v278 = vunpack.c.h.b16 %v109
    %v279 = vunpack.c.l.b16 %v110
    %v280 = vunpack.c.h.b16 %v110
    %v281 = vunpack.c.l.b16 %v111
    %v282 = vunpack.c.h.b16 %v111
    %v283 = vunpack.c.l.b16 %v112
    %v284 = vunpack.c.h.b16 %v112
    %v285 = vunpack.c.l.b16 %v113
    %v286 = vunpack.c.h.b16 %v113
    %v287 = vunpack.c.l.b16 %v114
    %v288 = vunpack.c.h.b16 %v114
    %v289 = vunpack.c.l.b16 %v115
    %v290 = vunpack.c.h.b16 %v115
    %v291 = vunpack.c.l.b16 %v116
    %v292 = vunpack.c.h.b16 %v116
    %v293 = vunpack.c.l.b16 %v117
    %v294 = vunpack.c.h.b16 %v117
    %v295 = vunpack.c.l.b16 %v118
    %v296 = vunpack.c.h.b16 %v118
    %v297 = vunpack.c.l.b16 %v119
    %v298 = vunpack.c.h.b16 %v119
    %v299 = vunpack.c.l.b16 %v120
    %v300 = vunpack.c.h.b16 %v120
    %v301 = vunpack.c.l.b16 %v121
    %v302 = vunpack.c.h.b16 %v121
    %v303 = vunpack.c.l.b16 %v122
    %v304 = vunpack.c.h.b16 %v122
    %v305 = vunpack.c.l.b16 %v123
    %v306 = vunpack.c.h.b16 %v123
    %v307 = vunpack.c.l.b16 %v124
    %v308 = vunpack.c.h.b16 %v124
    %v309 = vunpack.c.l.b16 %v125
    %v310 = vunpack.c.h.b16 %v125
    %v311 = vunpack.c.l.b16 %v126
    %v312 = vunpack.c.h.b16 %v126
    %v313 = vunpack.c.l.b16 %v127
    %v314 = vunpack.c.h.b16 %v127
    %v315 = vunpack.c.l.b16 %v128
    %v316 = vunpack.c.h.b16 %v128
    %v317 = vunpack.c.l.b16 %v129
    %v318 = vunpack.c.h.b16 %v129
    %v319 = vunpack.c.l.b16 %v130
    %v320 = vunpack.c.h.b16 %v130
    %v321 = vunpack.c.l.b16 %v131
    %v322 = vunpack.c.h.b16 %v131
    %v323 = vunpack.c.l.b16 %v132
    %v324 = vunpack.c.h.b16 %v132
    %v325 = vunpack.c.l.b16 %v133
    %v326 = vunpack.c.h.b16 %v133
    %v327 = vunpack.c.l.b16 %v134
    %v328 = vunpack.c.h.b16 %v134
    %v329 = vunpack.c.l.b16 %v135
    %v330 = vunpack.c.h.b16 %v135
    %v331 = vunpack.c.l.b16 %v136
    %v332 = vunpack.c.h.b16 %v136
    %v333 = vunpack.c.l.b16 %v137
    %v334 = vunpack.c.h.b16 %v137
    %v335 = vunpack.c.l.b16 %v138
    %v336 = vunpack.c.h.b16 %v138
    %v337 = vunpack.c.l.b16 %v139
    %v338 = vunpack.c.h.b16 %v139
    %v339 = vunpack.c.l.b16 %v140
    %v340 = vunpack.c.h.b16 %v140
    %v341 = vunpack.c.l.b16 %v141
    %v342 = vunpack.c.h.b16 %v141
    %v343 = vunpack.c.l.b16 %v142
    %v344 = vunpack.c.h.b16 %v142
    %v345 = vunpack.c.l.b16 %v143
    %v346 = vunpack.c.h.b16 %v143
    %v347 = vunpack.c.l.b16 %v144
    %v348 = vunpack.c.h.b16 %v144
    %v349 = vunpack.c.l.b16 %v145
    %v350 = vunpack.c.h.b16 %v145
    %v351 = vunpack.c.l.b16 %v146
    %v352 = vunpack.c.h.b16 %v146
    %v353 = vunpack.c.l.b16 %v147
    %v354 = vunpack.c.h.b16 %v147
    %v355 = vunpack.c.l.b16 %v148
    %v356 = vunpack.c.h.b16 %v148
    %v357 = vunpack.c.l.b16 %v149
    %v358 = vunpack.c.h.b16 %v149
    %v359 = vunpack.c.l.b16 %v150
    %v360 = vunpack.c.h.b16 %v150
    %v361 = vunpack.c.l.b16 %v151
    %v362 = vunpack.c.h.b16 %v151
    %v363 = vunpack.c.l.b16 %v152
    %v364 = vunpack.c.h.b16 %v152
    %v365 = vunpack.c.l.b16 %v153
    %v366 = vunpack.c.h.b16 %v153
    %v367 = vunpack.c.l.b16 %v154
    %v368 = vunpack.c.h.b16 %v154
    %v369 = vunpack.c.l.b16 %v155
    %v370 = vunpack.c.h.b16 %v155
    %v371 = vunpack.c.l.b16 %v156
    %v372 = vunpack.c.h.b16 %v156
    %v373 = vunpack.c.l.b16 %v157
    %v374 = vunpack.c.h.b16 %v157
    %v375 = vunpack.c.l.b16 %v158
    %v376 = vunpack.c.h.b16 %v158
    %v377 = vunpack.c.l.b16 %v159
    %v378 = vunpack.c.h.b16 %v159
    %v379 = vunpack.c.l.b16 %v160
    %v380 = vunpack.c.h.b16 %v160
    %v381 = vunpack.c.l.b16 %v161
    %v382 = vunpack.c.h.b16 %v161
    %v383 = vpack.c.b16 %v259, %v255
    %v384 = vpack.c.b16 %v260, %v256
    %v385 = vpack.c.b16 %v261, %v257
    %v386 = vpack.c.b16 %v262, %v258
    %v387 = vpack.c.b16 %v267, %v263
    %v388 = vpack.c.b16 %v268, %v264
    %v389 = vpack.c.b16 %v269, %v265
    %v390 = vpack.c.b16 %v270, %v266
    %v391 = vpack.c.b16 %v275, %v271
    %v392 = vpack.c.b16 %v276, %v272
    %v393 = vpack.c.b16 %v277, %v273
    %v394 = vpack.c.b16 %v278, %v274
    %v395 = vpack.c.b16 %v283, %v279
    %v396 = vpack.c.b16 %v284, %v280
    %v397 = vpack.c.b16 %v285, %v281
    %v398 = vpack.c.b16 %v286, %v282
    %v399 = vpack.c.b16 %v291, %v287
    %v400 = vpack.c.b16 %v292, %v288
    %v401 = vpack.c.b16 %v293, %v289
    %v402 = vpack.c.b16 %v294, %v290
    %v403 = vpack.c.b16 %v299, %v295
    %v404 = vpack.c.b16 %v300, %v296
    %v405 = vpack.c.b16 %v301, %v297
    %v406 = vpack.c.b16 %v302, %v298
    %v407 = vpack.c.b16 %v307, %v303
    %v408 = vpack.c.b16 %v308, %v304
    %v409 = vpack.c.b16 %v309, %v305
    %v410 = vpack.c.b16 %v310, %v306
    %v411 = vpack.c.b16 %v315, %v311
    %v412 = vpack.c.b16 %v316, %v312
    %v413 = vpack.c.b16 %v317, %v313
    %v414 = vpack.c.b16 %v318, %v314
    %v415 = vpack.c.b16 %v323, %v319
    %v416 = vpack.c.b16 %v324, %v320
    %v417 = vpack.c.b16 %v325, %v321
    %v418 = vpack.c.b16 %v326, %v322
    %v419 = vpack.c.b16 %v331, %v327
    %v420 = vpack.c.b16 %v332, %v328
    %v421 = vpack.c.b16 %v333, %v329
    %v422 = vpack.c.b16 %v334, %v330
    %v423 = vpack.c.b16 %v339, %v335
    %v424 = vpack.c.b16 %v340, %v336
    %v425 = vpack.c.b16 %v341, %v337
    %v426 = vpack.c.b16 %v342, %v338
    %v427 = vpack.c.b16 %v347, %v343
    %v428 = vpack.c.b16 %v348, %v344
    %v429 = vpack.c.b16 %v349, %v345
    %v430 = vpack.c.b16 %v350, %v346
    %v431 = vpack.c.b16 %v355, %v351
    %v432 = vpack.c.b16 %v356, %v352
    %v433 = vpack.c.b16 %v357, %v353
    %v434 = vpack.c.b16 %v358, %v354
    %v435 = vpack.c.b16 %v363, %v359
    %v436 = vpack.c.b16 %v364, %v360
    %v437 = vpack.c.b16 %v365, %v361
    %v438 = vpack.c.b16 %v366, %v362
    %v439 = vpack.c.b16 %v371, %v367
    %v440 = vpack.c.b16 %v372, %v368
    %v441 = vpack.c.b16 %v373, %v369
    %v442 = vpack.c.b16 %v374, %v370
    %v443 = vpack.c.b16 %v379, %v375
    %v444 = vpack.c.b16 %v380, %v376
    %v445 = vpack.c.b16 %v381, %v377
    %v446 = vpack.c.b16 %v382, %v378
    %511 = vmatprep.subr.bf16.mxu0 %v412
    %512 = vmatpush1.bf16.msra.mxu0 %v411
    %513 = vmatprep.subr.bf16.mxu0 %v408
    %514 = vmatpush1.bf16.msra.mxu0 %v407
    %515 = vmatprep.subr.bf16.mxu0 %v404
    %516 = vmatpush1.bf16.msra.mxu0 %v403
    %517 = vmatprep.subr.bf16.mxu0 %v400
    %518 = vmatpush1.bf16.msra.mxu0 %v399
    %519 = vmatprep.subr.bf16.mxu0 %v396
    %520 = vmatpush1.bf16.msra.mxu0 %v395
    %521 = vmatprep.subr.bf16.mxu0 %v392
    %522 = vmatpush1.bf16.msra.mxu0 %v391
    %523 = vmatprep.subr.bf16.mxu0 %v388
    %524 = vmatpush1.bf16.msra.mxu0 %v387
    %525 = vmatprep.subr.bf16.mxu0 %v384
    %526 = vmatpush1.bf16.msra.mxu0 %v383
    %527 = vmatprep.subr.bf16.mxu0 %v444
    %528 = vmatpush2.bf16.msra.mxu0 %v443
    %529 = vmatprep.subr.bf16.mxu0 %v440
    %530 = vmatpush2.bf16.msra.mxu0 %v439
    %531 = vmatprep.subr.bf16.mxu0 %v436
    %532 = vmatpush2.bf16.msra.mxu0 %v435
    %533 = vmatprep.subr.bf16.mxu0 %v432
    %534 = vmatpush2.bf16.msra.mxu0 %v431
    %535 = vmatprep.subr.bf16.mxu0 %v428
    %536 = vmatpush2.bf16.msra.mxu0 %v427
    %537 = vmatprep.subr.bf16.mxu0 %v424
    %538 = vmatpush2.bf16.msra.mxu0 %v423
    %539 = vmatprep.subr.bf16.mxu0 %v420
    %540 = vmatpush2.bf16.msra.mxu0 %v419
    %541 = vmatprep.subr.bf16.mxu0 %v416
    %542 = vmatpush2.bf16.msra.mxu0 %v415
    %543 = vmatprep.mubr.bf16.mxu0 %v188
    %544 = vmatmul.mubr.bf16.gmra.mxu0 %v187
    %v545 = vpop.f32.mrf.mxu0
    %v546 = vadd.f32 %v167, %v545
    %v547 = vpop.f32.mrf.mxu0
    %v548 = vadd.f32 %v171, %v547
    %v549 = vpop.f32.mrf.mxu0
    %v550 = vpop.f32.mrf.mxu0
    %551 = vdwg.mxu0
    %552 = vmatprep.subr.bf16.mxu0 %v414
    %553 = vmatpush1.bf16.msra.mxu0 %v413
    %554 = vmatprep.subr.bf16.mxu0 %v410
    %555 = vmatpush1.bf16.msra.mxu0 %v409
    %556 = vmatprep.subr.bf16.mxu0 %v406
    %557 = vmatpush1.bf16.msra.mxu0 %v405
    %558 = vmatprep.subr.bf16.mxu0 %v402
    %559 = vmatpush1.bf16.msra.mxu0 %v401
    %560 = vmatprep.subr.bf16.mxu0 %v398
    %561 = vmatpush1.bf16.msra.mxu0 %v397
    %562 = vmatprep.subr.bf16.mxu0 %v394
    %563 = vmatpush1.bf16.msra.mxu0 %v393
    %564 = vmatprep.subr.bf16.mxu0 %v390
    %565 = vmatpush1.bf16.msra.mxu0 %v389
    %566 = vmatprep.subr.bf16.mxu0 %v386
    %567 = vmatpush1.bf16.msra.mxu0 %v385
    %568 = vmatprep.subr.bf16.mxu0 %v446
    %569 = vmatpush2.bf16.msra.mxu0 %v445
    %570 = vmatprep.subr.bf16.mxu0 %v442
    %571 = vmatpush2.bf16.msra.mxu0 %v441
    %572 = vmatprep.subr.bf16.mxu0 %v438
    %573 = vmatpush2.bf16.msra.mxu0 %v437
    %574 = vmatprep.subr.bf16.mxu0 %v434
    %575 = vmatpush2.bf16.msra.mxu0 %v433
    %576 = vmatprep.subr.bf16.mxu0 %v430
    %577 = vmatpush2.bf16.msra.mxu0 %v429
    %578 = vmatprep.subr.bf16.mxu0 %v426
    %579 = vmatpush2.bf16.msra.mxu0 %v425
    %580 = vmatprep.subr.bf16.mxu0 %v422
    %581 = vmatpush2.bf16.msra.mxu0 %v421
    %582 = vmatprep.subr.bf16.mxu0 %v418
    %583 = vmatpush2.bf16.msra.mxu0 %v417
    %584 = vmatprep.mubr.bf16.mxu0 %v188
    %585 = vmatmul.mubr.bf16.gmra.mxu0 %v187
    %v586 = vpop.f32.mrf.mxu0
    %v587 = vadd.f32 %v175, %v586
    %v588 = vpop.f32.mrf.mxu0
    %v589 = vadd.f32 %v179, %v588
    %v590 = vpop.f32.mrf.mxu0
    %v591 = vpop.f32.mrf.mxu0
    %592 = vdwg.mxu0
    %vm593 = vcmp.ge.f32.partialorder %v546, 0.0
    %vm594 = vcmp.ge.f32.partialorder %v548, 0.0
    %vm595 = vcmp.ge.f32.partialorder %v587, 0.0
    %vm596 = vcmp.ge.f32.partialorder %v589, 0.0
    %v597 = vmul.f32 %v546, 0.01
    %v598 = vmul.f32 %v548, 0.01
    %v599 = vmul.f32 %v587, 0.01
    %v600 = vmul.f32 %v589, 0.01
    %v601 = vsel %vm593, %v546, %v597
    %v602 = vsel %vm594, %v548, %v598
    %v603 = vsel %vm595, %v587, %v599
    %v604 = vsel %vm596, %v589, %v600
    %v605 = vpack.c.bf16 %v601, %v601
    %v606 = vpack.c.bf16 %v602, %v602
    %v607 = vpack.c.bf16 %v603, %v603
    %v608 = vpack.c.bf16 %v604, %v604
    %v609 = vld [vmem:[#allocation8] sm:$0xff]
    %v610 = vld [vmem:[#allocation8 + $0x8] sm:$0xff]
    %v611 = vld [vmem:[#allocation8 + $0x10] sm:$0xff]
    %v612 = vld [vmem:[#allocation8 + $0x18] sm:$0xff]
    %v613 = vld [vmem:[#allocation8 + $0x20] sm:$0xff]
    %v614 = vld [vmem:[#allocation8 + $0x28] sm:$0xff]
    %v615 = vld [vmem:[#allocation8 + $0x30] sm:$0xff]
    %v616 = vld [vmem:[#allocation8 + $0x38] sm:$0xff]
    %v617 = vld [vmem:[#allocation8 + $0x40] sm:$0xff]
    %v618 = vld [vmem:[#allocation8 + $0x48] sm:$0xff]
    %v619 = vld [vmem:[#allocation8 + $0x50] sm:$0xff]
    %v620 = vld [vmem:[#allocation8 + $0x58] sm:$0xff]
    %v621 = vld [vmem:[#allocation8 + $0x60] sm:$0xff]
    %v622 = vld [vmem:[#allocation8 + $0x68] sm:$0xff]
    %v623 = vld [vmem:[#allocation8 + $0x70] sm:$0xff]
    %v624 = vld [vmem:[#allocation8 + $0x78] sm:$0xff]
    %v625 = vld [vmem:[#allocation8 + $0x80] sm:$0xff]
    %v626 = vld [vmem:[#allocation8 + $0x88] sm:$0xff]
    %v627 = vld [vmem:[#allocation8 + $0x90] sm:$0xff]
    %v628 = vld [vmem:[#allocation8 + $0x98] sm:$0xff]
    %v629 = vld [vmem:[#allocation8 + $0xa0] sm:$0xff]
    %v630 = vld [vmem:[#allocation8 + $0xa8] sm:$0xff]
    %v631 = vld [vmem:[#allocation8 + $0xb0] sm:$0xff]
    %v632 = vld [vmem:[#allocation8 + $0xb8] sm:$0xff]
    %v633 = vld [vmem:[#allocation8 + $0xc0] sm:$0xff]
    %v634 = vld [vmem:[#allocation8 + $0xc8] sm:$0xff]
    %v635 = vld [vmem:[#allocation8 + $0xd0] sm:$0xff]
    %v636 = vld [vmem:[#allocation8 + $0xd8] sm:$0xff]
    %v637 = vld [vmem:[#allocation8 + $0xe0] sm:$0xff]
    %v638 = vld [vmem:[#allocation8 + $0xe8] sm:$0xff]
    %v639 = vld [vmem:[#allocation8 + $0xf0] sm:$0xff]
    %v640 = vld [vmem:[#allocation8 + $0xf8] sm:$0xff]
    %v641 = vld [vmem:[#allocation8 + $0x100] sm:$0xff]
    %v642 = vld [vmem:[#allocation8 + $0x108] sm:$0xff]
    %v643 = vld [vmem:[#allocation8 + $0x110] sm:$0xff]
    %v644 = vld [vmem:[#allocation8 + $0x118] sm:$0xff]
    %v645 = vld [vmem:[#allocation8 + $0x120] sm:$0xff]
    %v646 = vld [vmem:[#allocation8 + $0x128] sm:$0xff]
    %v647 = vld [vmem:[#allocation8 + $0x130] sm:$0xff]
    %v648 = vld [vmem:[#allocation8 + $0x138] sm:$0xff]
    %v649 = vld [vmem:[#allocation8 + $0x140] sm:$0xff]
    %v650 = vld [vmem:[#allocation8 + $0x148] sm:$0xff]
    %v651 = vld [vmem:[#allocation8 + $0x150] sm:$0xff]
    %v652 = vld [vmem:[#allocation8 + $0x158] sm:$0xff]
    %v653 = vld [vmem:[#allocation8 + $0x160] sm:$0xff]
    %v654 = vld [vmem:[#allocation8 + $0x168] sm:$0xff]
    %v655 = vld [vmem:[#allocation8 + $0x170] sm:$0xff]
    %v656 = vld [vmem:[#allocation8 + $0x178] sm:$0xff]
    %v657 = vld [vmem:[#allocation8 + $0x180] sm:$0xff]
    %v658 = vld [vmem:[#allocation8 + $0x188] sm:$0xff]
    %v659 = vld [vmem:[#allocation8 + $0x190] sm:$0xff]
    %v660 = vld [vmem:[#allocation8 + $0x198] sm:$0xff]
    %v661 = vld [vmem:[#allocation8 + $0x1a0] sm:$0xff]
    %v662 = vld [vmem:[#allocation8 + $0x1a8] sm:$0xff]
    %v663 = vld [vmem:[#allocation8 + $0x1b0] sm:$0xff]
    %v664 = vld [vmem:[#allocation8 + $0x1b8] sm:$0xff]
    %v665 = vld [vmem:[#allocation8 + $0x1c0] sm:$0xff]
    %v666 = vld [vmem:[#allocation8 + $0x1c8] sm:$0xff]
    %v667 = vld [vmem:[#allocation8 + $0x1d0] sm:$0xff]
    %v668 = vld [vmem:[#allocation8 + $0x1d8] sm:$0xff]
    %v669 = vld [vmem:[#allocation8 + $0x1e0] sm:$0xff]
    %v670 = vld [vmem:[#allocation8 + $0x1e8] sm:$0xff]
    %v671 = vld [vmem:[#allocation8 + $0x1f0] sm:$0xff]
    %v672 = vld [vmem:[#allocation8 + $0x1f8] sm:$0xff]
    %v673 = vld [vmem:[#allocation8 + $0x200] sm:$0xff]
    %v674 = vld [vmem:[#allocation8 + $0x208] sm:$0xff]
    %v675 = vld [vmem:[#allocation8 + $0x210] sm:$0xff]
    %v676 = vld [vmem:[#allocation8 + $0x218] sm:$0xff]
    %v677 = vld [vmem:[#allocation8 + $0x220] sm:$0xff]
    %v678 = vld [vmem:[#allocation8 + $0x228] sm:$0xff]
    %v679 = vld [vmem:[#allocation8 + $0x230] sm:$0xff]
    %v680 = vld [vmem:[#allocation8 + $0x238] sm:$0xff]
    %v681 = vld [vmem:[#allocation8 + $0x240] sm:$0xff]
    %v682 = vld [vmem:[#allocation8 + $0x248] sm:$0xff]
    %v683 = vld [vmem:[#allocation8 + $0x250] sm:$0xff]
    %v684 = vld [vmem:[#allocation8 + $0x258] sm:$0xff]
    %v685 = vld [vmem:[#allocation8 + $0x260] sm:$0xff]
    %v686 = vld [vmem:[#allocation8 + $0x268] sm:$0xff]
    %v687 = vld [vmem:[#allocation8 + $0x270] sm:$0xff]
    %v688 = vld [vmem:[#allocation8 + $0x278] sm:$0xff]
    %v689 = vld [vmem:[#allocation8 + $0x280] sm:$0xff]
    %v690 = vld [vmem:[#allocation8 + $0x288] sm:$0xff]
    %v691 = vld [vmem:[#allocation8 + $0x290] sm:$0xff]
    %v692 = vld [vmem:[#allocation8 + $0x298] sm:$0xff]
    %v693 = vld [vmem:[#allocation8 + $0x2a0] sm:$0xff]
    %v694 = vld [vmem:[#allocation8 + $0x2a8] sm:$0xff]
    %v695 = vld [vmem:[#allocation8 + $0x2b0] sm:$0xff]
    %v696 = vld [vmem:[#allocation8 + $0x2b8] sm:$0xff]
    %v697 = vld [vmem:[#allocation8 + $0x2c0] sm:$0xff]
    %v698 = vld [vmem:[#allocation8 + $0x2c8] sm:$0xff]
    %v699 = vld [vmem:[#allocation8 + $0x2d0] sm:$0xff]
    %v700 = vld [vmem:[#allocation8 + $0x2d8] sm:$0xff]
    %v701 = vld [vmem:[#allocation8 + $0x2e0] sm:$0xff]
    %v702 = vld [vmem:[#allocation8 + $0x2e8] sm:$0xff]
    %v703 = vld [vmem:[#allocation8 + $0x2f0] sm:$0xff]
    %v704 = vld [vmem:[#allocation8 + $0x2f8] sm:$0xff]
    %v705 = vld [vmem:[#allocation8 + $0x300] sm:$0xff]
    %v706 = vld [vmem:[#allocation8 + $0x308] sm:$0xff]
    %v707 = vld [vmem:[#allocation8 + $0x310] sm:$0xff]
    %v708 = vld [vmem:[#allocation8 + $0x318] sm:$0xff]
    %v709 = vld [vmem:[#allocation8 + $0x320] sm:$0xff]
    %v710 = vld [vmem:[#allocation8 + $0x328] sm:$0xff]
    %v711 = vld [vmem:[#allocation8 + $0x330] sm:$0xff]
    %v712 = vld [vmem:[#allocation8 + $0x338] sm:$0xff]
    %v713 = vld [vmem:[#allocation8 + $0x340] sm:$0xff]
    %v714 = vld [vmem:[#allocation8 + $0x348] sm:$0xff]
    %v715 = vld [vmem:[#allocation8 + $0x350] sm:$0xff]
    %v716 = vld [vmem:[#allocation8 + $0x358] sm:$0xff]
    %v717 = vld [vmem:[#allocation8 + $0x360] sm:$0xff]
    %v718 = vld [vmem:[#allocation8 + $0x368] sm:$0xff]
    %v719 = vld [vmem:[#allocation8 + $0x370] sm:$0xff]
    %v720 = vld [vmem:[#allocation8 + $0x378] sm:$0xff]
    %v721 = vld [vmem:[#allocation8 + $0x380] sm:$0xff]
    %v722 = vld [vmem:[#allocation8 + $0x388] sm:$0xff]
    %v723 = vld [vmem:[#allocation8 + $0x390] sm:$0xff]
    %v724 = vld [vmem:[#allocation8 + $0x398] sm:$0xff]
    %v725 = vld [vmem:[#allocation8 + $0x3a0] sm:$0xff]
    %v726 = vld [vmem:[#allocation8 + $0x3a8] sm:$0xff]
    %v727 = vld [vmem:[#allocation8 + $0x3b0] sm:$0xff]
    %v728 = vld [vmem:[#allocation8 + $0x3b8] sm:$0xff]
    %v729 = vld [vmem:[#allocation8 + $0x3c0] sm:$0xff]
    %v730 = vld [vmem:[#allocation8 + $0x3c8] sm:$0xff]
    %v731 = vld [vmem:[#allocation8 + $0x3d0] sm:$0xff]
    %v732 = vld [vmem:[#allocation8 + $0x3d8] sm:$0xff]
    %v733 = vld [vmem:[#allocation8 + $0x3e0] sm:$0xff]
    %v734 = vld [vmem:[#allocation8 + $0x3e8] sm:$0xff]
    %v735 = vld [vmem:[#allocation8 + $0x3f0] sm:$0xff]
    %v736 = vld [vmem:[#allocation8 + $0x3f8] sm:$0xff]
    %v737 = vld [vmem:[#allocation8 + $0x400] sm:$0xff]
    %v738 = vld [vmem:[#allocation8 + $0x408] sm:$0xff]
    %v739 = vld [vmem:[#allocation8 + $0x410] sm:$0xff]
    %v740 = vld [vmem:[#allocation8 + $0x418] sm:$0xff]
    %v741 = vld [vmem:[#allocation8 + $0x420] sm:$0xff]
    %v742 = vld [vmem:[#allocation8 + $0x428] sm:$0xff]
    %v743 = vld [vmem:[#allocation8 + $0x430] sm:$0xff]
    %v744 = vld [vmem:[#allocation8 + $0x438] sm:$0xff]
    %v745 = vld [vmem:[#allocation8 + $0x440] sm:$0xff]
    %v746 = vld [vmem:[#allocation8 + $0x448] sm:$0xff]
    %v747 = vld [vmem:[#allocation8 + $0x450] sm:$0xff]
    %v748 = vld [vmem:[#allocation8 + $0x458] sm:$0xff]
    %v749 = vld [vmem:[#allocation8 + $0x460] sm:$0xff]
    %v750 = vld [vmem:[#allocation8 + $0x468] sm:$0xff]
    %v751 = vld [vmem:[#allocation8 + $0x470] sm:$0xff]
    %v752 = vld [vmem:[#allocation8 + $0x478] sm:$0xff]
    %v753 = vld [vmem:[#allocation8 + $0x480] sm:$0xff]
    %v754 = vld [vmem:[#allocation8 + $0x488] sm:$0xff]
    %v755 = vld [vmem:[#allocation8 + $0x490] sm:$0xff]
    %v756 = vld [vmem:[#allocation8 + $0x498] sm:$0xff]
    %v757 = vld [vmem:[#allocation8 + $0x4a0] sm:$0xff]
    %v758 = vld [vmem:[#allocation8 + $0x4a8] sm:$0xff]
    %v759 = vld [vmem:[#allocation8 + $0x4b0] sm:$0xff]
    %v760 = vld [vmem:[#allocation8 + $0x4b8] sm:$0xff]
    %v761 = vld [vmem:[#allocation8 + $0x4c0] sm:$0xff]
    %v762 = vld [vmem:[#allocation8 + $0x4c8] sm:$0xff]
    %v763 = vld [vmem:[#allocation8 + $0x4d0] sm:$0xff]
    %v764 = vld [vmem:[#allocation8 + $0x4d8] sm:$0xff]
    %v765 = vld [vmem:[#allocation8 + $0x4e0] sm:$0xff]
    %v766 = vld [vmem:[#allocation8 + $0x4e8] sm:$0xff]
    %v767 = vld [vmem:[#allocation8 + $0x4f0] sm:$0xff]
    %v768 = vld [vmem:[#allocation8 + $0x4f8] sm:$0xff]
    %v769 = vld [vmem:[#allocation8 + $0x500] sm:$0xff]
    %v770 = vld [vmem:[#allocation8 + $0x508] sm:$0xff]
    %v771 = vld [vmem:[#allocation8 + $0x510] sm:$0xff]
    %v772 = vld [vmem:[#allocation8 + $0x518] sm:$0xff]
    %v773 = vld [vmem:[#allocation8 + $0x520] sm:$0xff]
    %v774 = vld [vmem:[#allocation8 + $0x528] sm:$0xff]
    %v775 = vld [vmem:[#allocation8 + $0x530] sm:$0xff]
    %v776 = vld [vmem:[#allocation8 + $0x538] sm:$0xff]
    %v777 = vld [vmem:[#allocation8 + $0x540] sm:$0xff]
    %v778 = vld [vmem:[#allocation8 + $0x548] sm:$0xff]
    %v779 = vld [vmem:[#allocation8 + $0x550] sm:$0xff]
    %v780 = vld [vmem:[#allocation8 + $0x558] sm:$0xff]
    %v781 = vld [vmem:[#allocation8 + $0x560] sm:$0xff]
    %v782 = vld [vmem:[#allocation8 + $0x568] sm:$0xff]
    %v783 = vld [vmem:[#allocation8 + $0x570] sm:$0xff]
    %v784 = vld [vmem:[#allocation8 + $0x578] sm:$0xff]
    %v785 = vld [vmem:[#allocation8 + $0x580] sm:$0xff]
    %v786 = vld [vmem:[#allocation8 + $0x588] sm:$0xff]
    %v787 = vld [vmem:[#allocation8 + $0x590] sm:$0xff]
    %v788 = vld [vmem:[#allocation8 + $0x598] sm:$0xff]
    %v789 = vld [vmem:[#allocation8 + $0x5a0] sm:$0xff]
    %v790 = vld [vmem:[#allocation8 + $0x5a8] sm:$0xff]
    %v791 = vld [vmem:[#allocation8 + $0x5b0] sm:$0xff]
    %v792 = vld [vmem:[#allocation8 + $0x5b8] sm:$0xff]
    %v793 = vld [vmem:[#allocation8 + $0x5c0] sm:$0xff]
    %v794 = vld [vmem:[#allocation8 + $0x5c8] sm:$0xff]
    %v795 = vld [vmem:[#allocation8 + $0x5d0] sm:$0xff]
    %v796 = vld [vmem:[#allocation8 + $0x5d8] sm:$0xff]
    %v797 = vld [vmem:[#allocation8 + $0x5e0] sm:$0xff]
    %v798 = vld [vmem:[#allocation8 + $0x5e8] sm:$0xff]
    %v799 = vld [vmem:[#allocation8 + $0x5f0] sm:$0xff]
    %v800 = vld [vmem:[#allocation8 + $0x5f8] sm:$0xff]
    %v801 = vld [vmem:[#allocation8 + $0x600] sm:$0xff]
    %v802 = vld [vmem:[#allocation8 + $0x608] sm:$0xff]
    %v803 = vld [vmem:[#allocation8 + $0x610] sm:$0xff]
    %v804 = vld [vmem:[#allocation8 + $0x618] sm:$0xff]
    %v805 = vld [vmem:[#allocation8 + $0x620] sm:$0xff]
    %v806 = vld [vmem:[#allocation8 + $0x628] sm:$0xff]
    %v807 = vld [vmem:[#allocation8 + $0x630] sm:$0xff]
    %v808 = vld [vmem:[#allocation8 + $0x638] sm:$0xff]
    %v809 = vld [vmem:[#allocation8 + $0x640] sm:$0xff]
    %v810 = vld [vmem:[#allocation8 + $0x648] sm:$0xff]
    %v811 = vld [vmem:[#allocation8 + $0x650] sm:$0xff]
    %v812 = vld [vmem:[#allocation8 + $0x658] sm:$0xff]
    %v813 = vld [vmem:[#allocation8 + $0x660] sm:$0xff]
    %v814 = vld [vmem:[#allocation8 + $0x668] sm:$0xff]
    %v815 = vld [vmem:[#allocation8 + $0x670] sm:$0xff]
    %v816 = vld [vmem:[#allocation8 + $0x678] sm:$0xff]
    %v817 = vld [vmem:[#allocation8 + $0x680] sm:$0xff]
    %v818 = vld [vmem:[#allocation8 + $0x688] sm:$0xff]
    %v819 = vld [vmem:[#allocation8 + $0x690] sm:$0xff]
    %v820 = vld [vmem:[#allocation8 + $0x698] sm:$0xff]
    %v821 = vld [vmem:[#allocation8 + $0x6a0] sm:$0xff]
    %v822 = vld [vmem:[#allocation8 + $0x6a8] sm:$0xff]
    %v823 = vld [vmem:[#allocation8 + $0x6b0] sm:$0xff]
    %v824 = vld [vmem:[#allocation8 + $0x6b8] sm:$0xff]
    %v825 = vld [vmem:[#allocation8 + $0x6c0] sm:$0xff]
    %v826 = vld [vmem:[#allocation8 + $0x6c8] sm:$0xff]
    %v827 = vld [vmem:[#allocation8 + $0x6d0] sm:$0xff]
    %v828 = vld [vmem:[#allocation8 + $0x6d8] sm:$0xff]
    %v829 = vld [vmem:[#allocation8 + $0x6e0] sm:$0xff]
    %v830 = vld [vmem:[#allocation8 + $0x6e8] sm:$0xff]
    %v831 = vld [vmem:[#allocation8 + $0x6f0] sm:$0xff]
    %v832 = vld [vmem:[#allocation8 + $0x6f8] sm:$0xff]
    %v833 = vld [vmem:[#allocation8 + $0x700] sm:$0xff]
    %v834 = vld [vmem:[#allocation8 + $0x708] sm:$0xff]
    %v835 = vld [vmem:[#allocation8 + $0x710] sm:$0xff]
    %v836 = vld [vmem:[#allocation8 + $0x718] sm:$0xff]
    %v837 = vld [vmem:[#allocation8 + $0x720] sm:$0xff]
    %v838 = vld [vmem:[#allocation8 + $0x728] sm:$0xff]
    %v839 = vld [vmem:[#allocation8 + $0x730] sm:$0xff]
    %v840 = vld [vmem:[#allocation8 + $0x738] sm:$0xff]
    %v841 = vld [vmem:[#allocation8 + $0x740] sm:$0xff]
    %v842 = vld [vmem:[#allocation8 + $0x748] sm:$0xff]
    %v843 = vld [vmem:[#allocation8 + $0x750] sm:$0xff]
    %v844 = vld [vmem:[#allocation8 + $0x758] sm:$0xff]
    %v845 = vld [vmem:[#allocation8 + $0x760] sm:$0xff]
    %v846 = vld [vmem:[#allocation8 + $0x768] sm:$0xff]
    %v847 = vld [vmem:[#allocation8 + $0x770] sm:$0xff]
    %v848 = vld [vmem:[#allocation8 + $0x778] sm:$0xff]
    %v849 = vld [vmem:[#allocation8 + $0x780] sm:$0xff]
    %v850 = vld [vmem:[#allocation8 + $0x788] sm:$0xff]
    %v851 = vld [vmem:[#allocation8 + $0x790] sm:$0xff]
    %v852 = vld [vmem:[#allocation8 + $0x798] sm:$0xff]
    %v853 = vld [vmem:[#allocation8 + $0x7a0] sm:$0xff]
    %v854 = vld [vmem:[#allocation8 + $0x7a8] sm:$0xff]
    %v855 = vld [vmem:[#allocation8 + $0x7b0] sm:$0xff]
    %v856 = vld [vmem:[#allocation8 + $0x7b8] sm:$0xff]
    %v857 = vld [vmem:[#allocation8 + $0x7c0] sm:$0xff]
    %v858 = vld [vmem:[#allocation8 + $0x7c8] sm:$0xff]
    %v859 = vld [vmem:[#allocation8 + $0x7d0] sm:$0xff]
    %v860 = vld [vmem:[#allocation8 + $0x7d8] sm:$0xff]
    %v861 = vld [vmem:[#allocation8 + $0x7e0] sm:$0xff]
    %v862 = vld [vmem:[#allocation8 + $0x7e8] sm:$0xff]
    %v863 = vld [vmem:[#allocation8 + $0x7f0] sm:$0xff]
    %v864 = vld [vmem:[#allocation8 + $0x7f8] sm:$0xff]
    %v865 = vld [vmem:[#allocation9] sm:$0xff]
    %v867 = vlaneseq
    %v868 = vshrl.u32 %v867, 7
    %v869 = vsub.s32 0, %v868
    %v870 = vrot.slane %v865, %v869
    %v871 = vlaneseq
    %v872 = vshrl.u32 %v871, 7
    %v873 = vsub.s32 1, %v872
    %v874 = vrot.slane %v865, %v873
    %v875 = vlaneseq
    %v876 = vshrl.u32 %v875, 7
    %v877 = vsub.s32 2, %v876
    %v878 = vrot.slane %v865, %v877
    %v879 = vlaneseq
    %v880 = vshrl.u32 %v879, 7
    %v881 = vsub.s32 3, %v880
    %v882 = vrot.slane %v865, %v881
    %v883 = vlaneseq
    %v884 = vshrl.u32 %v883, 7
    %v885 = vsub.s32 4, %v884
    %v886 = vrot.slane %v865, %v885
    %v887 = vlaneseq
    %v888 = vshrl.u32 %v887, 7
    %v889 = vsub.s32 5, %v888
    %v890 = vrot.slane %v865, %v889
    %v891 = vlaneseq
    %v892 = vshrl.u32 %v891, 7
    %v893 = vsub.s32 6, %v892
    %v894 = vrot.slane %v865, %v893
    %v895 = vlaneseq
    %v896 = vshrl.u32 %v895, 7
    %v897 = vsub.s32 7, %v896
    %v898 = vrot.slane %v865, %v897
    %v1163 = vunpack.c.l.b16 %v609
    %v1164 = vunpack.c.h.b16 %v609
    %v1165 = vunpack.c.l.b16 %v610
    %v1166 = vunpack.c.h.b16 %v610
    %v1167 = vunpack.c.l.b16 %v611
    %v1168 = vunpack.c.h.b16 %v611
    %v1169 = vunpack.c.l.b16 %v612
    %v1170 = vunpack.c.h.b16 %v612
    %v1171 = vunpack.c.l.b16 %v613
    %v1172 = vunpack.c.h.b16 %v613
    %v1173 = vunpack.c.l.b16 %v614
    %v1174 = vunpack.c.h.b16 %v614
    %v1175 = vunpack.c.l.b16 %v615
    %v1176 = vunpack.c.h.b16 %v615
    %v1177 = vunpack.c.l.b16 %v616
    %v1178 = vunpack.c.h.b16 %v616
    %v1179 = vunpack.c.l.b16 %v617
    %v1180 = vunpack.c.h.b16 %v617
    %v1181 = vunpack.c.l.b16 %v618
    %v1182 = vunpack.c.h.b16 %v618
    %v1183 = vunpack.c.l.b16 %v619
    %v1184 = vunpack.c.h.b16 %v619
    %v1185 = vunpack.c.l.b16 %v620
    %v1186 = vunpack.c.h.b16 %v620
    %v1187 = vunpack.c.l.b16 %v621
    %v1188 = vunpack.c.h.b16 %v621
    %v1189 = vunpack.c.l.b16 %v622
    %v1190 = vunpack.c.h.b16 %v622
    %v1191 = vunpack.c.l.b16 %v623
    %v1192 = vunpack.c.h.b16 %v623
    %v1193 = vunpack.c.l.b16 %v624
    %v1194 = vunpack.c.h.b16 %v624
    %v1195 = vunpack.c.l.b16 %v625
    %v1196 = vunpack.c.h.b16 %v625
    %v1197 = vunpack.c.l.b16 %v626
    %v1198 = vunpack.c.h.b16 %v626
    %v1199 = vunpack.c.l.b16 %v627
    %v1200 = vunpack.c.h.b16 %v627
    %v1201 = vunpack.c.l.b16 %v628
    %v1202 = vunpack.c.h.b16 %v628
    %v1203 = vunpack.c.l.b16 %v629
    %v1204 = vunpack.c.h.b16 %v629
    %v1205 = vunpack.c.l.b16 %v630
    %v1206 = vunpack.c.h.b16 %v630
    %v1207 = vunpack.c.l.b16 %v631
    %v1208 = vunpack.c.h.b16 %v631
    %v1209 = vunpack.c.l.b16 %v632
    %v1210 = vunpack.c.h.b16 %v632
    %v1211 = vunpack.c.l.b16 %v633
    %v1212 = vunpack.c.h.b16 %v633
    %v1213 = vunpack.c.l.b16 %v634
    %v1214 = vunpack.c.h.b16 %v634
    %v1215 = vunpack.c.l.b16 %v635
    %v1216 = vunpack.c.h.b16 %v635
    %v1217 = vunpack.c.l.b16 %v636
    %v1218 = vunpack.c.h.b16 %v636
    %v1219 = vunpack.c.l.b16 %v637
    %v1220 = vunpack.c.h.b16 %v637
    %v1221 = vunpack.c.l.b16 %v638
    %v1222 = vunpack.c.h.b16 %v638
    %v1223 = vunpack.c.l.b16 %v639
    %v1224 = vunpack.c.h.b16 %v639
    %v1225 = vunpack.c.l.b16 %v640
    %v1226 = vunpack.c.h.b16 %v640
    %v1227 = vunpack.c.l.b16 %v641
    %v1228 = vunpack.c.h.b16 %v641
    %v1229 = vunpack.c.l.b16 %v642
    %v1230 = vunpack.c.h.b16 %v642
    %v1231 = vunpack.c.l.b16 %v643
    %v1232 = vunpack.c.h.b16 %v643
    %v1233 = vunpack.c.l.b16 %v644
    %v1234 = vunpack.c.h.b16 %v644
    %v1235 = vunpack.c.l.b16 %v645
    %v1236 = vunpack.c.h.b16 %v645
    %v1237 = vunpack.c.l.b16 %v646
    %v1238 = vunpack.c.h.b16 %v646
    %v1239 = vunpack.c.l.b16 %v647
    %v1240 = vunpack.c.h.b16 %v647
    %v1241 = vunpack.c.l.b16 %v648
    %v1242 = vunpack.c.h.b16 %v648
    %v1243 = vunpack.c.l.b16 %v649
    %v1244 = vunpack.c.h.b16 %v649
    %v1245 = vunpack.c.l.b16 %v650
    %v1246 = vunpack.c.h.b16 %v650
    %v1247 = vunpack.c.l.b16 %v651
    %v1248 = vunpack.c.h.b16 %v651
    %v1249 = vunpack.c.l.b16 %v652
    %v1250 = vunpack.c.h.b16 %v652
    %v1251 = vunpack.c.l.b16 %v653
    %v1252 = vunpack.c.h.b16 %v653
    %v1253 = vunpack.c.l.b16 %v654
    %v1254 = vunpack.c.h.b16 %v654
    %v1255 = vunpack.c.l.b16 %v655
    %v1256 = vunpack.c.h.b16 %v655
    %v1257 = vunpack.c.l.b16 %v656
    %v1258 = vunpack.c.h.b16 %v656
    %v1259 = vunpack.c.l.b16 %v657
    %v1260 = vunpack.c.h.b16 %v657
    %v1261 = vunpack.c.l.b16 %v658
    %v1262 = vunpack.c.h.b16 %v658
    %v1263 = vunpack.c.l.b16 %v659
    %v1264 = vunpack.c.h.b16 %v659
    %v1265 = vunpack.c.l.b16 %v660
    %v1266 = vunpack.c.h.b16 %v660
    %v1267 = vunpack.c.l.b16 %v661
    %v1268 = vunpack.c.h.b16 %v661
    %v1269 = vunpack.c.l.b16 %v662
    %v1270 = vunpack.c.h.b16 %v662
    %v1271 = vunpack.c.l.b16 %v663
    %v1272 = vunpack.c.h.b16 %v663
    %v1273 = vunpack.c.l.b16 %v664
    %v1274 = vunpack.c.h.b16 %v664
    %v1275 = vunpack.c.l.b16 %v665
    %v1276 = vunpack.c.h.b16 %v665
    %v1277 = vunpack.c.l.b16 %v666
    %v1278 = vunpack.c.h.b16 %v666
    %v1279 = vunpack.c.l.b16 %v667
    %v1280 = vunpack.c.h.b16 %v667
    %v1281 = vunpack.c.l.b16 %v668
    %v1282 = vunpack.c.h.b16 %v668
    %v1283 = vunpack.c.l.b16 %v669
    %v1284 = vunpack.c.h.b16 %v669
    %v1285 = vunpack.c.l.b16 %v670
    %v1286 = vunpack.c.h.b16 %v670
    %v1287 = vunpack.c.l.b16 %v671
    %v1288 = vunpack.c.h.b16 %v671
    %v1289 = vunpack.c.l.b16 %v672
    %v1290 = vunpack.c.h.b16 %v672
    %v1291 = vunpack.c.l.b16 %v673
    %v1292 = vunpack.c.h.b16 %v673
    %v1293 = vunpack.c.l.b16 %v674
    %v1294 = vunpack.c.h.b16 %v674
    %v1295 = vunpack.c.l.b16 %v675
    %v1296 = vunpack.c.h.b16 %v675
    %v1297 = vunpack.c.l.b16 %v676
    %v1298 = vunpack.c.h.b16 %v676
    %v1299 = vunpack.c.l.b16 %v677
    %v1300 = vunpack.c.h.b16 %v677
    %v1301 = vunpack.c.l.b16 %v678
    %v1302 = vunpack.c.h.b16 %v678
    %v1303 = vunpack.c.l.b16 %v679
    %v1304 = vunpack.c.h.b16 %v679
    %v1305 = vunpack.c.l.b16 %v680
    %v1306 = vunpack.c.h.b16 %v680
    %v1307 = vunpack.c.l.b16 %v681
    %v1308 = vunpack.c.h.b16 %v681
    %v1309 = vunpack.c.l.b16 %v682
    %v1310 = vunpack.c.h.b16 %v682
    %v1311 = vunpack.c.l.b16 %v683
    %v1312 = vunpack.c.h.b16 %v683
    %v1313 = vunpack.c.l.b16 %v684
    %v1314 = vunpack.c.h.b16 %v684
    %v1315 = vunpack.c.l.b16 %v685
    %v1316 = vunpack.c.h.b16 %v685
    %v1317 = vunpack.c.l.b16 %v686
    %v1318 = vunpack.c.h.b16 %v686
    %v1319 = vunpack.c.l.b16 %v687
    %v1320 = vunpack.c.h.b16 %v687
    %v1321 = vunpack.c.l.b16 %v688
    %v1322 = vunpack.c.h.b16 %v688
    %v1323 = vunpack.c.l.b16 %v689
    %v1324 = vunpack.c.h.b16 %v689
    %v1325 = vunpack.c.l.b16 %v690
    %v1326 = vunpack.c.h.b16 %v690
    %v1327 = vunpack.c.l.b16 %v691
    %v1328 = vunpack.c.h.b16 %v691
    %v1329 = vunpack.c.l.b16 %v692
    %v1330 = vunpack.c.h.b16 %v692
    %v1331 = vunpack.c.l.b16 %v693
    %v1332 = vunpack.c.h.b16 %v693
    %v1333 = vunpack.c.l.b16 %v694
    %v1334 = vunpack.c.h.b16 %v694
    %v1335 = vunpack.c.l.b16 %v695
    %v1336 = vunpack.c.h.b16 %v695
    %v1337 = vunpack.c.l.b16 %v696
    %v1338 = vunpack.c.h.b16 %v696
    %v1339 = vunpack.c.l.b16 %v697
    %v1340 = vunpack.c.h.b16 %v697
    %v1341 = vunpack.c.l.b16 %v698
    %v1342 = vunpack.c.h.b16 %v698
    %v1343 = vunpack.c.l.b16 %v699
    %v1344 = vunpack.c.h.b16 %v699
    %v1345 = vunpack.c.l.b16 %v700
    %v1346 = vunpack.c.h.b16 %v700
    %v1347 = vunpack.c.l.b16 %v701
    %v1348 = vunpack.c.h.b16 %v701
    %v1349 = vunpack.c.l.b16 %v702
    %v1350 = vunpack.c.h.b16 %v702
    %v1351 = vunpack.c.l.b16 %v703
    %v1352 = vunpack.c.h.b16 %v703
    %v1353 = vunpack.c.l.b16 %v704
    %v1354 = vunpack.c.h.b16 %v704
    %v1355 = vunpack.c.l.b16 %v705
    %v1356 = vunpack.c.h.b16 %v705
    %v1357 = vunpack.c.l.b16 %v706
    %v1358 = vunpack.c.h.b16 %v706
    %v1359 = vunpack.c.l.b16 %v707
    %v1360 = vunpack.c.h.b16 %v707
    %v1361 = vunpack.c.l.b16 %v708
    %v1362 = vunpack.c.h.b16 %v708
    %v1363 = vunpack.c.l.b16 %v709
    %v1364 = vunpack.c.h.b16 %v709
    %v1365 = vunpack.c.l.b16 %v710
    %v1366 = vunpack.c.h.b16 %v710
    %v1367 = vunpack.c.l.b16 %v711
    %v1368 = vunpack.c.h.b16 %v711
    %v1369 = vunpack.c.l.b16 %v712
    %v1370 = vunpack.c.h.b16 %v712
    %v1371 = vunpack.c.l.b16 %v713
    %v1372 = vunpack.c.h.b16 %v713
    %v1373 = vunpack.c.l.b16 %v714
    %v1374 = vunpack.c.h.b16 %v714
    %v1375 = vunpack.c.l.b16 %v715
    %v1376 = vunpack.c.h.b16 %v715
    %v1377 = vunpack.c.l.b16 %v716
    %v1378 = vunpack.c.h.b16 %v716
    %v1379 = vunpack.c.l.b16 %v717
    %v1380 = vunpack.c.h.b16 %v717
    %v1381 = vunpack.c.l.b16 %v718
    %v1382 = vunpack.c.h.b16 %v718
    %v1383 = vunpack.c.l.b16 %v719
    %v1384 = vunpack.c.h.b16 %v719
    %v1385 = vunpack.c.l.b16 %v720
    %v1386 = vunpack.c.h.b16 %v720
    %v1387 = vunpack.c.l.b16 %v721
    %v1388 = vunpack.c.h.b16 %v721
    %v1389 = vunpack.c.l.b16 %v722
    %v1390 = vunpack.c.h.b16 %v722
    %v1391 = vunpack.c.l.b16 %v723
    %v1392 = vunpack.c.h.b16 %v723
    %v1393 = vunpack.c.l.b16 %v724
    %v1394 = vunpack.c.h.b16 %v724
    %v1395 = vunpack.c.l.b16 %v725
    %v1396 = vunpack.c.h.b16 %v725
    %v1397 = vunpack.c.l.b16 %v726
    %v1398 = vunpack.c.h.b16 %v726
    %v1399 = vunpack.c.l.b16 %v727
    %v1400 = vunpack.c.h.b16 %v727
    %v1401 = vunpack.c.l.b16 %v728
    %v1402 = vunpack.c.h.b16 %v728
    %v1403 = vunpack.c.l.b16 %v729
    %v1404 = vunpack.c.h.b16 %v729
    %v1405 = vunpack.c.l.b16 %v730
    %v1406 = vunpack.c.h.b16 %v730
    %v1407 = vunpack.c.l.b16 %v731
    %v1408 = vunpack.c.h.b16 %v731
    %v1409 = vunpack.c.l.b16 %v732
    %v1410 = vunpack.c.h.b16 %v732
    %v1411 = vunpack.c.l.b16 %v733
    %v1412 = vunpack.c.h.b16 %v733
    %v1413 = vunpack.c.l.b16 %v734
    %v1414 = vunpack.c.h.b16 %v734
    %v1415 = vunpack.c.l.b16 %v735
    %v1416 = vunpack.c.h.b16 %v735
    %v1417 = vunpack.c.l.b16 %v736
    %v1418 = vunpack.c.h.b16 %v736
    %v1419 = vunpack.c.l.b16 %v737
    %v1420 = vunpack.c.h.b16 %v737
    %v1421 = vunpack.c.l.b16 %v738
    %v1422 = vunpack.c.h.b16 %v738
    %v1423 = vunpack.c.l.b16 %v739
    %v1424 = vunpack.c.h.b16 %v739
    %v1425 = vunpack.c.l.b16 %v740
    %v1426 = vunpack.c.h.b16 %v740
    %v1427 = vunpack.c.l.b16 %v741
    %v1428 = vunpack.c.h.b16 %v741
    %v1429 = vunpack.c.l.b16 %v742
    %v1430 = vunpack.c.h.b16 %v742
    %v1431 = vunpack.c.l.b16 %v743
    %v1432 = vunpack.c.h.b16 %v743
    %v1433 = vunpack.c.l.b16 %v744
    %v1434 = vunpack.c.h.b16 %v744
    %v1435 = vunpack.c.l.b16 %v745
    %v1436 = vunpack.c.h.b16 %v745
    %v1437 = vunpack.c.l.b16 %v746
    %v1438 = vunpack.c.h.b16 %v746
    %v1439 = vunpack.c.l.b16 %v747
    %v1440 = vunpack.c.h.b16 %v747
    %v1441 = vunpack.c.l.b16 %v748
    %v1442 = vunpack.c.h.b16 %v748
    %v1443 = vunpack.c.l.b16 %v749
    %v1444 = vunpack.c.h.b16 %v749
    %v1445 = vunpack.c.l.b16 %v750
    %v1446 = vunpack.c.h.b16 %v750
    %v1447 = vunpack.c.l.b16 %v751
    %v1448 = vunpack.c.h.b16 %v751
    %v1449 = vunpack.c.l.b16 %v752
    %v1450 = vunpack.c.h.b16 %v752
    %v1451 = vunpack.c.l.b16 %v753
    %v1452 = vunpack.c.h.b16 %v753
    %v1453 = vunpack.c.l.b16 %v754
    %v1454 = vunpack.c.h.b16 %v754
    %v1455 = vunpack.c.l.b16 %v755
    %v1456 = vunpack.c.h.b16 %v755
    %v1457 = vunpack.c.l.b16 %v756
    %v1458 = vunpack.c.h.b16 %v756
    %v1459 = vunpack.c.l.b16 %v757
    %v1460 = vunpack.c.h.b16 %v757
    %v1461 = vunpack.c.l.b16 %v758
    %v1462 = vunpack.c.h.b16 %v758
    %v1463 = vunpack.c.l.b16 %v759
    %v1464 = vunpack.c.h.b16 %v759
    %v1465 = vunpack.c.l.b16 %v760
    %v1466 = vunpack.c.h.b16 %v760
    %v1467 = vunpack.c.l.b16 %v761
    %v1468 = vunpack.c.h.b16 %v761
    %v1469 = vunpack.c.l.b16 %v762
    %v1470 = vunpack.c.h.b16 %v762
    %v1471 = vunpack.c.l.b16 %v763
    %v1472 = vunpack.c.h.b16 %v763
    %v1473 = vunpack.c.l.b16 %v764
    %v1474 = vunpack.c.h.b16 %v764
    %v1475 = vunpack.c.l.b16 %v765
    %v1476 = vunpack.c.h.b16 %v765
    %v1477 = vunpack.c.l.b16 %v766
    %v1478 = vunpack.c.h.b16 %v766
    %v1479 = vunpack.c.l.b16 %v767
    %v1480 = vunpack.c.h.b16 %v767
    %v1481 = vunpack.c.l.b16 %v768
    %v1482 = vunpack.c.h.b16 %v768
    %v1483 = vunpack.c.l.b16 %v769
    %v1484 = vunpack.c.h.b16 %v769
    %v1485 = vunpack.c.l.b16 %v770
    %v1486 = vunpack.c.h.b16 %v770
    %v1487 = vunpack.c.l.b16 %v771
    %v1488 = vunpack.c.h.b16 %v771
    %v1489 = vunpack.c.l.b16 %v772
    %v1490 = vunpack.c.h.b16 %v772
    %v1491 = vunpack.c.l.b16 %v773
    %v1492 = vunpack.c.h.b16 %v773
    %v1493 = vunpack.c.l.b16 %v774
    %v1494 = vunpack.c.h.b16 %v774
    %v1495 = vunpack.c.l.b16 %v775
    %v1496 = vunpack.c.h.b16 %v775
    %v1497 = vunpack.c.l.b16 %v776
    %v1498 = vunpack.c.h.b16 %v776
    %v1499 = vunpack.c.l.b16 %v777
    %v1500 = vunpack.c.h.b16 %v777
    %v1501 = vunpack.c.l.b16 %v778
    %v1502 = vunpack.c.h.b16 %v778
    %v1503 = vunpack.c.l.b16 %v779
    %v1504 = vunpack.c.h.b16 %v779
    %v1505 = vunpack.c.l.b16 %v780
    %v1506 = vunpack.c.h.b16 %v780
    %v1507 = vunpack.c.l.b16 %v781
    %v1508 = vunpack.c.h.b16 %v781
    %v1509 = vunpack.c.l.b16 %v782
    %v1510 = vunpack.c.h.b16 %v782
    %v1511 = vunpack.c.l.b16 %v783
    %v1512 = vunpack.c.h.b16 %v783
    %v1513 = vunpack.c.l.b16 %v784
    %v1514 = vunpack.c.h.b16 %v784
    %v1515 = vunpack.c.l.b16 %v785
    %v1516 = vunpack.c.h.b16 %v785
    %v1517 = vunpack.c.l.b16 %v786
    %v1518 = vunpack.c.h.b16 %v786
    %v1519 = vunpack.c.l.b16 %v787
    %v1520 = vunpack.c.h.b16 %v787
    %v1521 = vunpack.c.l.b16 %v788
    %v1522 = vunpack.c.h.b16 %v788
    %v1523 = vunpack.c.l.b16 %v789
    %v1524 = vunpack.c.h.b16 %v789
    %v1525 = vunpack.c.l.b16 %v790
    %v1526 = vunpack.c.h.b16 %v790
    %v1527 = vunpack.c.l.b16 %v791
    %v1528 = vunpack.c.h.b16 %v791
    %v1529 = vunpack.c.l.b16 %v792
    %v1530 = vunpack.c.h.b16 %v792
    %v1531 = vunpack.c.l.b16 %v793
    %v1532 = vunpack.c.h.b16 %v793
    %v1533 = vunpack.c.l.b16 %v794
    %v1534 = vunpack.c.h.b16 %v794
    %v1535 = vunpack.c.l.b16 %v795
    %v1536 = vunpack.c.h.b16 %v795
    %v1537 = vunpack.c.l.b16 %v796
    %v1538 = vunpack.c.h.b16 %v796
    %v1539 = vunpack.c.l.b16 %v797
    %v1540 = vunpack.c.h.b16 %v797
    %v1541 = vunpack.c.l.b16 %v798
    %v1542 = vunpack.c.h.b16 %v798
    %v1543 = vunpack.c.l.b16 %v799
    %v1544 = vunpack.c.h.b16 %v799
    %v1545 = vunpack.c.l.b16 %v800
    %v1546 = vunpack.c.h.b16 %v800
    %v1547 = vunpack.c.l.b16 %v801
    %v1548 = vunpack.c.h.b16 %v801
    %v1549 = vunpack.c.l.b16 %v802
    %v1550 = vunpack.c.h.b16 %v802
    %v1551 = vunpack.c.l.b16 %v803
    %v1552 = vunpack.c.h.b16 %v803
    %v1553 = vunpack.c.l.b16 %v804
    %v1554 = vunpack.c.h.b16 %v804
    %v1555 = vunpack.c.l.b16 %v805
    %v1556 = vunpack.c.h.b16 %v805
    %v1557 = vunpack.c.l.b16 %v806
    %v1558 = vunpack.c.h.b16 %v806
    %v1559 = vunpack.c.l.b16 %v807
    %v1560 = vunpack.c.h.b16 %v807
    %v1561 = vunpack.c.l.b16 %v808
    %v1562 = vunpack.c.h.b16 %v808
    %v1563 = vunpack.c.l.b16 %v809
    %v1564 = vunpack.c.h.b16 %v809
    %v1565 = vunpack.c.l.b16 %v810
    %v1566 = vunpack.c.h.b16 %v810
    %v1567 = vunpack.c.l.b16 %v811
    %v1568 = vunpack.c.h.b16 %v811
    %v1569 = vunpack.c.l.b16 %v812
    %v1570 = vunpack.c.h.b16 %v812
    %v1571 = vunpack.c.l.b16 %v813
    %v1572 = vunpack.c.h.b16 %v813
    %v1573 = vunpack.c.l.b16 %v814
    %v1574 = vunpack.c.h.b16 %v814
    %v1575 = vunpack.c.l.b16 %v815
    %v1576 = vunpack.c.h.b16 %v815
    %v1577 = vunpack.c.l.b16 %v816
    %v1578 = vunpack.c.h.b16 %v816
    %v1579 = vunpack.c.l.b16 %v817
    %v1580 = vunpack.c.h.b16 %v817
    %v1581 = vunpack.c.l.b16 %v818
    %v1582 = vunpack.c.h.b16 %v818
    %v1583 = vunpack.c.l.b16 %v819
    %v1584 = vunpack.c.h.b16 %v819
    %v1585 = vunpack.c.l.b16 %v820
    %v1586 = vunpack.c.h.b16 %v820
    %v1587 = vunpack.c.l.b16 %v821
    %v1588 = vunpack.c.h.b16 %v821
    %v1589 = vunpack.c.l.b16 %v822
    %v1590 = vunpack.c.h.b16 %v822
    %v1591 = vunpack.c.l.b16 %v823
    %v1592 = vunpack.c.h.b16 %v823
    %v1593 = vunpack.c.l.b16 %v824
    %v1594 = vunpack.c.h.b16 %v824
    %v1595 = vunpack.c.l.b16 %v825
    %v1596 = vunpack.c.h.b16 %v825
    %v1597 = vunpack.c.l.b16 %v826
    %v1598 = vunpack.c.h.b16 %v826
    %v1599 = vunpack.c.l.b16 %v827
    %v1600 = vunpack.c.h.b16 %v827
    %v1601 = vunpack.c.l.b16 %v828
    %v1602 = vunpack.c.h.b16 %v828
    %v1603 = vunpack.c.l.b16 %v829
    %v1604 = vunpack.c.h.b16 %v829
    %v1605 = vunpack.c.l.b16 %v830
    %v1606 = vunpack.c.h.b16 %v830
    %v1607 = vunpack.c.l.b16 %v831
    %v1608 = vunpack.c.h.b16 %v831
    %v1609 = vunpack.c.l.b16 %v832
    %v1610 = vunpack.c.h.b16 %v832
    %v1611 = vunpack.c.l.b16 %v833
    %v1612 = vunpack.c.h.b16 %v833
    %v1613 = vunpack.c.l.b16 %v834
    %v1614 = vunpack.c.h.b16 %v834
    %v1615 = vunpack.c.l.b16 %v835
    %v1616 = vunpack.c.h.b16 %v835
    %v1617 = vunpack.c.l.b16 %v836
    %v1618 = vunpack.c.h.b16 %v836
    %v1619 = vunpack.c.l.b16 %v837
    %v1620 = vunpack.c.h.b16 %v837
    %v1621 = vunpack.c.l.b16 %v838
    %v1622 = vunpack.c.h.b16 %v838
    %v1623 = vunpack.c.l.b16 %v839
    %v1624 = vunpack.c.h.b16 %v839
    %v1625 = vunpack.c.l.b16 %v840
    %v1626 = vunpack.c.h.b16 %v840
    %v1627 = vunpack.c.l.b16 %v841
    %v1628 = vunpack.c.h.b16 %v841
    %v1629 = vunpack.c.l.b16 %v842
    %v1630 = vunpack.c.h.b16 %v842
    %v1631 = vunpack.c.l.b16 %v843
    %v1632 = vunpack.c.h.b16 %v843
    %v1633 = vunpack.c.l.b16 %v844
    %v1634 = vunpack.c.h.b16 %v844
    %v1635 = vunpack.c.l.b16 %v845
    %v1636 = vunpack.c.h.b16 %v845
    %v1637 = vunpack.c.l.b16 %v846
    %v1638 = vunpack.c.h.b16 %v846
    %v1639 = vunpack.c.l.b16 %v847
    %v1640 = vunpack.c.h.b16 %v847
    %v1641 = vunpack.c.l.b16 %v848
    %v1642 = vunpack.c.h.b16 %v848
    %v1643 = vunpack.c.l.b16 %v849
    %v1644 = vunpack.c.h.b16 %v849
    %v1645 = vunpack.c.l.b16 %v850
    %v1646 = vunpack.c.h.b16 %v850
    %v1647 = vunpack.c.l.b16 %v851
    %v1648 = vunpack.c.h.b16 %v851
    %v1649 = vunpack.c.l.b16 %v852
    %v1650 = vunpack.c.h.b16 %v852
    %v1651 = vunpack.c.l.b16 %v853
    %v1652 = vunpack.c.h.b16 %v853
    %v1653 = vunpack.c.l.b16 %v854
    %v1654 = vunpack.c.h.b16 %v854
    %v1655 = vunpack.c.l.b16 %v855
    %v1656 = vunpack.c.h.b16 %v855
    %v1657 = vunpack.c.l.b16 %v856
    %v1658 = vunpack.c.h.b16 %v856
    %v1659 = vunpack.c.l.b16 %v857
    %v1660 = vunpack.c.h.b16 %v857
    %v1661 = vunpack.c.l.b16 %v858
    %v1662 = vunpack.c.h.b16 %v858
    %v1663 = vunpack.c.l.b16 %v859
    %v1664 = vunpack.c.h.b16 %v859
    %v1665 = vunpack.c.l.b16 %v860
    %v1666 = vunpack.c.h.b16 %v860
    %v1667 = vunpack.c.l.b16 %v861
    %v1668 = vunpack.c.h.b16 %v861
    %v1669 = vunpack.c.l.b16 %v862
    %v1670 = vunpack.c.h.b16 %v862
    %v1671 = vunpack.c.l.b16 %v863
    %v1672 = vunpack.c.h.b16 %v863
    %v1673 = vunpack.c.l.b16 %v864
    %v1674 = vunpack.c.h.b16 %v864
    %v1675 = vpack.c.b16 %v1171, %v1163
    %v1676 = vpack.c.b16 %v1172, %v1164
    %v1677 = vpack.c.b16 %v1173, %v1165
    %v1678 = vpack.c.b16 %v1174, %v1166
    %v1679 = vpack.c.b16 %v1175, %v1167
    %v1680 = vpack.c.b16 %v1176, %v1168
    %v1681 = vpack.c.b16 %v1177, %v1169
    %v1682 = vpack.c.b16 %v1178, %v1170
    %v1683 = vpack.c.b16 %v1187, %v1179
    %v1684 = vpack.c.b16 %v1188, %v1180
    %v1685 = vpack.c.b16 %v1189, %v1181
    %v1686 = vpack.c.b16 %v1190, %v1182
    %v1687 = vpack.c.b16 %v1191, %v1183
    %v1688 = vpack.c.b16 %v1192, %v1184
    %v1689 = vpack.c.b16 %v1193, %v1185
    %v1690 = vpack.c.b16 %v1194, %v1186
    %v1691 = vpack.c.b16 %v1203, %v1195
    %v1692 = vpack.c.b16 %v1204, %v1196
    %v1693 = vpack.c.b16 %v1205, %v1197
    %v1694 = vpack.c.b16 %v1206, %v1198
    %v1695 = vpack.c.b16 %v1207, %v1199
    %v1696 = vpack.c.b16 %v1208, %v1200
    %v1697 = vpack.c.b16 %v1209, %v1201
    %v1698 = vpack.c.b16 %v1210, %v1202
    %v1699 = vpack.c.b16 %v1219, %v1211
    %v1700 = vpack.c.b16 %v1220, %v1212
    %v1701 = vpack.c.b16 %v1221, %v1213
    %v1702 = vpack.c.b16 %v1222, %v1214
    %v1703 = vpack.c.b16 %v1223, %v1215
    %v1704 = vpack.c.b16 %v1224, %v1216
    %v1705 = vpack.c.b16 %v1225, %v1217
    %v1706 = vpack.c.b16 %v1226, %v1218
    %v1707 = vpack.c.b16 %v1235, %v1227
    %v1708 = vpack.c.b16 %v1236, %v1228
    %v1709 = vpack.c.b16 %v1237, %v1229
    %v1710 = vpack.c.b16 %v1238, %v1230
    %v1711 = vpack.c.b16 %v1239, %v1231
    %v1712 = vpack.c.b16 %v1240, %v1232
    %v1713 = vpack.c.b16 %v1241, %v1233
    %v1714 = vpack.c.b16 %v1242, %v1234
    %v1715 = vpack.c.b16 %v1251, %v1243
    %v1716 = vpack.c.b16 %v1252, %v1244
    %v1717 = vpack.c.b16 %v1253, %v1245
    %v1718 = vpack.c.b16 %v1254, %v1246
    %v1719 = vpack.c.b16 %v1255, %v1247
    %v1720 = vpack.c.b16 %v1256, %v1248
    %v1721 = vpack.c.b16 %v1257, %v1249
    %v1722 = vpack.c.b16 %v1258, %v1250
    %v1723 = vpack.c.b16 %v1267, %v1259
    %v1724 = vpack.c.b16 %v1268, %v1260
    %v1725 = vpack.c.b16 %v1269, %v1261
    %v1726 = vpack.c.b16 %v1270, %v1262
    %v1727 = vpack.c.b16 %v1271, %v1263
    %v1728 = vpack.c.b16 %v1272, %v1264
    %v1729 = vpack.c.b16 %v1273, %v1265
    %v1730 = vpack.c.b16 %v1274, %v1266
    %v1731 = vpack.c.b16 %v1283, %v1275
    %v1732 = vpack.c.b16 %v1284, %v1276
    %v1733 = vpack.c.b16 %v1285, %v1277
    %v1734 = vpack.c.b16 %v1286, %v1278
    %v1735 = vpack.c.b16 %v1287, %v1279
    %v1736 = vpack.c.b16 %v1288, %v1280
    %v1737 = vpack.c.b16 %v1289, %v1281
    %v1738 = vpack.c.b16 %v1290, %v1282
    %v1739 = vpack.c.b16 %v1299, %v1291
    %v1740 = vpack.c.b16 %v1300, %v1292
    %v1741 = vpack.c.b16 %v1301, %v1293
    %v1742 = vpack.c.b16 %v1302, %v1294
    %v1743 = vpack.c.b16 %v1303, %v1295
    %v1744 = vpack.c.b16 %v1304, %v1296
    %v1745 = vpack.c.b16 %v1305, %v1297
    %v1746 = vpack.c.b16 %v1306, %v1298
    %v1747 = vpack.c.b16 %v1315, %v1307
    %v1748 = vpack.c.b16 %v1316, %v1308
    %v1749 = vpack.c.b16 %v1317, %v1309
    %v1750 = vpack.c.b16 %v1318, %v1310
    %v1751 = vpack.c.b16 %v1319, %v1311
    %v1752 = vpack.c.b16 %v1320, %v1312
    %v1753 = vpack.c.b16 %v1321, %v1313
    %v1754 = vpack.c.b16 %v1322, %v1314
    %v1755 = vpack.c.b16 %v1331, %v1323
    %v1756 = vpack.c.b16 %v1332, %v1324
    %v1757 = vpack.c.b16 %v1333, %v1325
    %v1758 = vpack.c.b16 %v1334, %v1326
    %v1759 = vpack.c.b16 %v1335, %v1327
    %v1760 = vpack.c.b16 %v1336, %v1328
    %v1761 = vpack.c.b16 %v1337, %v1329
    %v1762 = vpack.c.b16 %v1338, %v1330
    %v1763 = vpack.c.b16 %v1347, %v1339
    %v1764 = vpack.c.b16 %v1348, %v1340
    %v1765 = vpack.c.b16 %v1349, %v1341
    %v1766 = vpack.c.b16 %v1350, %v1342
    %v1767 = vpack.c.b16 %v1351, %v1343
    %v1768 = vpack.c.b16 %v1352, %v1344
    %v1769 = vpack.c.b16 %v1353, %v1345
    %v1770 = vpack.c.b16 %v1354, %v1346
    %v1771 = vpack.c.b16 %v1363, %v1355
    %v1772 = vpack.c.b16 %v1364, %v1356
    %v1773 = vpack.c.b16 %v1365, %v1357
    %v1774 = vpack.c.b16 %v1366, %v1358
    %v1775 = vpack.c.b16 %v1367, %v1359
    %v1776 = vpack.c.b16 %v1368, %v1360
    %v1777 = vpack.c.b16 %v1369, %v1361
    %v1778 = vpack.c.b16 %v1370, %v1362
    %v1779 = vpack.c.b16 %v1379, %v1371
    %v1780 = vpack.c.b16 %v1380, %v1372
    %v1781 = vpack.c.b16 %v1381, %v1373
    %v1782 = vpack.c.b16 %v1382, %v1374
    %v1783 = vpack.c.b16 %v1383, %v1375
    %v1784 = vpack.c.b16 %v1384, %v1376
    %v1785 = vpack.c.b16 %v1385, %v1377
    %v1786 = vpack.c.b16 %v1386, %v1378
    %v1787 = vpack.c.b16 %v1395, %v1387
    %v1788 = vpack.c.b16 %v1396, %v1388
    %v1789 = vpack.c.b16 %v1397, %v1389
    %v1790 = vpack.c.b16 %v1398, %v1390
    %v1791 = vpack.c.b16 %v1399, %v1391
    %v1792 = vpack.c.b16 %v1400, %v1392
    %v1793 = vpack.c.b16 %v1401, %v1393
    %v1794 = vpack.c.b16 %v1402, %v1394
    %v1795 = vpack.c.b16 %v1411, %v1403
    %v1796 = vpack.c.b16 %v1412, %v1404
    %v1797 = vpack.c.b16 %v1413, %v1405
    %v1798 = vpack.c.b16 %v1414, %v1406
    %v1799 = vpack.c.b16 %v1415, %v1407
    %v1800 = vpack.c.b16 %v1416, %v1408
    %v1801 = vpack.c.b16 %v1417, %v1409
    %v1802 = vpack.c.b16 %v1418, %v1410
    %v1803 = vpack.c.b16 %v1427, %v1419
    %v1804 = vpack.c.b16 %v1428, %v1420
    %v1805 = vpack.c.b16 %v1429, %v1421
    %v1806 = vpack.c.b16 %v1430, %v1422
    %v1807 = vpack.c.b16 %v1431, %v1423
    %v1808 = vpack.c.b16 %v1432, %v1424
    %v1809 = vpack.c.b16 %v1433, %v1425
    %v1810 = vpack.c.b16 %v1434, %v1426
    %v1811 = vpack.c.b16 %v1443, %v1435
    %v1812 = vpack.c.b16 %v1444, %v1436
    %v1813 = vpack.c.b16 %v1445, %v1437
    %v1814 = vpack.c.b16 %v1446, %v1438
    %v1815 = vpack.c.b16 %v1447, %v1439
    %v1816 = vpack.c.b16 %v1448, %v1440
    %v1817 = vpack.c.b16 %v1449, %v1441
    %v1818 = vpack.c.b16 %v1450, %v1442
    %v1819 = vpack.c.b16 %v1459, %v1451
    %v1820 = vpack.c.b16 %v1460, %v1452
    %v1821 = vpack.c.b16 %v1461, %v1453
    %v1822 = vpack.c.b16 %v1462, %v1454
    %v1823 = vpack.c.b16 %v1463, %v1455
    %v1824 = vpack.c.b16 %v1464, %v1456
    %v1825 = vpack.c.b16 %v1465, %v1457
    %v1826 = vpack.c.b16 %v1466, %v1458
    %v1827 = vpack.c.b16 %v1475, %v1467
    %v1828 = vpack.c.b16 %v1476, %v1468
    %v1829 = vpack.c.b16 %v1477, %v1469
    %v1830 = vpack.c.b16 %v1478, %v1470
    %v1831 = vpack.c.b16 %v1479, %v1471
    %v1832 = vpack.c.b16 %v1480, %v1472
    %v1833 = vpack.c.b16 %v1481, %v1473
    %v1834 = vpack.c.b16 %v1482, %v1474
    %v1835 = vpack.c.b16 %v1491, %v1483
    %v1836 = vpack.c.b16 %v1492, %v1484
    %v1837 = vpack.c.b16 %v1493, %v1485
    %v1838 = vpack.c.b16 %v1494, %v1486
    %v1839 = vpack.c.b16 %v1495, %v1487
    %v1840 = vpack.c.b16 %v1496, %v1488
    %v1841 = vpack.c.b16 %v1497, %v1489
    %v1842 = vpack.c.b16 %v1498, %v1490
    %v1843 = vpack.c.b16 %v1507, %v1499
    %v1844 = vpack.c.b16 %v1508, %v1500
    %v1845 = vpack.c.b16 %v1509, %v1501
    %v1846 = vpack.c.b16 %v1510, %v1502
    %v1847 = vpack.c.b16 %v1511, %v1503
    %v1848 = vpack.c.b16 %v1512, %v1504
    %v1849 = vpack.c.b16 %v1513, %v1505
    %v1850 = vpack.c.b16 %v1514, %v1506
    %v1851 = vpack.c.b16 %v1523, %v1515
    %v1852 = vpack.c.b16 %v1524, %v1516
    %v1853 = vpack.c.b16 %v1525, %v1517
    %v1854 = vpack.c.b16 %v1526, %v1518
    %v1855 = vpack.c.b16 %v1527, %v1519
    %v1856 = vpack.c.b16 %v1528, %v1520
    %v1857 = vpack.c.b16 %v1529, %v1521
    %v1858 = vpack.c.b16 %v1530, %v1522
    %v1859 = vpack.c.b16 %v1539, %v1531
    %v1860 = vpack.c.b16 %v1540, %v1532
    %v1861 = vpack.c.b16 %v1541, %v1533
    %v1862 = vpack.c.b16 %v1542, %v1534
    %v1863 = vpack.c.b16 %v1543, %v1535
    %v1864 = vpack.c.b16 %v1544, %v1536
    %v1865 = vpack.c.b16 %v1545, %v1537
    %v1866 = vpack.c.b16 %v1546, %v1538
    %v1867 = vpack.c.b16 %v1555, %v1547
    %v1868 = vpack.c.b16 %v1556, %v1548
    %v1869 = vpack.c.b16 %v1557, %v1549
    %v1870 = vpack.c.b16 %v1558, %v1550
    %v1871 = vpack.c.b16 %v1559, %v1551
    %v1872 = vpack.c.b16 %v1560, %v1552
    %v1873 = vpack.c.b16 %v1561, %v1553
    %v1874 = vpack.c.b16 %v1562, %v1554
    %v1875 = vpack.c.b16 %v1571, %v1563
    %v1876 = vpack.c.b16 %v1572, %v1564
    %v1877 = vpack.c.b16 %v1573, %v1565
    %v1878 = vpack.c.b16 %v1574, %v1566
    %v1879 = vpack.c.b16 %v1575, %v1567
    %v1880 = vpack.c.b16 %v1576, %v1568
    %v1881 = vpack.c.b16 %v1577, %v1569
    %v1882 = vpack.c.b16 %v1578, %v1570
    %v1883 = vpack.c.b16 %v1587, %v1579
    %v1884 = vpack.c.b16 %v1588, %v1580
    %v1885 = vpack.c.b16 %v1589, %v1581
    %v1886 = vpack.c.b16 %v1590, %v1582
    %v1887 = vpack.c.b16 %v1591, %v1583
    %v1888 = vpack.c.b16 %v1592, %v1584
    %v1889 = vpack.c.b16 %v1593, %v1585
    %v1890 = vpack.c.b16 %v1594, %v1586
    %v1891 = vpack.c.b16 %v1603, %v1595
    %v1892 = vpack.c.b16 %v1604, %v1596
    %v1893 = vpack.c.b16 %v1605, %v1597
    %v1894 = vpack.c.b16 %v1606, %v1598
    %v1895 = vpack.c.b16 %v1607, %v1599
    %v1896 = vpack.c.b16 %v1608, %v1600
    %v1897 = vpack.c.b16 %v1609, %v1601
    %v1898 = vpack.c.b16 %v1610, %v1602
    %v1899 = vpack.c.b16 %v1619, %v1611
    %v1900 = vpack.c.b16 %v1620, %v1612
    %v1901 = vpack.c.b16 %v1621, %v1613
    %v1902 = vpack.c.b16 %v1622, %v1614
    %v1903 = vpack.c.b16 %v1623, %v1615
    %v1904 = vpack.c.b16 %v1624, %v1616
    %v1905 = vpack.c.b16 %v1625, %v1617
    %v1906 = vpack.c.b16 %v1626, %v1618
    %v1907 = vpack.c.b16 %v1635, %v1627
    %v1908 = vpack.c.b16 %v1636, %v1628
    %v1909 = vpack.c.b16 %v1637, %v1629
    %v1910 = vpack.c.b16 %v1638, %v1630
    %v1911 = vpack.c.b16 %v1639, %v1631
    %v1912 = vpack.c.b16 %v1640, %v1632
    %v1913 = vpack.c.b16 %v1641, %v1633
    %v1914 = vpack.c.b16 %v1642, %v1634
    %v1915 = vpack.c.b16 %v1651, %v1643
    %v1916 = vpack.c.b16 %v1652, %v1644
    %v1917 = vpack.c.b16 %v1653, %v1645
    %v1918 = vpack.c.b16 %v1654, %v1646
    %v1919 = vpack.c.b16 %v1655, %v1647
    %v1920 = vpack.c.b16 %v1656, %v1648
    %v1921 = vpack.c.b16 %v1657, %v1649
    %v1922 = vpack.c.b16 %v1658, %v1650
    %v1923 = vpack.c.b16 %v1667, %v1659
    %v1924 = vpack.c.b16 %v1668, %v1660
    %v1925 = vpack.c.b16 %v1669, %v1661
    %v1926 = vpack.c.b16 %v1670, %v1662
    %v1927 = vpack.c.b16 %v1671, %v1663
    %v1928 = vpack.c.b16 %v1672, %v1664
    %v1929 = vpack.c.b16 %v1673, %v1665
    %v1930 = vpack.c.b16 %v1674, %v1666
    %2187 = vmatprep.subr.bf16.mxu0 %v1732
    %2188 = vmatpush1.bf16.msra.mxu0 %v1731
    %2189 = vmatprep.subr.bf16.mxu0 %v1724
    %2190 = vmatpush1.bf16.msra.mxu0 %v1723
    %2191 = vmatprep.subr.bf16.mxu0 %v1716
    %2192 = vmatpush1.bf16.msra.mxu0 %v1715
    %2193 = vmatprep.subr.bf16.mxu0 %v1708
    %2194 = vmatpush1.bf16.msra.mxu0 %v1707
    %2195 = vmatprep.subr.bf16.mxu0 %v1700
    %2196 = vmatpush1.bf16.msra.mxu0 %v1699
    %2197 = vmatprep.subr.bf16.mxu0 %v1692
    %2198 = vmatpush1.bf16.msra.mxu0 %v1691
    %2199 = vmatprep.subr.bf16.mxu0 %v1684
    %2200 = vmatpush1.bf16.msra.mxu0 %v1683
    %2201 = vmatprep.subr.bf16.mxu0 %v1676
    %2202 = vmatpush1.bf16.msra.mxu0 %v1675
    %2203 = vmatprep.subr.bf16.mxu0 %v1796
    %2204 = vmatpush2.bf16.msra.mxu0 %v1795
    %2205 = vmatprep.subr.bf16.mxu0 %v1788
    %2206 = vmatpush2.bf16.msra.mxu0 %v1787
    %2207 = vmatprep.subr.bf16.mxu0 %v1780
    %2208 = vmatpush2.bf16.msra.mxu0 %v1779
    %2209 = vmatprep.subr.bf16.mxu0 %v1772
    %2210 = vmatpush2.bf16.msra.mxu0 %v1771
    %2211 = vmatprep.subr.bf16.mxu0 %v1764
    %2212 = vmatpush2.bf16.msra.mxu0 %v1763
    %2213 = vmatprep.subr.bf16.mxu0 %v1756
    %2214 = vmatpush2.bf16.msra.mxu0 %v1755
    %2215 = vmatprep.subr.bf16.mxu0 %v1748
    %2216 = vmatpush2.bf16.msra.mxu0 %v1747
    %2217 = vmatprep.subr.bf16.mxu0 %v1740
    %2218 = vmatpush2.bf16.msra.mxu0 %v1739
    %2219 = vmatprep.mubr.bf16.mxu0 %v606
    %2220 = vmatmul.mubr.bf16.gmra.mxu0 %v605
    %v2221 = vpop.f32.mrf.mxu0
    %v2222 = vadd.f32 %v870, %v2221
    %v2223 = vpop.f32.mrf.mxu0
    %v2224 = vadd.f32 %v874, %v2223
    %v2225 = vpop.f32.mrf.mxu0
    %v2226 = vpop.f32.mrf.mxu0
    %2227 = vdwg.mxu0
    %2228 = vmatprep.subr.bf16.mxu0 %v1860
    %2229 = vmatpush1.bf16.msra.mxu0 %v1859
    %2230 = vmatprep.subr.bf16.mxu0 %v1852
    %2231 = vmatpush1.bf16.msra.mxu0 %v1851
    %2232 = vmatprep.subr.bf16.mxu0 %v1844
    %2233 = vmatpush1.bf16.msra.mxu0 %v1843
    %2234 = vmatprep.subr.bf16.mxu0 %v1836
    %2235 = vmatpush1.bf16.msra.mxu0 %v1835
    %2236 = vmatprep.subr.bf16.mxu0 %v1828
    %2237 = vmatpush1.bf16.msra.mxu0 %v1827
    %2238 = vmatprep.subr.bf16.mxu0 %v1820
    %2239 = vmatpush1.bf16.msra.mxu0 %v1819
    %2240 = vmatprep.subr.bf16.mxu0 %v1812
    %2241 = vmatpush1.bf16.msra.mxu0 %v1811
    %2242 = vmatprep.subr.bf16.mxu0 %v1804
    %2243 = vmatpush1.bf16.msra.mxu0 %v1803
    %2244 = vmatprep.subr.bf16.mxu0 %v1924
    %2245 = vmatpush2.bf16.msra.mxu0 %v1923
    %2246 = vmatprep.subr.bf16.mxu0 %v1916
    %2247 = vmatpush2.bf16.msra.mxu0 %v1915
    %2248 = vmatprep.subr.bf16.mxu0 %v1908
    %2249 = vmatpush2.bf16.msra.mxu0 %v1907
    %2250 = vmatprep.subr.bf16.mxu0 %v1900
    %2251 = vmatpush2.bf16.msra.mxu0 %v1899
    %2252 = vmatprep.subr.bf16.mxu0 %v1892
    %2253 = vmatpush2.bf16.msra.mxu0 %v1891
    %2254 = vmatprep.subr.bf16.mxu0 %v1884
    %2255 = vmatpush2.bf16.msra.mxu0 %v1883
    %2256 = vmatprep.subr.bf16.mxu0 %v1876
    %2257 = vmatpush2.bf16.msra.mxu0 %v1875
    %2258 = vmatprep.subr.bf16.mxu0 %v1868
    %2259 = vmatpush2.bf16.msra.mxu0 %v1867
    %2260 = vmatprep.mubr.bf16.mxu0 %v608
    %2261 = vmatmul.mubr.bf16.gmra.mxu0 %v607
    %v2262 = vpop.f32.mrf.mxu0
    %v2263 = vadd.f32 %v2222, %v2262
    %v2264 = vpop.f32.mrf.mxu0
    %v2265 = vadd.f32 %v2224, %v2264
    %v2266 = vpop.f32.mrf.mxu0
    %v2267 = vpop.f32.mrf.mxu0
    %2268 = vdwg.mxu0
    %2269 = vmatprep.subr.bf16.mxu0 %v1734
    %2270 = vmatpush1.bf16.msra.mxu0 %v1733
    %2271 = vmatprep.subr.bf16.mxu0 %v1726
    %2272 = vmatpush1.bf16.msra.mxu0 %v1725
    %2273 = vmatprep.subr.bf16.mxu0 %v1718
    %2274 = vmatpush1.bf16.msra.mxu0 %v1717
    %2275 = vmatprep.subr.bf16.mxu0 %v1710
    %2276 = vmatpush1.bf16.msra.mxu0 %v1709
    %2277 = vmatprep.subr.bf16.mxu0 %v1702
    %2278 = vmatpush1.bf16.msra.mxu0 %v1701
    %2279 = vmatprep.subr.bf16.mxu0 %v1694
    %2280 = vmatpush1.bf16.msra.mxu0 %v1693
    %2281 = vmatprep.subr.bf16.mxu0 %v1686
    %2282 = vmatpush1.bf16.msra.mxu0 %v1685
    %2283 = vmatprep.subr.bf16.mxu0 %v1678
    %2284 = vmatpush1.bf16.msra.mxu0 %v1677
    %2285 = vmatprep.subr.bf16.mxu0 %v1798
    %2286 = vmatpush2.bf16.msra.mxu0 %v1797
    %2287 = vmatprep.subr.bf16.mxu0 %v1790
    %2288 = vmatpush2.bf16.msra.mxu0 %v1789
    %2289 = vmatprep.subr.bf16.mxu0 %v1782
    %2290 = vmatpush2.bf16.msra.mxu0 %v1781
    %2291 = vmatprep.subr.bf16.mxu0 %v1774
    %2292 = vmatpush2.bf16.msra.mxu0 %v1773
    %2293 = vmatprep.subr.bf16.mxu0 %v1766
    %2294 = vmatpush2.bf16.msra.mxu0 %v1765
    %2295 = vmatprep.subr.bf16.mxu0 %v1758
    %2296 = vmatpush2.bf16.msra.mxu0 %v1757
    %2297 = vmatprep.subr.bf16.mxu0 %v1750
    %2298 = vmatpush2.bf16.msra.mxu0 %v1749
    %2299 = vmatprep.subr.bf16.mxu0 %v1742
    %2300 = vmatpush2.bf16.msra.mxu0 %v1741
    %2301 = vmatprep.mubr.bf16.mxu0 %v606
    %2302 = vmatmul.mubr.bf16.gmra.mxu0 %v605
    %v2303 = vpop.f32.mrf.mxu0
    %v2304 = vadd.f32 %v878, %v2303
    %v2305 = vpop.f32.mrf.mxu0
    %v2306 = vadd.f32 %v882, %v2305
    %v2307 = vpop.f32.mrf.mxu0
    %v2308 = vpop.f32.mrf.mxu0
    %2309 = vdwg.mxu0
    %2310 = vmatprep.subr.bf16.mxu0 %v1862
    %2311 = vmatpush1.bf16.msra.mxu0 %v1861
    %2312 = vmatprep.subr.bf16.mxu0 %v1854
    %2313 = vmatpush1.bf16.msra.mxu0 %v1853
    %2314 = vmatprep.subr.bf16.mxu0 %v1846
    %2315 = vmatpush1.bf16.msra.mxu0 %v1845
    %2316 = vmatprep.subr.bf16.mxu0 %v1838
    %2317 = vmatpush1.bf16.msra.mxu0 %v1837
    %2318 = vmatprep.subr.bf16.mxu0 %v1830
    %2319 = vmatpush1.bf16.msra.mxu0 %v1829
    %2320 = vmatprep.subr.bf16.mxu0 %v1822
    %2321 = vmatpush1.bf16.msra.mxu0 %v1821
    %2322 = vmatprep.subr.bf16.mxu0 %v1814
    %2323 = vmatpush1.bf16.msra.mxu0 %v1813
    %2324 = vmatprep.subr.bf16.mxu0 %v1806
    %2325 = vmatpush1.bf16.msra.mxu0 %v1805
    %2326 = vmatprep.subr.bf16.mxu0 %v1926
    %2327 = vmatpush2.bf16.msra.mxu0 %v1925
    %2328 = vmatprep.subr.bf16.mxu0 %v1918
    %2329 = vmatpush2.bf16.msra.mxu0 %v1917
    %2330 = vmatprep.subr.bf16.mxu0 %v1910
    %2331 = vmatpush2.bf16.msra.mxu0 %v1909
    %2332 = vmatprep.subr.bf16.mxu0 %v1902
    %2333 = vmatpush2.bf16.msra.mxu0 %v1901
    %2334 = vmatprep.subr.bf16.mxu0 %v1894
    %2335 = vmatpush2.bf16.msra.mxu0 %v1893
    %2336 = vmatprep.subr.bf16.mxu0 %v1886
    %2337 = vmatpush2.bf16.msra.mxu0 %v1885
    %2338 = vmatprep.subr.bf16.mxu0 %v1878
    %2339 = vmatpush2.bf16.msra.mxu0 %v1877
    %2340 = vmatprep.subr.bf16.mxu0 %v1870
    %2341 = vmatpush2.bf16.msra.mxu0 %v1869
    %2342 = vmatprep.mubr.bf16.mxu0 %v608
    %2343 = vmatmul.mubr.bf16.gmra.mxu0 %v607
    %v2344 = vpop.f32.mrf.mxu0
    %v2345 = vadd.f32 %v2304, %v2344
    %v2346 = vpop.f32.mrf.mxu0
    %v2347 = vadd.f32 %v2306, %v2346
    %v2348 = vpop.f32.mrf.mxu0
    %v2349 = vpop.f32.mrf.mxu0
    %2350 = vdwg.mxu0
    %2351 = vmatprep.subr.bf16.mxu0 %v1736
    %2352 = vmatpush1.bf16.msra.mxu0 %v1735
    %2353 = vmatprep.subr.bf16.mxu0 %v1728
    %2354 = vmatpush1.bf16.msra.mxu0 %v1727
    %2355 = vmatprep.subr.bf16.mxu0 %v1720
    %2356 = vmatpush1.bf16.msra.mxu0 %v1719
    %2357 = vmatprep.subr.bf16.mxu0 %v1712
    %2358 = vmatpush1.bf16.msra.mxu0 %v1711
    %2359 = vmatprep.subr.bf16.mxu0 %v1704
    %2360 = vmatpush1.bf16.msra.mxu0 %v1703
    %2361 = vmatprep.subr.bf16.mxu0 %v1696
    %2362 = vmatpush1.bf16.msra.mxu0 %v1695
    %2363 = vmatprep.subr.bf16.mxu0 %v1688
    %2364 = vmatpush1.bf16.msra.mxu0 %v1687
    %2365 = vmatprep.subr.bf16.mxu0 %v1680
    %2366 = vmatpush1.bf16.msra.mxu0 %v1679
    %2367 = vmatprep.subr.bf16.mxu0 %v1800
    %2368 = vmatpush2.bf16.msra.mxu0 %v1799
    %2369 = vmatprep.subr.bf16.mxu0 %v1792
    %2370 = vmatpush2.bf16.msra.mxu0 %v1791
    %2371 = vmatprep.subr.bf16.mxu0 %v1784
    %2372 = vmatpush2.bf16.msra.mxu0 %v1783
    %2373 = vmatprep.subr.bf16.mxu0 %v1776
    %2374 = vmatpush2.bf16.msra.mxu0 %v1775
    %2375 = vmatprep.subr.bf16.mxu0 %v1768
    %2376 = vmatpush2.bf16.msra.mxu0 %v1767
    %2377 = vmatprep.subr.bf16.mxu0 %v1760
    %2378 = vmatpush2.bf16.msra.mxu0 %v1759
    %2379 = vmatprep.subr.bf16.mxu0 %v1752
    %2380 = vmatpush2.bf16.msra.mxu0 %v1751
    %2381 = vmatprep.subr.bf16.mxu0 %v1744
    %2382 = vmatpush2.bf16.msra.mxu0 %v1743
    %2383 = vmatprep.mubr.bf16.mxu0 %v606
    %2384 = vmatmul.mubr.bf16.gmra.mxu0 %v605
    %v2385 = vpop.f32.mrf.mxu0
    %v2386 = vadd.f32 %v886, %v2385
    %v2387 = vpop.f32.mrf.mxu0
    %v2388 = vadd.f32 %v890, %v2387
    %v2389 = vpop.f32.mrf.mxu0
    %v2390 = vpop.f32.mrf.mxu0
    %2391 = vdwg.mxu0
    %2392 = vmatprep.subr.bf16.mxu0 %v1864
    %2393 = vmatpush1.bf16.msra.mxu0 %v1863
    %2394 = vmatprep.subr.bf16.mxu0 %v1856
    %2395 = vmatpush1.bf16.msra.mxu0 %v1855
    %2396 = vmatprep.subr.bf16.mxu0 %v1848
    %2397 = vmatpush1.bf16.msra.mxu0 %v1847
    %2398 = vmatprep.subr.bf16.mxu0 %v1840
    %2399 = vmatpush1.bf16.msra.mxu0 %v1839
    %2400 = vmatprep.subr.bf16.mxu0 %v1832
    %2401 = vmatpush1.bf16.msra.mxu0 %v1831
    %2402 = vmatprep.subr.bf16.mxu0 %v1824
    %2403 = vmatpush1.bf16.msra.mxu0 %v1823
    %2404 = vmatprep.subr.bf16.mxu0 %v1816
    %2405 = vmatpush1.bf16.msra.mxu0 %v1815
    %2406 = vmatprep.subr.bf16.mxu0 %v1808
    %2407 = vmatpush1.bf16.msra.mxu0 %v1807
    %2408 = vmatprep.subr.bf16.mxu0 %v1928
    %2409 = vmatpush2.bf16.msra.mxu0 %v1927
    %2410 = vmatprep.subr.bf16.mxu0 %v1920
    %2411 = vmatpush2.bf16.msra.mxu0 %v1919
    %2412 = vmatprep.subr.bf16.mxu0 %v1912
    %2413 = vmatpush2.bf16.msra.mxu0 %v1911
    %2414 = vmatprep.subr.bf16.mxu0 %v1904
    %2415 = vmatpush2.bf16.msra.mxu0 %v1903
    %2416 = vmatprep.subr.bf16.mxu0 %v1896
    %2417 = vmatpush2.bf16.msra.mxu0 %v1895
    %2418 = vmatprep.subr.bf16.mxu0 %v1888
    %2419 = vmatpush2.bf16.msra.mxu0 %v1887
    %2420 = vmatprep.subr.bf16.mxu0 %v1880
    %2421 = vmatpush2.bf16.msra.mxu0 %v1879
    %2422 = vmatprep.subr.bf16.mxu0 %v1872
    %2423 = vmatpush2.bf16.msra.mxu0 %v1871
    %2424 = vmatprep.mubr.bf16.mxu0 %v608
    %2425 = vmatmul.mubr.bf16.gmra.mxu0 %v607
    %v2426 = vpop.f32.mrf.mxu0
    %v2427 = vadd.f32 %v2386, %v2426
    %v2428 = vpop.f32.mrf.mxu0
    %v2429 = vadd.f32 %v2388, %v2428
    %v2430 = vpop.f32.mrf.mxu0
    %v2431 = vpop.f32.mrf.mxu0
    %2432 = vdwg.mxu0
    %2433 = vmatprep.subr.bf16.mxu0 %v1738
    %2434 = vmatpush1.bf16.msra.mxu0 %v1737
    %2435 = vmatprep.subr.bf16.mxu0 %v1730
    %2436 = vmatpush1.bf16.msra.mxu0 %v1729
    %2437 = vmatprep.subr.bf16.mxu0 %v1722
    %2438 = vmatpush1.bf16.msra.mxu0 %v1721
    %2439 = vmatprep.subr.bf16.mxu0 %v1714
    %2440 = vmatpush1.bf16.msra.mxu0 %v1713
    %2441 = vmatprep.subr.bf16.mxu0 %v1706
    %2442 = vmatpush1.bf16.msra.mxu0 %v1705
    %2443 = vmatprep.subr.bf16.mxu0 %v1698
    %2444 = vmatpush1.bf16.msra.mxu0 %v1697
    %2445 = vmatprep.subr.bf16.mxu0 %v1690
    %2446 = vmatpush1.bf16.msra.mxu0 %v1689
    %2447 = vmatprep.subr.bf16.mxu0 %v1682
    %2448 = vmatpush1.bf16.msra.mxu0 %v1681
    %2449 = vmatprep.subr.bf16.mxu0 %v1802
    %2450 = vmatpush2.bf16.msra.mxu0 %v1801
    %2451 = vmatprep.subr.bf16.mxu0 %v1794
    %2452 = vmatpush2.bf16.msra.mxu0 %v1793
    %2453 = vmatprep.subr.bf16.mxu0 %v1786
    %2454 = vmatpush2.bf16.msra.mxu0 %v1785
    %2455 = vmatprep.subr.bf16.mxu0 %v1778
    %2456 = vmatpush2.bf16.msra.mxu0 %v1777
    %2457 = vmatprep.subr.bf16.mxu0 %v1770
    %2458 = vmatpush2.bf16.msra.mxu0 %v1769
    %2459 = vmatprep.subr.bf16.mxu0 %v1762
    %2460 = vmatpush2.bf16.msra.mxu0 %v1761
    %2461 = vmatprep.subr.bf16.mxu0 %v1754
    %2462 = vmatpush2.bf16.msra.mxu0 %v1753
    %2463 = vmatprep.subr.bf16.mxu0 %v1746
    %2464 = vmatpush2.bf16.msra.mxu0 %v1745
    %2465 = vmatprep.mubr.bf16.mxu0 %v606
    %2466 = vmatmul.mubr.bf16.gmra.mxu0 %v605
    %v2467 = vpop.f32.mrf.mxu0
    %v2468 = vadd.f32 %v894, %v2467
    %v2469 = vpop.f32.mrf.mxu0
    %v2470 = vadd.f32 %v898, %v2469
    %v2471 = vpop.f32.mrf.mxu0
    %v2472 = vpop.f32.mrf.mxu0
    %2473 = vdwg.mxu0
    %2474 = vmatprep.subr.bf16.mxu0 %v1866
    %2475 = vmatpush1.bf16.msra.mxu0 %v1865
    %2476 = vmatprep.subr.bf16.mxu0 %v1858
    %2477 = vmatpush1.bf16.msra.mxu0 %v1857
    %2478 = vmatprep.subr.bf16.mxu0 %v1850
    %2479 = vmatpush1.bf16.msra.mxu0 %v1849
    %2480 = vmatprep.subr.bf16.mxu0 %v1842
    %2481 = vmatpush1.bf16.msra.mxu0 %v1841
    %2482 = vmatprep.subr.bf16.mxu0 %v1834
    %2483 = vmatpush1.bf16.msra.mxu0 %v1833
    %2484 = vmatprep.subr.bf16.mxu0 %v1826
    %2485 = vmatpush1.bf16.msra.mxu0 %v1825
    %2486 = vmatprep.subr.bf16.mxu0 %v1818
    %2487 = vmatpush1.bf16.msra.mxu0 %v1817
    %2488 = vmatprep.subr.bf16.mxu0 %v1810
    %2489 = vmatpush1.bf16.msra.mxu0 %v1809
    %2490 = vmatprep.subr.bf16.mxu0 %v1930
    %2491 = vmatpush2.bf16.msra.mxu0 %v1929
    %2492 = vmatprep.subr.bf16.mxu0 %v1922
    %2493 = vmatpush2.bf16.msra.mxu0 %v1921
    %2494 = vmatprep.subr.bf16.mxu0 %v1914
    %2495 = vmatpush2.bf16.msra.mxu0 %v1913
    %2496 = vmatprep.subr.bf16.mxu0 %v1906
    %2497 = vmatpush2.bf16.msra.mxu0 %v1905
    %2498 = vmatprep.subr.bf16.mxu0 %v1898
    %2499 = vmatpush2.bf16.msra.mxu0 %v1897
    %2500 = vmatprep.subr.bf16.mxu0 %v1890
    %2501 = vmatpush2.bf16.msra.mxu0 %v1889
    %2502 = vmatprep.subr.bf16.mxu0 %v1882
    %2503 = vmatpush2.bf16.msra.mxu0 %v1881
    %2504 = vmatprep.subr.bf16.mxu0 %v1874
    %2505 = vmatpush2.bf16.msra.mxu0 %v1873
    %2506 = vmatprep.mubr.bf16.mxu0 %v608
    %2507 = vmatmul.mubr.bf16.gmra.mxu0 %v607
    %v2508 = vpop.f32.mrf.mxu0
    %v2509 = vadd.f32 %v2468, %v2508
    %v2510 = vpop.f32.mrf.mxu0
    %v2511 = vadd.f32 %v2470, %v2510
    %v2512 = vpop.f32.mrf.mxu0
    %v2513 = vpop.f32.mrf.mxu0
    %2514 = vdwg.mxu0
    %vm2515 = vcmp.ge.f32.partialorder %v2263, 0.0
    %vm2516 = vcmp.ge.f32.partialorder %v2265, 0.0
    %vm2517 = vcmp.ge.f32.partialorder %v2345, 0.0
    %vm2518 = vcmp.ge.f32.partialorder %v2347, 0.0
    %vm2519 = vcmp.ge.f32.partialorder %v2427, 0.0
    %vm2520 = vcmp.ge.f32.partialorder %v2429, 0.0
    %vm2521 = vcmp.ge.f32.partialorder %v2509, 0.0
    %vm2522 = vcmp.ge.f32.partialorder %v2511, 0.0
    %v2523 = vmul.f32 %v2263, 0.01
    %v2524 = vmul.f32 %v2265, 0.01
    %v2525 = vmul.f32 %v2345, 0.01
    %v2526 = vmul.f32 %v2347, 0.01
    %v2527 = vmul.f32 %v2427, 0.01
    %v2528 = vmul.f32 %v2429, 0.01
    %v2529 = vmul.f32 %v2509, 0.01
    %v2530 = vmul.f32 %v2511, 0.01
    %v2531 = vsel %vm2515, %v2263, %v2523
    %v2532 = vsel %vm2516, %v2265, %v2524
    %v2533 = vsel %vm2517, %v2345, %v2525
    %v2534 = vsel %vm2518, %v2347, %v2526
    %v2535 = vsel %vm2519, %v2427, %v2527
    %v2536 = vsel %vm2520, %v2429, %v2528
    %v2537 = vsel %vm2521, %v2509, %v2529
    %v2538 = vsel %vm2522, %v2511, %v2530
    %v2539 = vpack.c.bf16 %v2531, %v2531
    %v2540 = vpack.c.bf16 %v2532, %v2532
    %v2541 = vpack.c.bf16 %v2533, %v2533
    %v2542 = vpack.c.bf16 %v2534, %v2534
    %v2543 = vpack.c.bf16 %v2535, %v2535
    %v2544 = vpack.c.bf16 %v2536, %v2536
    %v2545 = vpack.c.bf16 %v2537, %v2537
    %v2546 = vpack.c.bf16 %v2538, %v2538
    %s2547 = smul.u32 4, 128
    %s2548 = smul.u32 %s2547, 8
    %s2549 = sshll.u32 %s2548, 4
    %2550 = dma.done [#allocation3], %s2549
    %v2551 = vld [vmem:[#allocation2] sm:$0xff]
    %v2552 = vld [vmem:[#allocation2 + $0x8] sm:$0xff]
    %v2553 = vld [vmem:[#allocation2 + $0x10] sm:$0xff]
    %v2554 = vld [vmem:[#allocation2 + $0x18] sm:$0xff]
    %v2555 = vld [vmem:[#allocation2 + $0x20] sm:$0xff]
    %v2556 = vld [vmem:[#allocation2 + $0x28] sm:$0xff]
    %v2557 = vld [vmem:[#allocation2 + $0x30] sm:$0xff]
    %v2558 = vld [vmem:[#allocation2 + $0x38] sm:$0xff]
    %v2559 = vld [vmem:[#allocation2 + $0x40] sm:$0xff]
    %v2560 = vld [vmem:[#allocation2 + $0x48] sm:$0xff]
    %v2561 = vld [vmem:[#allocation2 + $0x50] sm:$0xff]
    %v2562 = vld [vmem:[#allocation2 + $0x58] sm:$0xff]
    %v2563 = vld [vmem:[#allocation2 + $0x60] sm:$0xff]
    %v2564 = vld [vmem:[#allocation2 + $0x68] sm:$0xff]
    %v2565 = vld [vmem:[#allocation2 + $0x70] sm:$0xff]
    %v2566 = vld [vmem:[#allocation2 + $0x78] sm:$0xff]
    %v2567 = vld [vmem:[#allocation2 + $0x80] sm:$0xff]
    %v2568 = vld [vmem:[#allocation2 + $0x88] sm:$0xff]
    %v2569 = vld [vmem:[#allocation2 + $0x90] sm:$0xff]
    %v2570 = vld [vmem:[#allocation2 + $0x98] sm:$0xff]
    %v2571 = vld [vmem:[#allocation2 + $0xa0] sm:$0xff]
    %v2572 = vld [vmem:[#allocation2 + $0xa8] sm:$0xff]
    %v2573 = vld [vmem:[#allocation2 + $0xb0] sm:$0xff]
    %v2574 = vld [vmem:[#allocation2 + $0xb8] sm:$0xff]
    %v2575 = vld [vmem:[#allocation2 + $0xc0] sm:$0xff]
    %v2576 = vld [vmem:[#allocation2 + $0xc8] sm:$0xff]
    %v2577 = vld [vmem:[#allocation2 + $0xd0] sm:$0xff]
    %v2578 = vld [vmem:[#allocation2 + $0xd8] sm:$0xff]
    %v2579 = vld [vmem:[#allocation2 + $0xe0] sm:$0xff]
    %v2580 = vld [vmem:[#allocation2 + $0xe8] sm:$0xff]
    %v2581 = vld [vmem:[#allocation2 + $0xf0] sm:$0xff]
    %v2582 = vld [vmem:[#allocation2 + $0xf8] sm:$0xff]
    %v2583 = vld [vmem:[#allocation2 + $0x100] sm:$0xff]
    %v2584 = vld [vmem:[#allocation2 + $0x108] sm:$0xff]
    %v2585 = vld [vmem:[#allocation2 + $0x110] sm:$0xff]
    %v2586 = vld [vmem:[#allocation2 + $0x118] sm:$0xff]
    %v2587 = vld [vmem:[#allocation2 + $0x120] sm:$0xff]
    %v2588 = vld [vmem:[#allocation2 + $0x128] sm:$0xff]
    %v2589 = vld [vmem:[#allocation2 + $0x130] sm:$0xff]
    %v2590 = vld [vmem:[#allocation2 + $0x138] sm:$0xff]
    %v2591 = vld [vmem:[#allocation2 + $0x140] sm:$0xff]
    %v2592 = vld [vmem:[#allocation2 + $0x148] sm:$0xff]
    %v2593 = vld [vmem:[#allocation2 + $0x150] sm:$0xff]
    %v2594 = vld [vmem:[#allocation2 + $0x158] sm:$0xff]
    %v2595 = vld [vmem:[#allocation2 + $0x160] sm:$0xff]
    %v2596 = vld [vmem:[#allocation2 + $0x168] sm:$0xff]
    %v2597 = vld [vmem:[#allocation2 + $0x170] sm:$0xff]
    %v2598 = vld [vmem:[#allocation2 + $0x178] sm:$0xff]
    %v2599 = vld [vmem:[#allocation2 + $0x180] sm:$0xff]
    %v2600 = vld [vmem:[#allocation2 + $0x188] sm:$0xff]
    %v2601 = vld [vmem:[#allocation2 + $0x190] sm:$0xff]
    %v2602 = vld [vmem:[#allocation2 + $0x198] sm:$0xff]
    %v2603 = vld [vmem:[#allocation2 + $0x1a0] sm:$0xff]
    %v2604 = vld [vmem:[#allocation2 + $0x1a8] sm:$0xff]
    %v2605 = vld [vmem:[#allocation2 + $0x1b0] sm:$0xff]
    %v2606 = vld [vmem:[#allocation2 + $0x1b8] sm:$0xff]
    %v2607 = vld [vmem:[#allocation2 + $0x1c0] sm:$0xff]
    %v2608 = vld [vmem:[#allocation2 + $0x1c8] sm:$0xff]
    %v2609 = vld [vmem:[#allocation2 + $0x1d0] sm:$0xff]
    %v2610 = vld [vmem:[#allocation2 + $0x1d8] sm:$0xff]
    %v2611 = vld [vmem:[#allocation2 + $0x1e0] sm:$0xff]
    %v2612 = vld [vmem:[#allocation2 + $0x1e8] sm:$0xff]
    %v2613 = vld [vmem:[#allocation2 + $0x1f0] sm:$0xff]
    %v2614 = vld [vmem:[#allocation2 + $0x1f8] sm:$0xff]
    %v2615 = vld [vmem:[#allocation2 + $0x200] sm:$0xff]
    %v2616 = vld [vmem:[#allocation2 + $0x208] sm:$0xff]
    %v2617 = vld [vmem:[#allocation2 + $0x210] sm:$0xff]
    %v2618 = vld [vmem:[#allocation2 + $0x218] sm:$0xff]
    %v2619 = vld [vmem:[#allocation2 + $0x220] sm:$0xff]
    %v2620 = vld [vmem:[#allocation2 + $0x228] sm:$0xff]
    %v2621 = vld [vmem:[#allocation2 + $0x230] sm:$0xff]
    %v2622 = vld [vmem:[#allocation2 + $0x238] sm:$0xff]
    %v2623 = vld [vmem:[#allocation2 + $0x240] sm:$0xff]
    %v2624 = vld [vmem:[#allocation2 + $0x248] sm:$0xff]
    %v2625 = vld [vmem:[#allocation2 + $0x250] sm:$0xff]
    %v2626 = vld [vmem:[#allocation2 + $0x258] sm:$0xff]
    %v2627 = vld [vmem:[#allocation2 + $0x260] sm:$0xff]
    %v2628 = vld [vmem:[#allocation2 + $0x268] sm:$0xff]
    %v2629 = vld [vmem:[#allocation2 + $0x270] sm:$0xff]
    %v2630 = vld [vmem:[#allocation2 + $0x278] sm:$0xff]
    %v2631 = vld [vmem:[#allocation2 + $0x280] sm:$0xff]
    %v2632 = vld [vmem:[#allocation2 + $0x288] sm:$0xff]
    %v2633 = vld [vmem:[#allocation2 + $0x290] sm:$0xff]
    %v2634 = vld [vmem:[#allocation2 + $0x298] sm:$0xff]
    %v2635 = vld [vmem:[#allocation2 + $0x2a0] sm:$0xff]
    %v2636 = vld [vmem:[#allocation2 + $0x2a8] sm:$0xff]
    %v2637 = vld [vmem:[#allocation2 + $0x2b0] sm:$0xff]
    %v2638 = vld [vmem:[#allocation2 + $0x2b8] sm:$0xff]
    %v2639 = vld [vmem:[#allocation2 + $0x2c0] sm:$0xff]
    %v2640 = vld [vmem:[#allocation2 + $0x2c8] sm:$0xff]
    %v2641 = vld [vmem:[#allocation2 + $0x2d0] sm:$0xff]
    %v2642 = vld [vmem:[#allocation2 + $0x2d8] sm:$0xff]
    %v2643 = vld [vmem:[#allocation2 + $0x2e0] sm:$0xff]
    %v2644 = vld [vmem:[#allocation2 + $0x2e8] sm:$0xff]
    %v2645 = vld [vmem:[#allocation2 + $0x2f0] sm:$0xff]
    %v2646 = vld [vmem:[#allocation2 + $0x2f8] sm:$0xff]
    %v2647 = vld [vmem:[#allocation2 + $0x300] sm:$0xff]
    %v2648 = vld [vmem:[#allocation2 + $0x308] sm:$0xff]
    %v2649 = vld [vmem:[#allocation2 + $0x310] sm:$0xff]
    %v2650 = vld [vmem:[#allocation2 + $0x318] sm:$0xff]
    %v2651 = vld [vmem:[#allocation2 + $0x320] sm:$0xff]
    %v2652 = vld [vmem:[#allocation2 + $0x328] sm:$0xff]
    %v2653 = vld [vmem:[#allocation2 + $0x330] sm:$0xff]
    %v2654 = vld [vmem:[#allocation2 + $0x338] sm:$0xff]
    %v2655 = vld [vmem:[#allocation2 + $0x340] sm:$0xff]
    %v2656 = vld [vmem:[#allocation2 + $0x348] sm:$0xff]
    %v2657 = vld [vmem:[#allocation2 + $0x350] sm:$0xff]
    %v2658 = vld [vmem:[#allocation2 + $0x358] sm:$0xff]
    %v2659 = vld [vmem:[#allocation2 + $0x360] sm:$0xff]
    %v2660 = vld [vmem:[#allocation2 + $0x368] sm:$0xff]
    %v2661 = vld [vmem:[#allocation2 + $0x370] sm:$0xff]
    %v2662 = vld [vmem:[#allocation2 + $0x378] sm:$0xff]
    %v2663 = vld [vmem:[#allocation2 + $0x380] sm:$0xff]
    %v2664 = vld [vmem:[#allocation2 + $0x388] sm:$0xff]
    %v2665 = vld [vmem:[#allocation2 + $0x390] sm:$0xff]
    %v2666 = vld [vmem:[#allocation2 + $0x398] sm:$0xff]
    %v2667 = vld [vmem:[#allocation2 + $0x3a0] sm:$0xff]
    %v2668 = vld [vmem:[#allocation2 + $0x3a8] sm:$0xff]
    %v2669 = vld [vmem:[#allocation2 + $0x3b0] sm:$0xff]
    %v2670 = vld [vmem:[#allocation2 + $0x3b8] sm:$0xff]
    %v2671 = vld [vmem:[#allocation2 + $0x3c0] sm:$0xff]
    %v2672 = vld [vmem:[#allocation2 + $0x3c8] sm:$0xff]
    %v2673 = vld [vmem:[#allocation2 + $0x3d0] sm:$0xff]
    %v2674 = vld [vmem:[#allocation2 + $0x3d8] sm:$0xff]
    %v2675 = vld [vmem:[#allocation2 + $0x3e0] sm:$0xff]
    %v2676 = vld [vmem:[#allocation2 + $0x3e8] sm:$0xff]
    %v2677 = vld [vmem:[#allocation2 + $0x3f0] sm:$0xff]
    %v2678 = vld [vmem:[#allocation2 + $0x3f8] sm:$0xff]
    %v2679 = vld [vmem:[#allocation2 + $0x400] sm:$0xff]
    %v2680 = vld [vmem:[#allocation2 + $0x408] sm:$0xff]
    %v2681 = vld [vmem:[#allocation2 + $0x410] sm:$0xff]
    %v2682 = vld [vmem:[#allocation2 + $0x418] sm:$0xff]
    %v2683 = vld [vmem:[#allocation2 + $0x420] sm:$0xff]
    %v2684 = vld [vmem:[#allocation2 + $0x428] sm:$0xff]
    %v2685 = vld [vmem:[#allocation2 + $0x430] sm:$0xff]
    %v2686 = vld [vmem:[#allocation2 + $0x438] sm:$0xff]
    %v2687 = vld [vmem:[#allocation2 + $0x440] sm:$0xff]
    %v2688 = vld [vmem:[#allocation2 + $0x448] sm:$0xff]
    %v2689 = vld [vmem:[#allocation2 + $0x450] sm:$0xff]
    %v2690 = vld [vmem:[#allocation2 + $0x458] sm:$0xff]
    %v2691 = vld [vmem:[#allocation2 + $0x460] sm:$0xff]
    %v2692 = vld [vmem:[#allocation2 + $0x468] sm:$0xff]
    %v2693 = vld [vmem:[#allocation2 + $0x470] sm:$0xff]
    %v2694 = vld [vmem:[#allocation2 + $0x478] sm:$0xff]
    %v2695 = vld [vmem:[#allocation2 + $0x480] sm:$0xff]
    %v2696 = vld [vmem:[#allocation2 + $0x488] sm:$0xff]
    %v2697 = vld [vmem:[#allocation2 + $0x490] sm:$0xff]
    %v2698 = vld [vmem:[#allocation2 + $0x498] sm:$0xff]
    %v2699 = vld [vmem:[#allocation2 + $0x4a0] sm:$0xff]
    %v2700 = vld [vmem:[#allocation2 + $0x4a8] sm:$0xff]
    %v2701 = vld [vmem:[#allocation2 + $0x4b0] sm:$0xff]
    %v2702 = vld [vmem:[#allocation2 + $0x4b8] sm:$0xff]
    %v2703 = vld [vmem:[#allocation2 + $0x4c0] sm:$0xff]
    %v2704 = vld [vmem:[#allocation2 + $0x4c8] sm:$0xff]
    %v2705 = vld [vmem:[#allocation2 + $0x4d0] sm:$0xff]
    %v2706 = vld [vmem:[#allocation2 + $0x4d8] sm:$0xff]
    %v2707 = vld [vmem:[#allocation2 + $0x4e0] sm:$0xff]
    %v2708 = vld [vmem:[#allocation2 + $0x4e8] sm:$0xff]
    %v2709 = vld [vmem:[#allocation2 + $0x4f0] sm:$0xff]
    %v2710 = vld [vmem:[#allocation2 + $0x4f8] sm:$0xff]
    %v2711 = vld [vmem:[#allocation2 + $0x500] sm:$0xff]
    %v2712 = vld [vmem:[#allocation2 + $0x508] sm:$0xff]
    %v2713 = vld [vmem:[#allocation2 + $0x510] sm:$0xff]
    %v2714 = vld [vmem:[#allocation2 + $0x518] sm:$0xff]
    %v2715 = vld [vmem:[#allocation2 + $0x520] sm:$0xff]
    %v2716 = vld [vmem:[#allocation2 + $0x528] sm:$0xff]
    %v2717 = vld [vmem:[#allocation2 + $0x530] sm:$0xff]
    %v2718 = vld [vmem:[#allocation2 + $0x538] sm:$0xff]
    %v2719 = vld [vmem:[#allocation2 + $0x540] sm:$0xff]
    %v2720 = vld [vmem:[#allocation2 + $0x548] sm:$0xff]
    %v2721 = vld [vmem:[#allocation2 + $0x550] sm:$0xff]
    %v2722 = vld [vmem:[#allocation2 + $0x558] sm:$0xff]
    %v2723 = vld [vmem:[#allocation2 + $0x560] sm:$0xff]
    %v2724 = vld [vmem:[#allocation2 + $0x568] sm:$0xff]
    %v2725 = vld [vmem:[#allocation2 + $0x570] sm:$0xff]
    %v2726 = vld [vmem:[#allocation2 + $0x578] sm:$0xff]
    %v2727 = vld [vmem:[#allocation2 + $0x580] sm:$0xff]
    %v2728 = vld [vmem:[#allocation2 + $0x588] sm:$0xff]
    %v2729 = vld [vmem:[#allocation2 + $0x590] sm:$0xff]
    %v2730 = vld [vmem:[#allocation2 + $0x598] sm:$0xff]
    %v2731 = vld [vmem:[#allocation2 + $0x5a0] sm:$0xff]
    %v2732 = vld [vmem:[#allocation2 + $0x5a8] sm:$0xff]
    %v2733 = vld [vmem:[#allocation2 + $0x5b0] sm:$0xff]
    %v2734 = vld [vmem:[#allocation2 + $0x5b8] sm:$0xff]
    %v2735 = vld [vmem:[#allocation2 + $0x5c0] sm:$0xff]
    %v2736 = vld [vmem:[#allocation2 + $0x5c8] sm:$0xff]
    %v2737 = vld [vmem:[#allocation2 + $0x5d0] sm:$0xff]
    %v2738 = vld [vmem:[#allocation2 + $0x5d8] sm:$0xff]
    %v2739 = vld [vmem:[#allocation2 + $0x5e0] sm:$0xff]
    %v2740 = vld [vmem:[#allocation2 + $0x5e8] sm:$0xff]
    %v2741 = vld [vmem:[#allocation2 + $0x5f0] sm:$0xff]
    %v2742 = vld [vmem:[#allocation2 + $0x5f8] sm:$0xff]
    %v2743 = vld [vmem:[#allocation2 + $0x600] sm:$0xff]
    %v2744 = vld [vmem:[#allocation2 + $0x608] sm:$0xff]
    %v2745 = vld [vmem:[#allocation2 + $0x610] sm:$0xff]
    %v2746 = vld [vmem:[#allocation2 + $0x618] sm:$0xff]
    %v2747 = vld [vmem:[#allocation2 + $0x620] sm:$0xff]
    %v2748 = vld [vmem:[#allocation2 + $0x628] sm:$0xff]
    %v2749 = vld [vmem:[#allocation2 + $0x630] sm:$0xff]
    %v2750 = vld [vmem:[#allocation2 + $0x638] sm:$0xff]
    %v2751 = vld [vmem:[#allocation2 + $0x640] sm:$0xff]
    %v2752 = vld [vmem:[#allocation2 + $0x648] sm:$0xff]
    %v2753 = vld [vmem:[#allocation2 + $0x650] sm:$0xff]
    %v2754 = vld [vmem:[#allocation2 + $0x658] sm:$0xff]
    %v2755 = vld [vmem:[#allocation2 + $0x660] sm:$0xff]
    %v2756 = vld [vmem:[#allocation2 + $0x668] sm:$0xff]
    %v2757 = vld [vmem:[#allocation2 + $0x670] sm:$0xff]
    %v2758 = vld [vmem:[#allocation2 + $0x678] sm:$0xff]
    %v2759 = vld [vmem:[#allocation2 + $0x680] sm:$0xff]
    %v2760 = vld [vmem:[#allocation2 + $0x688] sm:$0xff]
    %v2761 = vld [vmem:[#allocation2 + $0x690] sm:$0xff]
    %v2762 = vld [vmem:[#allocation2 + $0x698] sm:$0xff]
    %v2763 = vld [vmem:[#allocation2 + $0x6a0] sm:$0xff]
    %v2764 = vld [vmem:[#allocation2 + $0x6a8] sm:$0xff]
    %v2765 = vld [vmem:[#allocation2 + $0x6b0] sm:$0xff]
    %v2766 = vld [vmem:[#allocation2 + $0x6b8] sm:$0xff]
    %v2767 = vld [vmem:[#allocation2 + $0x6c0] sm:$0xff]
    %v2768 = vld [vmem:[#allocation2 + $0x6c8] sm:$0xff]
    %v2769 = vld [vmem:[#allocation2 + $0x6d0] sm:$0xff]
    %v2770 = vld [vmem:[#allocation2 + $0x6d8] sm:$0xff]
    %v2771 = vld [vmem:[#allocation2 + $0x6e0] sm:$0xff]
    %v2772 = vld [vmem:[#allocation2 + $0x6e8] sm:$0xff]
    %v2773 = vld [vmem:[#allocation2 + $0x6f0] sm:$0xff]
    %v2774 = vld [vmem:[#allocation2 + $0x6f8] sm:$0xff]
    %v2775 = vld [vmem:[#allocation2 + $0x700] sm:$0xff]
    %v2776 = vld [vmem:[#allocation2 + $0x708] sm:$0xff]
    %v2777 = vld [vmem:[#allocation2 + $0x710] sm:$0xff]
    %v2778 = vld [vmem:[#allocation2 + $0x718] sm:$0xff]
    %v2779 = vld [vmem:[#allocation2 + $0x720] sm:$0xff]
    %v2780 = vld [vmem:[#allocation2 + $0x728] sm:$0xff]
    %v2781 = vld [vmem:[#allocation2 + $0x730] sm:$0xff]
    %v2782 = vld [vmem:[#allocation2 + $0x738] sm:$0xff]
    %v2783 = vld [vmem:[#allocation2 + $0x740] sm:$0xff]
    %v2784 = vld [vmem:[#allocation2 + $0x748] sm:$0xff]
    %v2785 = vld [vmem:[#allocation2 + $0x750] sm:$0xff]
    %v2786 = vld [vmem:[#allocation2 + $0x758] sm:$0xff]
    %v2787 = vld [vmem:[#allocation2 + $0x760] sm:$0xff]
    %v2788 = vld [vmem:[#allocation2 + $0x768] sm:$0xff]
    %v2789 = vld [vmem:[#allocation2 + $0x770] sm:$0xff]
    %v2790 = vld [vmem:[#allocation2 + $0x778] sm:$0xff]
    %v2791 = vld [vmem:[#allocation2 + $0x780] sm:$0xff]
    %v2792 = vld [vmem:[#allocation2 + $0x788] sm:$0xff]
    %v2793 = vld [vmem:[#allocation2 + $0x790] sm:$0xff]
    %v2794 = vld [vmem:[#allocation2 + $0x798] sm:$0xff]
    %v2795 = vld [vmem:[#allocation2 + $0x7a0] sm:$0xff]
    %v2796 = vld [vmem:[#allocation2 + $0x7a8] sm:$0xff]
    %v2797 = vld [vmem:[#allocation2 + $0x7b0] sm:$0xff]
    %v2798 = vld [vmem:[#allocation2 + $0x7b8] sm:$0xff]
    %v2799 = vld [vmem:[#allocation2 + $0x7c0] sm:$0xff]
    %v2800 = vld [vmem:[#allocation2 + $0x7c8] sm:$0xff]
    %v2801 = vld [vmem:[#allocation2 + $0x7d0] sm:$0xff]
    %v2802 = vld [vmem:[#allocation2 + $0x7d8] sm:$0xff]
    %v2803 = vld [vmem:[#allocation2 + $0x7e0] sm:$0xff]
    %v2804 = vld [vmem:[#allocation2 + $0x7e8] sm:$0xff]
    %v2805 = vld [vmem:[#allocation2 + $0x7f0] sm:$0xff]
    %v2806 = vld [vmem:[#allocation2 + $0x7f8] sm:$0xff]
    %v2807 = vld [vmem:[#allocation2 + $0x800] sm:$0xff]
    %v2808 = vld [vmem:[#allocation2 + $0x808] sm:$0xff]
    %v2809 = vld [vmem:[#allocation2 + $0x810] sm:$0xff]
    %v2810 = vld [vmem:[#allocation2 + $0x818] sm:$0xff]
    %v2811 = vld [vmem:[#allocation2 + $0x820] sm:$0xff]
    %v2812 = vld [vmem:[#allocation2 + $0x828] sm:$0xff]
    %v2813 = vld [vmem:[#allocation2 + $0x830] sm:$0xff]
    %v2814 = vld [vmem:[#allocation2 + $0x838] sm:$0xff]
    %v2815 = vld [vmem:[#allocation2 + $0x840] sm:$0xff]
    %v2816 = vld [vmem:[#allocation2 + $0x848] sm:$0xff]
    %v2817 = vld [vmem:[#allocation2 + $0x850] sm:$0xff]
    %v2818 = vld [vmem:[#allocation2 + $0x858] sm:$0xff]
    %v2819 = vld [vmem:[#allocation2 + $0x860] sm:$0xff]
    %v2820 = vld [vmem:[#allocation2 + $0x868] sm:$0xff]
    %v2821 = vld [vmem:[#allocation2 + $0x870] sm:$0xff]
    %v2822 = vld [vmem:[#allocation2 + $0x878] sm:$0xff]
    %v2823 = vld [vmem:[#allocation2 + $0x880] sm:$0xff]
    %v2824 = vld [vmem:[#allocation2 + $0x888] sm:$0xff]
    %v2825 = vld [vmem:[#allocation2 + $0x890] sm:$0xff]
    %v2826 = vld [vmem:[#allocation2 + $0x898] sm:$0xff]
    %v2827 = vld [vmem:[#allocation2 + $0x8a0] sm:$0xff]
    %v2828 = vld [vmem:[#allocation2 + $0x8a8] sm:$0xff]
    %v2829 = vld [vmem:[#allocation2 + $0x8b0] sm:$0xff]
    %v2830 = vld [vmem:[#allocation2 + $0x8b8] sm:$0xff]
    %v2831 = vld [vmem:[#allocation2 + $0x8c0] sm:$0xff]
    %v2832 = vld [vmem:[#allocation2 + $0x8c8] sm:$0xff]
    %v2833 = vld [vmem:[#allocation2 + $0x8d0] sm:$0xff]
    %v2834 = vld [vmem:[#allocation2 + $0x8d8] sm:$0xff]
    %v2835 = vld [vmem:[#allocation2 + $0x8e0] sm:$0xff]
    %v2836 = vld [vmem:[#allocation2 + $0x8e8] sm:$0xff]
    %v2837 = vld [vmem:[#allocation2 + $0x8f0] sm:$0xff]
    %v2838 = vld [vmem:[#allocation2 + $0x8f8] sm:$0xff]
    %v2839 = vld [vmem:[#allocation2 + $0x900] sm:$0xff]
    %v2840 = vld [vmem:[#allocation2 + $0x908] sm:$0xff]
    %v2841 = vld [vmem:[#allocation2 + $0x910] sm:$0xff]
    %v2842 = vld [vmem:[#allocation2 + $0x918] sm:$0xff]
    %v2843 = vld [vmem:[#allocation2 + $0x920] sm:$0xff]
    %v2844 = vld [vmem:[#allocation2 + $0x928] sm:$0xff]
    %v2845 = vld [vmem:[#allocation2 + $0x930] sm:$0xff]
    %v2846 = vld [vmem:[#allocation2 + $0x938] sm:$0xff]
    %v2847 = vld [vmem:[#allocation2 + $0x940] sm:$0xff]
    %v2848 = vld [vmem:[#allocation2 + $0x948] sm:$0xff]
    %v2849 = vld [vmem:[#allocation2 + $0x950] sm:$0xff]
    %v2850 = vld [vmem:[#allocation2 + $0x958] sm:$0xff]
    %v2851 = vld [vmem:[#allocation2 + $0x960] sm:$0xff]
    %v2852 = vld [vmem:[#allocation2 + $0x968] sm:$0xff]
    %v2853 = vld [vmem:[#allocation2 + $0x970] sm:$0xff]
    %v2854 = vld [vmem:[#allocation2 + $0x978] sm:$0xff]
    %v2855 = vld [vmem:[#allocation2 + $0x980] sm:$0xff]
    %v2856 = vld [vmem:[#allocation2 + $0x988] sm:$0xff]
    %v2857 = vld [vmem:[#allocation2 + $0x990] sm:$0xff]
    %v2858 = vld [vmem:[#allocation2 + $0x998] sm:$0xff]
    %v2859 = vld [vmem:[#allocation2 + $0x9a0] sm:$0xff]
    %v2860 = vld [vmem:[#allocation2 + $0x9a8] sm:$0xff]
    %v2861 = vld [vmem:[#allocation2 + $0x9b0] sm:$0xff]
    %v2862 = vld [vmem:[#allocation2 + $0x9b8] sm:$0xff]
    %v2863 = vld [vmem:[#allocation2 + $0x9c0] sm:$0xff]
    %v2864 = vld [vmem:[#allocation2 + $0x9c8] sm:$0xff]
    %v2865 = vld [vmem:[#allocation2 + $0x9d0] sm:$0xff]
    %v2866 = vld [vmem:[#allocation2 + $0x9d8] sm:$0xff]
    %v2867 = vld [vmem:[#allocation2 + $0x9e0] sm:$0xff]
    %v2868 = vld [vmem:[#allocation2 + $0x9e8] sm:$0xff]
    %v2869 = vld [vmem:[#allocation2 + $0x9f0] sm:$0xff]
    %v2870 = vld [vmem:[#allocation2 + $0x9f8] sm:$0xff]
    %v2871 = vld [vmem:[#allocation2 + $0xa00] sm:$0xff]
    %v2872 = vld [vmem:[#allocation2 + $0xa08] sm:$0xff]
    %v2873 = vld [vmem:[#allocation2 + $0xa10] sm:$0xff]
    %v2874 = vld [vmem:[#allocation2 + $0xa18] sm:$0xff]
    %v2875 = vld [vmem:[#allocation2 + $0xa20] sm:$0xff]
    %v2876 = vld [vmem:[#allocation2 + $0xa28] sm:$0xff]
    %v2877 = vld [vmem:[#allocation2 + $0xa30] sm:$0xff]
    %v2878 = vld [vmem:[#allocation2 + $0xa38] sm:$0xff]
    %v2879 = vld [vmem:[#allocation2 + $0xa40] sm:$0xff]
    %v2880 = vld [vmem:[#allocation2 + $0xa48] sm:$0xff]
    %v2881 = vld [vmem:[#allocation2 + $0xa50] sm:$0xff]
    %v2882 = vld [vmem:[#allocation2 + $0xa58] sm:$0xff]
    %v2883 = vld [vmem:[#allocation2 + $0xa60] sm:$0xff]
    %v2884 = vld [vmem:[#allocation2 + $0xa68] sm:$0xff]
    %v2885 = vld [vmem:[#allocation2 + $0xa70] sm:$0xff]
    %v2886 = vld [vmem:[#allocation2 + $0xa78] sm:$0xff]
    %v2887 = vld [vmem:[#allocation2 + $0xa80] sm:$0xff]
    %v2888 = vld [vmem:[#allocation2 + $0xa88] sm:$0xff]
    %v2889 = vld [vmem:[#allocation2 + $0xa90] sm:$0xff]
    %v2890 = vld [vmem:[#allocation2 + $0xa98] sm:$0xff]
    %v2891 = vld [vmem:[#allocation2 + $0xaa0] sm:$0xff]
    %v2892 = vld [vmem:[#allocation2 + $0xaa8] sm:$0xff]
    %v2893 = vld [vmem:[#allocation2 + $0xab0] sm:$0xff]
    %v2894 = vld [vmem:[#allocation2 + $0xab8] sm:$0xff]
    %v2895 = vld [vmem:[#allocation2 + $0xac0] sm:$0xff]
    %v2896 = vld [vmem:[#allocation2 + $0xac8] sm:$0xff]
    %v2897 = vld [vmem:[#allocation2 + $0xad0] sm:$0xff]
    %v2898 = vld [vmem:[#allocation2 + $0xad8] sm:$0xff]
    %v2899 = vld [vmem:[#allocation2 + $0xae0] sm:$0xff]
    %v2900 = vld [vmem:[#allocation2 + $0xae8] sm:$0xff]
    %v2901 = vld [vmem:[#allocation2 + $0xaf0] sm:$0xff]
    %v2902 = vld [vmem:[#allocation2 + $0xaf8] sm:$0xff]
    %v2903 = vld [vmem:[#allocation2 + $0xb00] sm:$0xff]
    %v2904 = vld [vmem:[#allocation2 + $0xb08] sm:$0xff]
    %v2905 = vld [vmem:[#allocation2 + $0xb10] sm:$0xff]
    %v2906 = vld [vmem:[#allocation2 + $0xb18] sm:$0xff]
    %v2907 = vld [vmem:[#allocation2 + $0xb20] sm:$0xff]
    %v2908 = vld [vmem:[#allocation2 + $0xb28] sm:$0xff]
    %v2909 = vld [vmem:[#allocation2 + $0xb30] sm:$0xff]
    %v2910 = vld [vmem:[#allocation2 + $0xb38] sm:$0xff]
    %v2911 = vld [vmem:[#allocation2 + $0xb40] sm:$0xff]
    %v2912 = vld [vmem:[#allocation2 + $0xb48] sm:$0xff]
    %v2913 = vld [vmem:[#allocation2 + $0xb50] sm:$0xff]
    %v2914 = vld [vmem:[#allocation2 + $0xb58] sm:$0xff]
    %v2915 = vld [vmem:[#allocation2 + $0xb60] sm:$0xff]
    %v2916 = vld [vmem:[#allocation2 + $0xb68] sm:$0xff]
    %v2917 = vld [vmem:[#allocation2 + $0xb70] sm:$0xff]
    %v2918 = vld [vmem:[#allocation2 + $0xb78] sm:$0xff]
    %v2919 = vld [vmem:[#allocation2 + $0xb80] sm:$0xff]
    %v2920 = vld [vmem:[#allocation2 + $0xb88] sm:$0xff]
    %v2921 = vld [vmem:[#allocation2 + $0xb90] sm:$0xff]
    %v2922 = vld [vmem:[#allocation2 + $0xb98] sm:$0xff]
    %v2923 = vld [vmem:[#allocation2 + $0xba0] sm:$0xff]
    %v2924 = vld [vmem:[#allocation2 + $0xba8] sm:$0xff]
    %v2925 = vld [vmem:[#allocation2 + $0xbb0] sm:$0xff]
    %v2926 = vld [vmem:[#allocation2 + $0xbb8] sm:$0xff]
    %v2927 = vld [vmem:[#allocation2 + $0xbc0] sm:$0xff]
    %v2928 = vld [vmem:[#allocation2 + $0xbc8] sm:$0xff]
    %v2929 = vld [vmem:[#allocation2 + $0xbd0] sm:$0xff]
    %v2930 = vld [vmem:[#allocation2 + $0xbd8] sm:$0xff]
    %v2931 = vld [vmem:[#allocation2 + $0xbe0] sm:$0xff]
    %v2932 = vld [vmem:[#allocation2 + $0xbe8] sm:$0xff]
    %v2933 = vld [vmem:[#allocation2 + $0xbf0] sm:$0xff]
    %v2934 = vld [vmem:[#allocation2 + $0xbf8] sm:$0xff]
    %v2935 = vld [vmem:[#allocation2 + $0xc00] sm:$0xff]
    %v2936 = vld [vmem:[#allocation2 + $0xc08] sm:$0xff]
    %v2937 = vld [vmem:[#allocation2 + $0xc10] sm:$0xff]
    %v2938 = vld [vmem:[#allocation2 + $0xc18] sm:$0xff]
    %v2939 = vld [vmem:[#allocation2 + $0xc20] sm:$0xff]
    %v2940 = vld [vmem:[#allocation2 + $0xc28] sm:$0xff]
    %v2941 = vld [vmem:[#allocation2 + $0xc30] sm:$0xff]
    %v2942 = vld [vmem:[#allocation2 + $0xc38] sm:$0xff]
    %v2943 = vld [vmem:[#allocation2 + $0xc40] sm:$0xff]
    %v2944 = vld [vmem:[#allocation2 + $0xc48] sm:$0xff]
    %v2945 = vld [vmem:[#allocation2 + $0xc50] sm:$0xff]
    %v2946 = vld [vmem:[#allocation2 + $0xc58] sm:$0xff]
    %v2947 = vld [vmem:[#allocation2 + $0xc60] sm:$0xff]
    %v2948 = vld [vmem:[#allocation2 + $0xc68] sm:$0xff]
    %v2949 = vld [vmem:[#allocation2 + $0xc70] sm:$0xff]
    %v2950 = vld [vmem:[#allocation2 + $0xc78] sm:$0xff]
    %v2951 = vld [vmem:[#allocation2 + $0xc80] sm:$0xff]
    %v2952 = vld [vmem:[#allocation2 + $0xc88] sm:$0xff]
    %v2953 = vld [vmem:[#allocation2 + $0xc90] sm:$0xff]
    %v2954 = vld [vmem:[#allocation2 + $0xc98] sm:$0xff]
    %v2955 = vld [vmem:[#allocation2 + $0xca0] sm:$0xff]
    %v2956 = vld [vmem:[#allocation2 + $0xca8] sm:$0xff]
    %v2957 = vld [vmem:[#allocation2 + $0xcb0] sm:$0xff]
    %v2958 = vld [vmem:[#allocation2 + $0xcb8] sm:$0xff]
    %v2959 = vld [vmem:[#allocation2 + $0xcc0] sm:$0xff]
    %v2960 = vld [vmem:[#allocation2 + $0xcc8] sm:$0xff]
    %v2961 = vld [vmem:[#allocation2 + $0xcd0] sm:$0xff]
    %v2962 = vld [vmem:[#allocation2 + $0xcd8] sm:$0xff]
    %v2963 = vld [vmem:[#allocation2 + $0xce0] sm:$0xff]
    %v2964 = vld [vmem:[#allocation2 + $0xce8] sm:$0xff]
    %v2965 = vld [vmem:[#allocation2 + $0xcf0] sm:$0xff]
    %v2966 = vld [vmem:[#allocation2 + $0xcf8] sm:$0xff]
    %v2967 = vld [vmem:[#allocation2 + $0xd00] sm:$0xff]
    %v2968 = vld [vmem:[#allocation2 + $0xd08] sm:$0xff]
    %v2969 = vld [vmem:[#allocation2 + $0xd10] sm:$0xff]
    %v2970 = vld [vmem:[#allocation2 + $0xd18] sm:$0xff]
    %v2971 = vld [vmem:[#allocation2 + $0xd20] sm:$0xff]
    %v2972 = vld [vmem:[#allocation2 + $0xd28] sm:$0xff]
    %v2973 = vld [vmem:[#allocation2 + $0xd30] sm:$0xff]
    %v2974 = vld [vmem:[#allocation2 + $0xd38] sm:$0xff]
    %v2975 = vld [vmem:[#allocation2 + $0xd40] sm:$0xff]
    %v2976 = vld [vmem:[#allocation2 + $0xd48] sm:$0xff]
    %v2977 = vld [vmem:[#allocation2 + $0xd50] sm:$0xff]
    %v2978 = vld [vmem:[#allocation2 + $0xd58] sm:$0xff]
    %v2979 = vld [vmem:[#allocation2 + $0xd60] sm:$0xff]
    %v2980 = vld [vmem:[#allocation2 + $0xd68] sm:$0xff]
    %v2981 = vld [vmem:[#allocation2 + $0xd70] sm:$0xff]
    %v2982 = vld [vmem:[#allocation2 + $0xd78] sm:$0xff]
    %v2983 = vld [vmem:[#allocation2 + $0xd80] sm:$0xff]
    %v2984 = vld [vmem:[#allocation2 + $0xd88] sm:$0xff]
    %v2985 = vld [vmem:[#allocation2 + $0xd90] sm:$0xff]
    %v2986 = vld [vmem:[#allocation2 + $0xd98] sm:$0xff]
    %v2987 = vld [vmem:[#allocation2 + $0xda0] sm:$0xff]
    %v2988 = vld [vmem:[#allocation2 + $0xda8] sm:$0xff]
    %v2989 = vld [vmem:[#allocation2 + $0xdb0] sm:$0xff]
    %v2990 = vld [vmem:[#allocation2 + $0xdb8] sm:$0xff]
    %v2991 = vld [vmem:[#allocation2 + $0xdc0] sm:$0xff]
    %v2992 = vld [vmem:[#allocation2 + $0xdc8] sm:$0xff]
    %v2993 = vld [vmem:[#allocation2 + $0xdd0] sm:$0xff]
    %v2994 = vld [vmem:[#allocation2 + $0xdd8] sm:$0xff]
    %v2995 = vld [vmem:[#allocation2 + $0xde0] sm:$0xff]
    %v2996 = vld [vmem:[#allocation2 + $0xde8] sm:$0xff]
    %v2997 = vld [vmem:[#allocation2 + $0xdf0] sm:$0xff]
    %v2998 = vld [vmem:[#allocation2 + $0xdf8] sm:$0xff]
    %v2999 = vld [vmem:[#allocation2 + $0xe00] sm:$0xff]
    %v3000 = vld [vmem:[#allocation2 + $0xe08] sm:$0xff]
    %v3001 = vld [vmem:[#allocation2 + $0xe10] sm:$0xff]
    %v3002 = vld [vmem:[#allocation2 + $0xe18] sm:$0xff]
    %v3003 = vld [vmem:[#allocation2 + $0xe20] sm:$0xff]
    %v3004 = vld [vmem:[#allocation2 + $0xe28] sm:$0xff]
    %v3005 = vld [vmem:[#allocation2 + $0xe30] sm:$0xff]
    %v3006 = vld [vmem:[#allocation2 + $0xe38] sm:$0xff]
    %v3007 = vld [vmem:[#allocation2 + $0xe40] sm:$0xff]
    %v3008 = vld [vmem:[#allocation2 + $0xe48] sm:$0xff]
    %v3009 = vld [vmem:[#allocation2 + $0xe50] sm:$0xff]
    %v3010 = vld [vmem:[#allocation2 + $0xe58] sm:$0xff]
    %v3011 = vld [vmem:[#allocation2 + $0xe60] sm:$0xff]
    %v3012 = vld [vmem:[#allocation2 + $0xe68] sm:$0xff]
    %v3013 = vld [vmem:[#allocation2 + $0xe70] sm:$0xff]
    %v3014 = vld [vmem:[#allocation2 + $0xe78] sm:$0xff]
    %v3015 = vld [vmem:[#allocation2 + $0xe80] sm:$0xff]
    %v3016 = vld [vmem:[#allocation2 + $0xe88] sm:$0xff]
    %v3017 = vld [vmem:[#allocation2 + $0xe90] sm:$0xff]
    %v3018 = vld [vmem:[#allocation2 + $0xe98] sm:$0xff]
    %v3019 = vld [vmem:[#allocation2 + $0xea0] sm:$0xff]
    %v3020 = vld [vmem:[#allocation2 + $0xea8] sm:$0xff]
    %v3021 = vld [vmem:[#allocation2 + $0xeb0] sm:$0xff]
    %v3022 = vld [vmem:[#allocation2 + $0xeb8] sm:$0xff]
    %v3023 = vld [vmem:[#allocation2 + $0xec0] sm:$0xff]
    %v3024 = vld [vmem:[#allocation2 + $0xec8] sm:$0xff]
    %v3025 = vld [vmem:[#allocation2 + $0xed0] sm:$0xff]
    %v3026 = vld [vmem:[#allocation2 + $0xed8] sm:$0xff]
    %v3027 = vld [vmem:[#allocation2 + $0xee0] sm:$0xff]
    %v3028 = vld [vmem:[#allocation2 + $0xee8] sm:$0xff]
    %v3029 = vld [vmem:[#allocation2 + $0xef0] sm:$0xff]
    %v3030 = vld [vmem:[#allocation2 + $0xef8] sm:$0xff]
    %v3031 = vld [vmem:[#allocation2 + $0xf00] sm:$0xff]
    %v3032 = vld [vmem:[#allocation2 + $0xf08] sm:$0xff]
    %v3033 = vld [vmem:[#allocation2 + $0xf10] sm:$0xff]
    %v3034 = vld [vmem:[#allocation2 + $0xf18] sm:$0xff]
    %v3035 = vld [vmem:[#allocation2 + $0xf20] sm:$0xff]
    %v3036 = vld [vmem:[#allocation2 + $0xf28] sm:$0xff]
    %v3037 = vld [vmem:[#allocation2 + $0xf30] sm:$0xff]
    %v3038 = vld [vmem:[#allocation2 + $0xf38] sm:$0xff]
    %v3039 = vld [vmem:[#allocation2 + $0xf40] sm:$0xff]
    %v3040 = vld [vmem:[#allocation2 + $0xf48] sm:$0xff]
    %v3041 = vld [vmem:[#allocation2 + $0xf50] sm:$0xff]
    %v3042 = vld [vmem:[#allocation2 + $0xf58] sm:$0xff]
    %v3043 = vld [vmem:[#allocation2 + $0xf60] sm:$0xff]
    %v3044 = vld [vmem:[#allocation2 + $0xf68] sm:$0xff]
    %v3045 = vld [vmem:[#allocation2 + $0xf70] sm:$0xff]
    %v3046 = vld [vmem:[#allocation2 + $0xf78] sm:$0xff]
    %v3047 = vld [vmem:[#allocation2 + $0xf80] sm:$0xff]
    %v3048 = vld [vmem:[#allocation2 + $0xf88] sm:$0xff]
    %v3049 = vld [vmem:[#allocation2 + $0xf90] sm:$0xff]
    %v3050 = vld [vmem:[#allocation2 + $0xf98] sm:$0xff]
    %v3051 = vld [vmem:[#allocation2 + $0xfa0] sm:$0xff]
    %v3052 = vld [vmem:[#allocation2 + $0xfa8] sm:$0xff]
    %v3053 = vld [vmem:[#allocation2 + $0xfb0] sm:$0xff]
    %v3054 = vld [vmem:[#allocation2 + $0xfb8] sm:$0xff]
    %v3055 = vld [vmem:[#allocation2 + $0xfc0] sm:$0xff]
    %v3056 = vld [vmem:[#allocation2 + $0xfc8] sm:$0xff]
    %v3057 = vld [vmem:[#allocation2 + $0xfd0] sm:$0xff]
    %v3058 = vld [vmem:[#allocation2 + $0xfd8] sm:$0xff]
    %v3059 = vld [vmem:[#allocation2 + $0xfe0] sm:$0xff]
    %v3060 = vld [vmem:[#allocation2 + $0xfe8] sm:$0xff]
    %v3061 = vld [vmem:[#allocation2 + $0xff0] sm:$0xff]
    %v3062 = vld [vmem:[#allocation2 + $0xff8] sm:$0xff]
    %v3063 = vld [vmem:[#allocation11] sm:$0xff]
    %v3065 = vlaneseq
    %v3066 = vshrl.u32 %v3065, 7
    %v3067 = vsub.s32 0, %v3066
    %v3068 = vrot.slane %v3063, %v3067
    %v3069 = vlaneseq
    %v3070 = vshrl.u32 %v3069, 7
    %v3071 = vsub.s32 1, %v3070
    %v3072 = vrot.slane %v3063, %v3071
    %v3073 = vlaneseq
    %v3074 = vshrl.u32 %v3073, 7
    %v3075 = vsub.s32 2, %v3074
    %v3076 = vrot.slane %v3063, %v3075
    %v3077 = vlaneseq
    %v3078 = vshrl.u32 %v3077, 7
    %v3079 = vsub.s32 3, %v3078
    %v3080 = vrot.slane %v3063, %v3079
    %v3081 = vlaneseq
    %v3082 = vshrl.u32 %v3081, 7
    %v3083 = vsub.s32 4, %v3082
    %v3084 = vrot.slane %v3063, %v3083
    %v3085 = vlaneseq
    %v3086 = vshrl.u32 %v3085, 7
    %v3087 = vsub.s32 5, %v3086
    %v3088 = vrot.slane %v3063, %v3087
    %v3089 = vlaneseq
    %v3090 = vshrl.u32 %v3089, 7
    %v3091 = vsub.s32 6, %v3090
    %v3092 = vrot.slane %v3063, %v3091
    %v3093 = vlaneseq
    %v3094 = vshrl.u32 %v3093, 7
    %v3095 = vsub.s32 7, %v3094
    %v3096 = vrot.slane %v3063, %v3095
    %v3617 = vunpack.c.l.b16 %v2551
    %v3618 = vunpack.c.h.b16 %v2551
    %v3619 = vunpack.c.l.b16 %v2552
    %v3620 = vunpack.c.h.b16 %v2552
    %v3621 = vunpack.c.l.b16 %v2553
    %v3622 = vunpack.c.h.b16 %v2553
    %v3623 = vunpack.c.l.b16 %v2554
    %v3624 = vunpack.c.h.b16 %v2554
    %v3625 = vunpack.c.l.b16 %v2555
    %v3626 = vunpack.c.h.b16 %v2555
    %v3627 = vunpack.c.l.b16 %v2556
    %v3628 = vunpack.c.h.b16 %v2556
    %v3629 = vunpack.c.l.b16 %v2557
    %v3630 = vunpack.c.h.b16 %v2557
    %v3631 = vunpack.c.l.b16 %v2558
    %v3632 = vunpack.c.h.b16 %v2558
    %v3633 = vunpack.c.l.b16 %v2559
    %v3634 = vunpack.c.h.b16 %v2559
    %v3635 = vunpack.c.l.b16 %v2560
    %v3636 = vunpack.c.h.b16 %v2560
    %v3637 = vunpack.c.l.b16 %v2561
    %v3638 = vunpack.c.h.b16 %v2561
    %v3639 = vunpack.c.l.b16 %v2562
    %v3640 = vunpack.c.h.b16 %v2562
    %v3641 = vunpack.c.l.b16 %v2563
    %v3642 = vunpack.c.h.b16 %v2563
    %v3643 = vunpack.c.l.b16 %v2564
    %v3644 = vunpack.c.h.b16 %v2564
    %v3645 = vunpack.c.l.b16 %v2565
    %v3646 = vunpack.c.h.b16 %v2565
    %v3647 = vunpack.c.l.b16 %v2566
    %v3648 = vunpack.c.h.b16 %v2566
    %v3649 = vunpack.c.l.b16 %v2567
    %v3650 = vunpack.c.h.b16 %v2567
    %v3651 = vunpack.c.l.b16 %v2568
    %v3652 = vunpack.c.h.b16 %v2568
    %v3653 = vunpack.c.l.b16 %v2569
    %v3654 = vunpack.c.h.b16 %v2569
    %v3655 = vunpack.c.l.b16 %v2570
    %v3656 = vunpack.c.h.b16 %v2570
    %v3657 = vunpack.c.l.b16 %v2571
    %v3658 = vunpack.c.h.b16 %v2571
    %v3659 = vunpack.c.l.b16 %v2572
    %v3660 = vunpack.c.h.b16 %v2572
    %v3661 = vunpack.c.l.b16 %v2573
    %v3662 = vunpack.c.h.b16 %v2573
    %v3663 = vunpack.c.l.b16 %v2574
    %v3664 = vunpack.c.h.b16 %v2574
    %v3665 = vunpack.c.l.b16 %v2575
    %v3666 = vunpack.c.h.b16 %v2575
    %v3667 = vunpack.c.l.b16 %v2576
    %v3668 = vunpack.c.h.b16 %v2576
    %v3669 = vunpack.c.l.b16 %v2577
    %v3670 = vunpack.c.h.b16 %v2577
    %v3671 = vunpack.c.l.b16 %v2578
    %v3672 = vunpack.c.h.b16 %v2578
    %v3673 = vunpack.c.l.b16 %v2579
    %v3674 = vunpack.c.h.b16 %v2579
    %v3675 = vunpack.c.l.b16 %v2580
    %v3676 = vunpack.c.h.b16 %v2580
    %v3677 = vunpack.c.l.b16 %v2581
    %v3678 = vunpack.c.h.b16 %v2581
    %v3679 = vunpack.c.l.b16 %v2582
    %v3680 = vunpack.c.h.b16 %v2582
    %v3681 = vunpack.c.l.b16 %v2583
    %v3682 = vunpack.c.h.b16 %v2583
    %v3683 = vunpack.c.l.b16 %v2584
    %v3684 = vunpack.c.h.b16 %v2584
    %v3685 = vunpack.c.l.b16 %v2585
    %v3686 = vunpack.c.h.b16 %v2585
    %v3687 = vunpack.c.l.b16 %v2586
    %v3688 = vunpack.c.h.b16 %v2586
    %v3689 = vunpack.c.l.b16 %v2587
    %v3690 = vunpack.c.h.b16 %v2587
    %v3691 = vunpack.c.l.b16 %v2588
    %v3692 = vunpack.c.h.b16 %v2588
    %v3693 = vunpack.c.l.b16 %v2589
    %v3694 = vunpack.c.h.b16 %v2589
    %v3695 = vunpack.c.l.b16 %v2590
    %v3696 = vunpack.c.h.b16 %v2590
    %v3697 = vunpack.c.l.b16 %v2591
    %v3698 = vunpack.c.h.b16 %v2591
    %v3699 = vunpack.c.l.b16 %v2592
    %v3700 = vunpack.c.h.b16 %v2592
    %v3701 = vunpack.c.l.b16 %v2593
    %v3702 = vunpack.c.h.b16 %v2593
    %v3703 = vunpack.c.l.b16 %v2594
    %v3704 = vunpack.c.h.b16 %v2594
    %v3705 = vunpack.c.l.b16 %v2595
    %v3706 = vunpack.c.h.b16 %v2595
    %v3707 = vunpack.c.l.b16 %v2596
    %v3708 = vunpack.c.h.b16 %v2596
    %v3709 = vunpack.c.l.b16 %v2597
    %v3710 = vunpack.c.h.b16 %v2597
    %v3711 = vunpack.c.l.b16 %v2598
    %v3712 = vunpack.c.h.b16 %v2598
    %v3713 = vunpack.c.l.b16 %v2599
    %v3714 = vunpack.c.h.b16 %v2599
    %v3715 = vunpack.c.l.b16 %v2600
    %v3716 = vunpack.c.h.b16 %v2600
    %v3717 = vunpack.c.l.b16 %v2601
    %v3718 = vunpack.c.h.b16 %v2601
    %v3719 = vunpack.c.l.b16 %v2602
    %v3720 = vunpack.c.h.b16 %v2602
    %v3721 = vunpack.c.l.b16 %v2603
    %v3722 = vunpack.c.h.b16 %v2603
    %v3723 = vunpack.c.l.b16 %v2604
    %v3724 = vunpack.c.h.b16 %v2604
    %v3725 = vunpack.c.l.b16 %v2605
    %v3726 = vunpack.c.h.b16 %v2605
    %v3727 = vunpack.c.l.b16 %v2606
    %v3728 = vunpack.c.h.b16 %v2606
    %v3729 = vunpack.c.l.b16 %v2607
    %v3730 = vunpack.c.h.b16 %v2607
    %v3731 = vunpack.c.l.b16 %v2608
    %v3732 = vunpack.c.h.b16 %v2608
    %v3733 = vunpack.c.l.b16 %v2609
    %v3734 = vunpack.c.h.b16 %v2609
    %v3735 = vunpack.c.l.b16 %v2610
    %v3736 = vunpack.c.h.b16 %v2610
    %v3737 = vunpack.c.l.b16 %v2611
    %v3738 = vunpack.c.h.b16 %v2611
    %v3739 = vunpack.c.l.b16 %v2612
    %v3740 = vunpack.c.h.b16 %v2612
    %v3741 = vunpack.c.l.b16 %v2613
    %v3742 = vunpack.c.h.b16 %v2613
    %v3743 = vunpack.c.l.b16 %v2614
    %v3744 = vunpack.c.h.b16 %v2614
    %v3745 = vunpack.c.l.b16 %v2615
    %v3746 = vunpack.c.h.b16 %v2615
    %v3747 = vunpack.c.l.b16 %v2616
    %v3748 = vunpack.c.h.b16 %v2616
    %v3749 = vunpack.c.l.b16 %v2617
    %v3750 = vunpack.c.h.b16 %v2617
    %v3751 = vunpack.c.l.b16 %v2618
    %v3752 = vunpack.c.h.b16 %v2618
    %v3753 = vunpack.c.l.b16 %v2619
    %v3754 = vunpack.c.h.b16 %v2619
    %v3755 = vunpack.c.l.b16 %v2620
    %v3756 = vunpack.c.h.b16 %v2620
    %v3757 = vunpack.c.l.b16 %v2621
    %v3758 = vunpack.c.h.b16 %v2621
    %v3759 = vunpack.c.l.b16 %v2622
    %v3760 = vunpack.c.h.b16 %v2622
    %v3761 = vunpack.c.l.b16 %v2623
    %v3762 = vunpack.c.h.b16 %v2623
    %v3763 = vunpack.c.l.b16 %v2624
    %v3764 = vunpack.c.h.b16 %v2624
    %v3765 = vunpack.c.l.b16 %v2625
    %v3766 = vunpack.c.h.b16 %v2625
    %v3767 = vunpack.c.l.b16 %v2626
    %v3768 = vunpack.c.h.b16 %v2626
    %v3769 = vunpack.c.l.b16 %v2627
    %v3770 = vunpack.c.h.b16 %v2627
    %v3771 = vunpack.c.l.b16 %v2628
    %v3772 = vunpack.c.h.b16 %v2628
    %v3773 = vunpack.c.l.b16 %v2629
    %v3774 = vunpack.c.h.b16 %v2629
    %v3775 = vunpack.c.l.b16 %v2630
    %v3776 = vunpack.c.h.b16 %v2630
    %v3777 = vunpack.c.l.b16 %v2631
    %v3778 = vunpack.c.h.b16 %v2631
    %v3779 = vunpack.c.l.b16 %v2632
    %v3780 = vunpack.c.h.b16 %v2632
    %v3781 = vunpack.c.l.b16 %v2633
    %v3782 = vunpack.c.h.b16 %v2633
    %v3783 = vunpack.c.l.b16 %v2634
    %v3784 = vunpack.c.h.b16 %v2634
    %v3785 = vunpack.c.l.b16 %v2635
    %v3786 = vunpack.c.h.b16 %v2635
    %v3787 = vunpack.c.l.b16 %v2636
    %v3788 = vunpack.c.h.b16 %v2636
    %v3789 = vunpack.c.l.b16 %v2637
    %v3790 = vunpack.c.h.b16 %v2637
    %v3791 = vunpack.c.l.b16 %v2638
    %v3792 = vunpack.c.h.b16 %v2638
    %v3793 = vunpack.c.l.b16 %v2639
    %v3794 = vunpack.c.h.b16 %v2639
    %v3795 = vunpack.c.l.b16 %v2640
    %v3796 = vunpack.c.h.b16 %v2640
    %v3797 = vunpack.c.l.b16 %v2641
    %v3798 = vunpack.c.h.b16 %v2641
    %v3799 = vunpack.c.l.b16 %v2642
    %v3800 = vunpack.c.h.b16 %v2642
    %v3801 = vunpack.c.l.b16 %v2643
    %v3802 = vunpack.c.h.b16 %v2643
    %v3803 = vunpack.c.l.b16 %v2644
    %v3804 = vunpack.c.h.b16 %v2644
    %v3805 = vunpack.c.l.b16 %v2645
    %v3806 = vunpack.c.h.b16 %v2645
    %v3807 = vunpack.c.l.b16 %v2646
    %v3808 = vunpack.c.h.b16 %v2646
    %v3809 = vunpack.c.l.b16 %v2647
    %v3810 = vunpack.c.h.b16 %v2647
    %v3811 = vunpack.c.l.b16 %v2648
    %v3812 = vunpack.c.h.b16 %v2648
    %v3813 = vunpack.c.l.b16 %v2649
    %v3814 = vunpack.c.h.b16 %v2649
    %v3815 = vunpack.c.l.b16 %v2650
    %v3816 = vunpack.c.h.b16 %v2650
    %v3817 = vunpack.c.l.b16 %v2651
    %v3818 = vunpack.c.h.b16 %v2651
    %v3819 = vunpack.c.l.b16 %v2652
    %v3820 = vunpack.c.h.b16 %v2652
    %v3821 = vunpack.c.l.b16 %v2653
    %v3822 = vunpack.c.h.b16 %v2653
    %v3823 = vunpack.c.l.b16 %v2654
    %v3824 = vunpack.c.h.b16 %v2654
    %v3825 = vunpack.c.l.b16 %v2655
    %v3826 = vunpack.c.h.b16 %v2655
    %v3827 = vunpack.c.l.b16 %v2656
    %v3828 = vunpack.c.h.b16 %v2656
    %v3829 = vunpack.c.l.b16 %v2657
    %v3830 = vunpack.c.h.b16 %v2657
    %v3831 = vunpack.c.l.b16 %v2658
    %v3832 = vunpack.c.h.b16 %v2658
    %v3833 = vunpack.c.l.b16 %v2659
    %v3834 = vunpack.c.h.b16 %v2659
    %v3835 = vunpack.c.l.b16 %v2660
    %v3836 = vunpack.c.h.b16 %v2660
    %v3837 = vunpack.c.l.b16 %v2661
    %v3838 = vunpack.c.h.b16 %v2661
    %v3839 = vunpack.c.l.b16 %v2662
    %v3840 = vunpack.c.h.b16 %v2662
    %v3841 = vunpack.c.l.b16 %v2663
    %v3842 = vunpack.c.h.b16 %v2663
    %v3843 = vunpack.c.l.b16 %v2664
    %v3844 = vunpack.c.h.b16 %v2664
    %v3845 = vunpack.c.l.b16 %v2665
    %v3846 = vunpack.c.h.b16 %v2665
    %v3847 = vunpack.c.l.b16 %v2666
    %v3848 = vunpack.c.h.b16 %v2666
    %v3849 = vunpack.c.l.b16 %v2667
    %v3850 = vunpack.c.h.b16 %v2667
    %v3851 = vunpack.c.l.b16 %v2668
    %v3852 = vunpack.c.h.b16 %v2668
    %v3853 = vunpack.c.l.b16 %v2669
    %v3854 = vunpack.c.h.b16 %v2669
    %v3855 = vunpack.c.l.b16 %v2670
    %v3856 = vunpack.c.h.b16 %v2670
    %v3857 = vunpack.c.l.b16 %v2671
    %v3858 = vunpack.c.h.b16 %v2671
    %v3859 = vunpack.c.l.b16 %v2672
    %v3860 = vunpack.c.h.b16 %v2672
    %v3861 = vunpack.c.l.b16 %v2673
    %v3862 = vunpack.c.h.b16 %v2673
    %v3863 = vunpack.c.l.b16 %v2674
    %v3864 = vunpack.c.h.b16 %v2674
    %v3865 = vunpack.c.l.b16 %v2675
    %v3866 = vunpack.c.h.b16 %v2675
    %v3867 = vunpack.c.l.b16 %v2676
    %v3868 = vunpack.c.h.b16 %v2676
    %v3869 = vunpack.c.l.b16 %v2677
    %v3870 = vunpack.c.h.b16 %v2677
    %v3871 = vunpack.c.l.b16 %v2678
    %v3872 = vunpack.c.h.b16 %v2678
    %v3873 = vunpack.c.l.b16 %v2679
    %v3874 = vunpack.c.h.b16 %v2679
    %v3875 = vunpack.c.l.b16 %v2680
    %v3876 = vunpack.c.h.b16 %v2680
    %v3877 = vunpack.c.l.b16 %v2681
    %v3878 = vunpack.c.h.b16 %v2681
    %v3879 = vunpack.c.l.b16 %v2682
    %v3880 = vunpack.c.h.b16 %v2682
    %v3881 = vunpack.c.l.b16 %v2683
    %v3882 = vunpack.c.h.b16 %v2683
    %v3883 = vunpack.c.l.b16 %v2684
    %v3884 = vunpack.c.h.b16 %v2684
    %v3885 = vunpack.c.l.b16 %v2685
    %v3886 = vunpack.c.h.b16 %v2685
    %v3887 = vunpack.c.l.b16 %v2686
    %v3888 = vunpack.c.h.b16 %v2686
    %v3889 = vunpack.c.l.b16 %v2687
    %v3890 = vunpack.c.h.b16 %v2687
    %v3891 = vunpack.c.l.b16 %v2688
    %v3892 = vunpack.c.h.b16 %v2688
    %v3893 = vunpack.c.l.b16 %v2689
    %v3894 = vunpack.c.h.b16 %v2689
    %v3895 = vunpack.c.l.b16 %v2690
    %v3896 = vunpack.c.h.b16 %v2690
    %v3897 = vunpack.c.l.b16 %v2691
    %v3898 = vunpack.c.h.b16 %v2691
    %v3899 = vunpack.c.l.b16 %v2692
    %v3900 = vunpack.c.h.b16 %v2692
    %v3901 = vunpack.c.l.b16 %v2693
    %v3902 = vunpack.c.h.b16 %v2693
    %v3903 = vunpack.c.l.b16 %v2694
    %v3904 = vunpack.c.h.b16 %v2694
    %v3905 = vunpack.c.l.b16 %v2695
    %v3906 = vunpack.c.h.b16 %v2695
    %v3907 = vunpack.c.l.b16 %v2696
    %v3908 = vunpack.c.h.b16 %v2696
    %v3909 = vunpack.c.l.b16 %v2697
    %v3910 = vunpack.c.h.b16 %v2697
    %v3911 = vunpack.c.l.b16 %v2698
    %v3912 = vunpack.c.h.b16 %v2698
    %v3913 = vunpack.c.l.b16 %v2699
    %v3914 = vunpack.c.h.b16 %v2699
    %v3915 = vunpack.c.l.b16 %v2700
    %v3916 = vunpack.c.h.b16 %v2700
    %v3917 = vunpack.c.l.b16 %v2701
    %v3918 = vunpack.c.h.b16 %v2701
    %v3919 = vunpack.c.l.b16 %v2702
    %v3920 = vunpack.c.h.b16 %v2702
    %v3921 = vunpack.c.l.b16 %v2703
    %v3922 = vunpack.c.h.b16 %v2703
    %v3923 = vunpack.c.l.b16 %v2704
    %v3924 = vunpack.c.h.b16 %v2704
    %v3925 = vunpack.c.l.b16 %v2705
    %v3926 = vunpack.c.h.b16 %v2705
    %v3927 = vunpack.c.l.b16 %v2706
    %v3928 = vunpack.c.h.b16 %v2706
    %v3929 = vunpack.c.l.b16 %v2707
    %v3930 = vunpack.c.h.b16 %v2707
    %v3931 = vunpack.c.l.b16 %v2708
    %v3932 = vunpack.c.h.b16 %v2708
    %v3933 = vunpack.c.l.b16 %v2709
    %v3934 = vunpack.c.h.b16 %v2709
    %v3935 = vunpack.c.l.b16 %v2710
    %v3936 = vunpack.c.h.b16 %v2710
    %v3937 = vunpack.c.l.b16 %v2711
    %v3938 = vunpack.c.h.b16 %v2711
    %v3939 = vunpack.c.l.b16 %v2712
    %v3940 = vunpack.c.h.b16 %v2712
    %v3941 = vunpack.c.l.b16 %v2713
    %v3942 = vunpack.c.h.b16 %v2713
    %v3943 = vunpack.c.l.b16 %v2714
    %v3944 = vunpack.c.h.b16 %v2714
    %v3945 = vunpack.c.l.b16 %v2715
    %v3946 = vunpack.c.h.b16 %v2715
    %v3947 = vunpack.c.l.b16 %v2716
    %v3948 = vunpack.c.h.b16 %v2716
    %v3949 = vunpack.c.l.b16 %v2717
    %v3950 = vunpack.c.h.b16 %v2717
    %v3951 = vunpack.c.l.b16 %v2718
    %v3952 = vunpack.c.h.b16 %v2718
    %v3953 = vunpack.c.l.b16 %v2719
    %v3954 = vunpack.c.h.b16 %v2719
    %v3955 = vunpack.c.l.b16 %v2720
    %v3956 = vunpack.c.h.b16 %v2720
    %v3957 = vunpack.c.l.b16 %v2721
    %v3958 = vunpack.c.h.b16 %v2721
    %v3959 = vunpack.c.l.b16 %v2722
    %v3960 = vunpack.c.h.b16 %v2722
    %v3961 = vunpack.c.l.b16 %v2723
    %v3962 = vunpack.c.h.b16 %v2723
    %v3963 = vunpack.c.l.b16 %v2724
    %v3964 = vunpack.c.h.b16 %v2724
    %v3965 = vunpack.c.l.b16 %v2725
    %v3966 = vunpack.c.h.b16 %v2725
    %v3967 = vunpack.c.l.b16 %v2726
    %v3968 = vunpack.c.h.b16 %v2726
    %v3969 = vunpack.c.l.b16 %v2727
    %v3970 = vunpack.c.h.b16 %v2727
    %v3971 = vunpack.c.l.b16 %v2728
    %v3972 = vunpack.c.h.b16 %v2728
    %v3973 = vunpack.c.l.b16 %v2729
    %v3974 = vunpack.c.h.b16 %v2729
    %v3975 = vunpack.c.l.b16 %v2730
    %v3976 = vunpack.c.h.b16 %v2730
    %v3977 = vunpack.c.l.b16 %v2731
    %v3978 = vunpack.c.h.b16 %v2731
    %v3979 = vunpack.c.l.b16 %v2732
    %v3980 = vunpack.c.h.b16 %v2732
    %v3981 = vunpack.c.l.b16 %v2733
    %v3982 = vunpack.c.h.b16 %v2733
    %v3983 = vunpack.c.l.b16 %v2734
    %v3984 = vunpack.c.h.b16 %v2734
    %v3985 = vunpack.c.l.b16 %v2735
    %v3986 = vunpack.c.h.b16 %v2735
    %v3987 = vunpack.c.l.b16 %v2736
    %v3988 = vunpack.c.h.b16 %v2736
    %v3989 = vunpack.c.l.b16 %v2737
    %v3990 = vunpack.c.h.b16 %v2737
    %v3991 = vunpack.c.l.b16 %v2738
    %v3992 = vunpack.c.h.b16 %v2738
    %v3993 = vunpack.c.l.b16 %v2739
    %v3994 = vunpack.c.h.b16 %v2739
    %v3995 = vunpack.c.l.b16 %v2740
    %v3996 = vunpack.c.h.b16 %v2740
    %v3997 = vunpack.c.l.b16 %v2741
    %v3998 = vunpack.c.h.b16 %v2741
    %v3999 = vunpack.c.l.b16 %v2742
    %v4000 = vunpack.c.h.b16 %v2742
    %v4001 = vunpack.c.l.b16 %v2743
    %v4002 = vunpack.c.h.b16 %v2743
    %v4003 = vunpack.c.l.b16 %v2744
    %v4004 = vunpack.c.h.b16 %v2744
    %v4005 = vunpack.c.l.b16 %v2745
    %v4006 = vunpack.c.h.b16 %v2745
    %v4007 = vunpack.c.l.b16 %v2746
    %v4008 = vunpack.c.h.b16 %v2746
    %v4009 = vunpack.c.l.b16 %v2747
    %v4010 = vunpack.c.h.b16 %v2747
    %v4011 = vunpack.c.l.b16 %v2748
    %v4012 = vunpack.c.h.b16 %v2748
    %v4013 = vunpack.c.l.b16 %v2749
    %v4014 = vunpack.c.h.b16 %v2749
    %v4015 = vunpack.c.l.b16 %v2750
    %v4016 = vunpack.c.h.b16 %v2750
    %v4017 = vunpack.c.l.b16 %v2751
    %v4018 = vunpack.c.h.b16 %v2751
    %v4019 = vunpack.c.l.b16 %v2752
    %v4020 = vunpack.c.h.b16 %v2752
    %v4021 = vunpack.c.l.b16 %v2753
    %v4022 = vunpack.c.h.b16 %v2753
    %v4023 = vunpack.c.l.b16 %v2754
    %v4024 = vunpack.c.h.b16 %v2754
    %v4025 = vunpack.c.l.b16 %v2755
    %v4026 = vunpack.c.h.b16 %v2755
    %v4027 = vunpack.c.l.b16 %v2756
    %v4028 = vunpack.c.h.b16 %v2756
    %v4029 = vunpack.c.l.b16 %v2757
    %v4030 = vunpack.c.h.b16 %v2757
    %v4031 = vunpack.c.l.b16 %v2758
    %v4032 = vunpack.c.h.b16 %v2758
    %v4033 = vunpack.c.l.b16 %v2759
    %v4034 = vunpack.c.h.b16 %v2759
    %v4035 = vunpack.c.l.b16 %v2760
    %v4036 = vunpack.c.h.b16 %v2760
    %v4037 = vunpack.c.l.b16 %v2761
    %v4038 = vunpack.c.h.b16 %v2761
    %v4039 = vunpack.c.l.b16 %v2762
    %v4040 = vunpack.c.h.b16 %v2762
    %v4041 = vunpack.c.l.b16 %v2763
    %v4042 = vunpack.c.h.b16 %v2763
    %v4043 = vunpack.c.l.b16 %v2764
    %v4044 = vunpack.c.h.b16 %v2764
    %v4045 = vunpack.c.l.b16 %v2765
    %v4046 = vunpack.c.h.b16 %v2765
    %v4047 = vunpack.c.l.b16 %v2766
    %v4048 = vunpack.c.h.b16 %v2766
    %v4049 = vunpack.c.l.b16 %v2767
    %v4050 = vunpack.c.h.b16 %v2767
    %v4051 = vunpack.c.l.b16 %v2768
    %v4052 = vunpack.c.h.b16 %v2768
    %v4053 = vunpack.c.l.b16 %v2769
    %v4054 = vunpack.c.h.b16 %v2769
    %v4055 = vunpack.c.l.b16 %v2770
    %v4056 = vunpack.c.h.b16 %v2770
    %v4057 = vunpack.c.l.b16 %v2771
    %v4058 = vunpack.c.h.b16 %v2771
    %v4059 = vunpack.c.l.b16 %v2772
    %v4060 = vunpack.c.h.b16 %v2772
    %v4061 = vunpack.c.l.b16 %v2773
    %v4062 = vunpack.c.h.b16 %v2773
    %v4063 = vunpack.c.l.b16 %v2774
    %v4064 = vunpack.c.h.b16 %v2774
    %v4065 = vunpack.c.l.b16 %v2775
    %v4066 = vunpack.c.h.b16 %v2775
    %v4067 = vunpack.c.l.b16 %v2776
    %v4068 = vunpack.c.h.b16 %v2776
    %v4069 = vunpack.c.l.b16 %v2777
    %v4070 = vunpack.c.h.b16 %v2777
    %v4071 = vunpack.c.l.b16 %v2778
    %v4072 = vunpack.c.h.b16 %v2778
    %v4073 = vunpack.c.l.b16 %v2779
    %v4074 = vunpack.c.h.b16 %v2779
    %v4075 = vunpack.c.l.b16 %v2780
    %v4076 = vunpack.c.h.b16 %v2780
    %v4077 = vunpack.c.l.b16 %v2781
    %v4078 = vunpack.c.h.b16 %v2781
    %v4079 = vunpack.c.l.b16 %v2782
    %v4080 = vunpack.c.h.b16 %v2782
    %v4081 = vunpack.c.l.b16 %v2783
    %v4082 = vunpack.c.h.b16 %v2783
    %v4083 = vunpack.c.l.b16 %v2784
    %v4084 = vunpack.c.h.b16 %v2784
    %v4085 = vunpack.c.l.b16 %v2785
    %v4086 = vunpack.c.h.b16 %v2785
    %v4087 = vunpack.c.l.b16 %v2786
    %v4088 = vunpack.c.h.b16 %v2786
    %v4089 = vunpack.c.l.b16 %v2787
    %v4090 = vunpack.c.h.b16 %v2787
    %v4091 = vunpack.c.l.b16 %v2788
    %v4092 = vunpack.c.h.b16 %v2788
    %v4093 = vunpack.c.l.b16 %v2789
    %v4094 = vunpack.c.h.b16 %v2789
    %v4095 = vunpack.c.l.b16 %v2790
    %v4096 = vunpack.c.h.b16 %v2790
    %v4097 = vunpack.c.l.b16 %v2791
    %v4098 = vunpack.c.h.b16 %v2791
    %v4099 = vunpack.c.l.b16 %v2792
    %v4100 = vunpack.c.h.b16 %v2792
    %v4101 = vunpack.c.l.b16 %v2793
    %v4102 = vunpack.c.h.b16 %v2793
    %v4103 = vunpack.c.l.b16 %v2794
    %v4104 = vunpack.c.h.b16 %v2794
    %v4105 = vunpack.c.l.b16 %v2795
    %v4106 = vunpack.c.h.b16 %v2795
    %v4107 = vunpack.c.l.b16 %v2796
    %v4108 = vunpack.c.h.b16 %v2796
    %v4109 = vunpack.c.l.b16 %v2797
    %v4110 = vunpack.c.h.b16 %v2797
    %v4111 = vunpack.c.l.b16 %v2798
    %v4112 = vunpack.c.h.b16 %v2798
    %v4113 = vunpack.c.l.b16 %v2799
    %v4114 = vunpack.c.h.b16 %v2799
    %v4115 = vunpack.c.l.b16 %v2800
    %v4116 = vunpack.c.h.b16 %v2800
    %v4117 = vunpack.c.l.b16 %v2801
    %v4118 = vunpack.c.h.b16 %v2801
    %v4119 = vunpack.c.l.b16 %v2802
    %v4120 = vunpack.c.h.b16 %v2802
    %v4121 = vunpack.c.l.b16 %v2803
    %v4122 = vunpack.c.h.b16 %v2803
    %v4123 = vunpack.c.l.b16 %v2804
    %v4124 = vunpack.c.h.b16 %v2804
    %v4125 = vunpack.c.l.b16 %v2805
    %v4126 = vunpack.c.h.b16 %v2805
    %v4127 = vunpack.c.l.b16 %v2806
    %v4128 = vunpack.c.h.b16 %v2806
    %v4129 = vunpack.c.l.b16 %v2807
    %v4130 = vunpack.c.h.b16 %v2807
    %v4131 = vunpack.c.l.b16 %v2808
    %v4132 = vunpack.c.h.b16 %v2808
    %v4133 = vunpack.c.l.b16 %v2809
    %v4134 = vunpack.c.h.b16 %v2809
    %v4135 = vunpack.c.l.b16 %v2810
    %v4136 = vunpack.c.h.b16 %v2810
    %v4137 = vunpack.c.l.b16 %v2811
    %v4138 = vunpack.c.h.b16 %v2811
    %v4139 = vunpack.c.l.b16 %v2812
    %v4140 = vunpack.c.h.b16 %v2812
    %v4141 = vunpack.c.l.b16 %v2813
    %v4142 = vunpack.c.h.b16 %v2813
    %v4143 = vunpack.c.l.b16 %v2814
    %v4144 = vunpack.c.h.b16 %v2814
    %v4145 = vunpack.c.l.b16 %v2815
    %v4146 = vunpack.c.h.b16 %v2815
    %v4147 = vunpack.c.l.b16 %v2816
    %v4148 = vunpack.c.h.b16 %v2816
    %v4149 = vunpack.c.l.b16 %v2817
    %v4150 = vunpack.c.h.b16 %v2817
    %v4151 = vunpack.c.l.b16 %v2818
    %v4152 = vunpack.c.h.b16 %v2818
    %v4153 = vunpack.c.l.b16 %v2819
    %v4154 = vunpack.c.h.b16 %v2819
    %v4155 = vunpack.c.l.b16 %v2820
    %v4156 = vunpack.c.h.b16 %v2820
    %v4157 = vunpack.c.l.b16 %v2821
    %v4158 = vunpack.c.h.b16 %v2821
    %v4159 = vunpack.c.l.b16 %v2822
    %v4160 = vunpack.c.h.b16 %v2822
    %v4161 = vunpack.c.l.b16 %v2823
    %v4162 = vunpack.c.h.b16 %v2823
    %v4163 = vunpack.c.l.b16 %v2824
    %v4164 = vunpack.c.h.b16 %v2824
    %v4165 = vunpack.c.l.b16 %v2825
    %v4166 = vunpack.c.h.b16 %v2825
    %v4167 = vunpack.c.l.b16 %v2826
    %v4168 = vunpack.c.h.b16 %v2826
    %v4169 = vunpack.c.l.b16 %v2827
    %v4170 = vunpack.c.h.b16 %v2827
    %v4171 = vunpack.c.l.b16 %v2828
    %v4172 = vunpack.c.h.b16 %v2828
    %v4173 = vunpack.c.l.b16 %v2829
    %v4174 = vunpack.c.h.b16 %v2829
    %v4175 = vunpack.c.l.b16 %v2830
    %v4176 = vunpack.c.h.b16 %v2830
    %v4177 = vunpack.c.l.b16 %v2831
    %v4178 = vunpack.c.h.b16 %v2831
    %v4179 = vunpack.c.l.b16 %v2832
    %v4180 = vunpack.c.h.b16 %v2832
    %v4181 = vunpack.c.l.b16 %v2833
    %v4182 = vunpack.c.h.b16 %v2833
    %v4183 = vunpack.c.l.b16 %v2834
    %v4184 = vunpack.c.h.b16 %v2834
    %v4185 = vunpack.c.l.b16 %v2835
    %v4186 = vunpack.c.h.b16 %v2835
    %v4187 = vunpack.c.l.b16 %v2836
    %v4188 = vunpack.c.h.b16 %v2836
    %v4189 = vunpack.c.l.b16 %v2837
    %v4190 = vunpack.c.h.b16 %v2837
    %v4191 = vunpack.c.l.b16 %v2838
    %v4192 = vunpack.c.h.b16 %v2838
    %v4193 = vunpack.c.l.b16 %v2839
    %v4194 = vunpack.c.h.b16 %v2839
    %v4195 = vunpack.c.l.b16 %v2840
    %v4196 = vunpack.c.h.b16 %v2840
    %v4197 = vunpack.c.l.b16 %v2841
    %v4198 = vunpack.c.h.b16 %v2841
    %v4199 = vunpack.c.l.b16 %v2842
    %v4200 = vunpack.c.h.b16 %v2842
    %v4201 = vunpack.c.l.b16 %v2843
    %v4202 = vunpack.c.h.b16 %v2843
    %v4203 = vunpack.c.l.b16 %v2844
    %v4204 = vunpack.c.h.b16 %v2844
    %v4205 = vunpack.c.l.b16 %v2845
    %v4206 = vunpack.c.h.b16 %v2845
    %v4207 = vunpack.c.l.b16 %v2846
    %v4208 = vunpack.c.h.b16 %v2846
    %v4209 = vunpack.c.l.b16 %v2847
    %v4210 = vunpack.c.h.b16 %v2847
    %v4211 = vunpack.c.l.b16 %v2848
    %v4212 = vunpack.c.h.b16 %v2848
    %v4213 = vunpack.c.l.b16 %v2849
    %v4214 = vunpack.c.h.b16 %v2849
    %v4215 = vunpack.c.l.b16 %v2850
    %v4216 = vunpack.c.h.b16 %v2850
    %v4217 = vunpack.c.l.b16 %v2851
    %v4218 = vunpack.c.h.b16 %v2851
    %v4219 = vunpack.c.l.b16 %v2852
    %v4220 = vunpack.c.h.b16 %v2852
    %v4221 = vunpack.c.l.b16 %v2853
    %v4222 = vunpack.c.h.b16 %v2853
    %v4223 = vunpack.c.l.b16 %v2854
    %v4224 = vunpack.c.h.b16 %v2854
    %v4225 = vunpack.c.l.b16 %v2855
    %v4226 = vunpack.c.h.b16 %v2855
    %v4227 = vunpack.c.l.b16 %v2856
    %v4228 = vunpack.c.h.b16 %v2856
    %v4229 = vunpack.c.l.b16 %v2857
    %v4230 = vunpack.c.h.b16 %v2857
    %v4231 = vunpack.c.l.b16 %v2858
    %v4232 = vunpack.c.h.b16 %v2858
    %v4233 = vunpack.c.l.b16 %v2859
    %v4234 = vunpack.c.h.b16 %v2859
    %v4235 = vunpack.c.l.b16 %v2860
    %v4236 = vunpack.c.h.b16 %v2860
    %v4237 = vunpack.c.l.b16 %v2861
    %v4238 = vunpack.c.h.b16 %v2861
    %v4239 = vunpack.c.l.b16 %v2862
    %v4240 = vunpack.c.h.b16 %v2862
    %v4241 = vunpack.c.l.b16 %v2863
    %v4242 = vunpack.c.h.b16 %v2863
    %v4243 = vunpack.c.l.b16 %v2864
    %v4244 = vunpack.c.h.b16 %v2864
    %v4245 = vunpack.c.l.b16 %v2865
    %v4246 = vunpack.c.h.b16 %v2865
    %v4247 = vunpack.c.l.b16 %v2866
    %v4248 = vunpack.c.h.b16 %v2866
    %v4249 = vunpack.c.l.b16 %v2867
    %v4250 = vunpack.c.h.b16 %v2867
    %v4251 = vunpack.c.l.b16 %v2868
    %v4252 = vunpack.c.h.b16 %v2868
    %v4253 = vunpack.c.l.b16 %v2869
    %v4254 = vunpack.c.h.b16 %v2869
    %v4255 = vunpack.c.l.b16 %v2870
    %v4256 = vunpack.c.h.b16 %v2870
    %v4257 = vunpack.c.l.b16 %v2871
    %v4258 = vunpack.c.h.b16 %v2871
    %v4259 = vunpack.c.l.b16 %v2872
    %v4260 = vunpack.c.h.b16 %v2872
    %v4261 = vunpack.c.l.b16 %v2873
    %v4262 = vunpack.c.h.b16 %v2873
    %v4263 = vunpack.c.l.b16 %v2874
    %v4264 = vunpack.c.h.b16 %v2874
    %v4265 = vunpack.c.l.b16 %v2875
    %v4266 = vunpack.c.h.b16 %v2875
    %v4267 = vunpack.c.l.b16 %v2876
    %v4268 = vunpack.c.h.b16 %v2876
    %v4269 = vunpack.c.l.b16 %v2877
    %v4270 = vunpack.c.h.b16 %v2877
    %v4271 = vunpack.c.l.b16 %v2878
    %v4272 = vunpack.c.h.b16 %v2878
    %v4273 = vunpack.c.l.b16 %v2879
    %v4274 = vunpack.c.h.b16 %v2879
    %v4275 = vunpack.c.l.b16 %v2880
    %v4276 = vunpack.c.h.b16 %v2880
    %v4277 = vunpack.c.l.b16 %v2881
    %v4278 = vunpack.c.h.b16 %v2881
    %v4279 = vunpack.c.l.b16 %v2882
    %v4280 = vunpack.c.h.b16 %v2882
    %v4281 = vunpack.c.l.b16 %v2883
    %v4282 = vunpack.c.h.b16 %v2883
    %v4283 = vunpack.c.l.b16 %v2884
    %v4284 = vunpack.c.h.b16 %v2884
    %v4285 = vunpack.c.l.b16 %v2885
    %v4286 = vunpack.c.h.b16 %v2885
    %v4287 = vunpack.c.l.b16 %v2886
    %v4288 = vunpack.c.h.b16 %v2886
    %v4289 = vunpack.c.l.b16 %v2887
    %v4290 = vunpack.c.h.b16 %v2887
    %v4291 = vunpack.c.l.b16 %v2888
    %v4292 = vunpack.c.h.b16 %v2888
    %v4293 = vunpack.c.l.b16 %v2889
    %v4294 = vunpack.c.h.b16 %v2889
    %v4295 = vunpack.c.l.b16 %v2890
    %v4296 = vunpack.c.h.b16 %v2890
    %v4297 = vunpack.c.l.b16 %v2891
    %v4298 = vunpack.c.h.b16 %v2891
    %v4299 = vunpack.c.l.b16 %v2892
    %v4300 = vunpack.c.h.b16 %v2892
    %v4301 = vunpack.c.l.b16 %v2893
    %v4302 = vunpack.c.h.b16 %v2893
    %v4303 = vunpack.c.l.b16 %v2894
    %v4304 = vunpack.c.h.b16 %v2894
    %v4305 = vunpack.c.l.b16 %v2895
    %v4306 = vunpack.c.h.b16 %v2895
    %v4307 = vunpack.c.l.b16 %v2896
    %v4308 = vunpack.c.h.b16 %v2896
    %v4309 = vunpack.c.l.b16 %v2897
    %v4310 = vunpack.c.h.b16 %v2897
    %v4311 = vunpack.c.l.b16 %v2898
    %v4312 = vunpack.c.h.b16 %v2898
    %v4313 = vunpack.c.l.b16 %v2899
    %v4314 = vunpack.c.h.b16 %v2899
    %v4315 = vunpack.c.l.b16 %v2900
    %v4316 = vunpack.c.h.b16 %v2900
    %v4317 = vunpack.c.l.b16 %v2901
    %v4318 = vunpack.c.h.b16 %v2901
    %v4319 = vunpack.c.l.b16 %v2902
    %v4320 = vunpack.c.h.b16 %v2902
    %v4321 = vunpack.c.l.b16 %v2903
    %v4322 = vunpack.c.h.b16 %v2903
    %v4323 = vunpack.c.l.b16 %v2904
    %v4324 = vunpack.c.h.b16 %v2904
    %v4325 = vunpack.c.l.b16 %v2905
    %v4326 = vunpack.c.h.b16 %v2905
    %v4327 = vunpack.c.l.b16 %v2906
    %v4328 = vunpack.c.h.b16 %v2906
    %v4329 = vunpack.c.l.b16 %v2907
    %v4330 = vunpack.c.h.b16 %v2907
    %v4331 = vunpack.c.l.b16 %v2908
    %v4332 = vunpack.c.h.b16 %v2908
    %v4333 = vunpack.c.l.b16 %v2909
    %v4334 = vunpack.c.h.b16 %v2909
    %v4335 = vunpack.c.l.b16 %v2910
    %v4336 = vunpack.c.h.b16 %v2910
    %v4337 = vunpack.c.l.b16 %v2911
    %v4338 = vunpack.c.h.b16 %v2911
    %v4339 = vunpack.c.l.b16 %v2912
    %v4340 = vunpack.c.h.b16 %v2912
    %v4341 = vunpack.c.l.b16 %v2913
    %v4342 = vunpack.c.h.b16 %v2913
    %v4343 = vunpack.c.l.b16 %v2914
    %v4344 = vunpack.c.h.b16 %v2914
    %v4345 = vunpack.c.l.b16 %v2915
    %v4346 = vunpack.c.h.b16 %v2915
    %v4347 = vunpack.c.l.b16 %v2916
    %v4348 = vunpack.c.h.b16 %v2916
    %v4349 = vunpack.c.l.b16 %v2917
    %v4350 = vunpack.c.h.b16 %v2917
    %v4351 = vunpack.c.l.b16 %v2918
    %v4352 = vunpack.c.h.b16 %v2918
    %v4353 = vunpack.c.l.b16 %v2919
    %v4354 = vunpack.c.h.b16 %v2919
    %v4355 = vunpack.c.l.b16 %v2920
    %v4356 = vunpack.c.h.b16 %v2920
    %v4357 = vunpack.c.l.b16 %v2921
    %v4358 = vunpack.c.h.b16 %v2921
    %v4359 = vunpack.c.l.b16 %v2922
    %v4360 = vunpack.c.h.b16 %v2922
    %v4361 = vunpack.c.l.b16 %v2923
    %v4362 = vunpack.c.h.b16 %v2923
    %v4363 = vunpack.c.l.b16 %v2924
    %v4364 = vunpack.c.h.b16 %v2924
    %v4365 = vunpack.c.l.b16 %v2925
    %v4366 = vunpack.c.h.b16 %v2925
    %v4367 = vunpack.c.l.b16 %v2926
    %v4368 = vunpack.c.h.b16 %v2926
    %v4369 = vunpack.c.l.b16 %v2927
    %v4370 = vunpack.c.h.b16 %v2927
    %v4371 = vunpack.c.l.b16 %v2928
    %v4372 = vunpack.c.h.b16 %v2928
    %v4373 = vunpack.c.l.b16 %v2929
    %v4374 = vunpack.c.h.b16 %v2929
    %v4375 = vunpack.c.l.b16 %v2930
    %v4376 = vunpack.c.h.b16 %v2930
    %v4377 = vunpack.c.l.b16 %v2931
    %v4378 = vunpack.c.h.b16 %v2931
    %v4379 = vunpack.c.l.b16 %v2932
    %v4380 = vunpack.c.h.b16 %v2932
    %v4381 = vunpack.c.l.b16 %v2933
    %v4382 = vunpack.c.h.b16 %v2933
    %v4383 = vunpack.c.l.b16 %v2934
    %v4384 = vunpack.c.h.b16 %v2934
    %v4385 = vunpack.c.l.b16 %v2935
    %v4386 = vunpack.c.h.b16 %v2935
    %v4387 = vunpack.c.l.b16 %v2936
    %v4388 = vunpack.c.h.b16 %v2936
    %v4389 = vunpack.c.l.b16 %v2937
    %v4390 = vunpack.c.h.b16 %v2937
    %v4391 = vunpack.c.l.b16 %v2938
    %v4392 = vunpack.c.h.b16 %v2938
    %v4393 = vunpack.c.l.b16 %v2939
    %v4394 = vunpack.c.h.b16 %v2939
    %v4395 = vunpack.c.l.b16 %v2940
    %v4396 = vunpack.c.h.b16 %v2940
    %v4397 = vunpack.c.l.b16 %v2941
    %v4398 = vunpack.c.h.b16 %v2941
    %v4399 = vunpack.c.l.b16 %v2942
    %v4400 = vunpack.c.h.b16 %v2942
    %v4401 = vunpack.c.l.b16 %v2943
    %v4402 = vunpack.c.h.b16 %v2943
    %v4403 = vunpack.c.l.b16 %v2944
    %v4404 = vunpack.c.h.b16 %v2944
    %v4405 = vunpack.c.l.b16 %v2945
    %v4406 = vunpack.c.h.b16 %v2945
    %v4407 = vunpack.c.l.b16 %v2946
    %v4408 = vunpack.c.h.b16 %v2946
    %v4409 = vunpack.c.l.b16 %v2947
    %v4410 = vunpack.c.h.b16 %v2947
    %v4411 = vunpack.c.l.b16 %v2948
    %v4412 = vunpack.c.h.b16 %v2948
    %v4413 = vunpack.c.l.b16 %v2949
    %v4414 = vunpack.c.h.b16 %v2949
    %v4415 = vunpack.c.l.b16 %v2950
    %v4416 = vunpack.c.h.b16 %v2950
    %v4417 = vunpack.c.l.b16 %v2951
    %v4418 = vunpack.c.h.b16 %v2951
    %v4419 = vunpack.c.l.b16 %v2952
    %v4420 = vunpack.c.h.b16 %v2952
    %v4421 = vunpack.c.l.b16 %v2953
    %v4422 = vunpack.c.h.b16 %v2953
    %v4423 = vunpack.c.l.b16 %v2954
    %v4424 = vunpack.c.h.b16 %v2954
    %v4425 = vunpack.c.l.b16 %v2955
    %v4426 = vunpack.c.h.b16 %v2955
    %v4427 = vunpack.c.l.b16 %v2956
    %v4428 = vunpack.c.h.b16 %v2956
    %v4429 = vunpack.c.l.b16 %v2957
    %v4430 = vunpack.c.h.b16 %v2957
    %v4431 = vunpack.c.l.b16 %v2958
    %v4432 = vunpack.c.h.b16 %v2958
    %v4433 = vunpack.c.l.b16 %v2959
    %v4434 = vunpack.c.h.b16 %v2959
    %v4435 = vunpack.c.l.b16 %v2960
    %v4436 = vunpack.c.h.b16 %v2960
    %v4437 = vunpack.c.l.b16 %v2961
    %v4438 = vunpack.c.h.b16 %v2961
    %v4439 = vunpack.c.l.b16 %v2962
    %v4440 = vunpack.c.h.b16 %v2962
    %v4441 = vunpack.c.l.b16 %v2963
    %v4442 = vunpack.c.h.b16 %v2963
    %v4443 = vunpack.c.l.b16 %v2964
    %v4444 = vunpack.c.h.b16 %v2964
    %v4445 = vunpack.c.l.b16 %v2965
    %v4446 = vunpack.c.h.b16 %v2965
    %v4447 = vunpack.c.l.b16 %v2966
    %v4448 = vunpack.c.h.b16 %v2966
    %v4449 = vunpack.c.l.b16 %v2967
    %v4450 = vunpack.c.h.b16 %v2967
    %v4451 = vunpack.c.l.b16 %v2968
    %v4452 = vunpack.c.h.b16 %v2968
    %v4453 = vunpack.c.l.b16 %v2969
    %v4454 = vunpack.c.h.b16 %v2969
    %v4455 = vunpack.c.l.b16 %v2970
    %v4456 = vunpack.c.h.b16 %v2970
    %v4457 = vunpack.c.l.b16 %v2971
    %v4458 = vunpack.c.h.b16 %v2971
    %v4459 = vunpack.c.l.b16 %v2972
    %v4460 = vunpack.c.h.b16 %v2972
    %v4461 = vunpack.c.l.b16 %v2973
    %v4462 = vunpack.c.h.b16 %v2973
    %v4463 = vunpack.c.l.b16 %v2974
    %v4464 = vunpack.c.h.b16 %v2974
    %v4465 = vunpack.c.l.b16 %v2975
    %v4466 = vunpack.c.h.b16 %v2975
    %v4467 = vunpack.c.l.b16 %v2976
    %v4468 = vunpack.c.h.b16 %v2976
    %v4469 = vunpack.c.l.b16 %v2977
    %v4470 = vunpack.c.h.b16 %v2977
    %v4471 = vunpack.c.l.b16 %v2978
    %v4472 = vunpack.c.h.b16 %v2978
    %v4473 = vunpack.c.l.b16 %v2979
    %v4474 = vunpack.c.h.b16 %v2979
    %v4475 = vunpack.c.l.b16 %v2980
    %v4476 = vunpack.c.h.b16 %v2980
    %v4477 = vunpack.c.l.b16 %v2981
    %v4478 = vunpack.c.h.b16 %v2981
    %v4479 = vunpack.c.l.b16 %v2982
    %v4480 = vunpack.c.h.b16 %v2982
    %v4481 = vunpack.c.l.b16 %v2983
    %v4482 = vunpack.c.h.b16 %v2983
    %v4483 = vunpack.c.l.b16 %v2984
    %v4484 = vunpack.c.h.b16 %v2984
    %v4485 = vunpack.c.l.b16 %v2985
    %v4486 = vunpack.c.h.b16 %v2985
    %v4487 = vunpack.c.l.b16 %v2986
    %v4488 = vunpack.c.h.b16 %v2986
    %v4489 = vunpack.c.l.b16 %v2987
    %v4490 = vunpack.c.h.b16 %v2987
    %v4491 = vunpack.c.l.b16 %v2988
    %v4492 = vunpack.c.h.b16 %v2988
    %v4493 = vunpack.c.l.b16 %v2989
    %v4494 = vunpack.c.h.b16 %v2989
    %v4495 = vunpack.c.l.b16 %v2990
    %v4496 = vunpack.c.h.b16 %v2990
    %v4497 = vunpack.c.l.b16 %v2991
    %v4498 = vunpack.c.h.b16 %v2991
    %v4499 = vunpack.c.l.b16 %v2992
    %v4500 = vunpack.c.h.b16 %v2992
    %v4501 = vunpack.c.l.b16 %v2993
    %v4502 = vunpack.c.h.b16 %v2993
    %v4503 = vunpack.c.l.b16 %v2994
    %v4504 = vunpack.c.h.b16 %v2994
    %v4505 = vunpack.c.l.b16 %v2995
    %v4506 = vunpack.c.h.b16 %v2995
    %v4507 = vunpack.c.l.b16 %v2996
    %v4508 = vunpack.c.h.b16 %v2996
    %v4509 = vunpack.c.l.b16 %v2997
    %v4510 = vunpack.c.h.b16 %v2997
    %v4511 = vunpack.c.l.b16 %v2998
    %v4512 = vunpack.c.h.b16 %v2998
    %v4513 = vunpack.c.l.b16 %v2999
    %v4514 = vunpack.c.h.b16 %v2999
    %v4515 = vunpack.c.l.b16 %v3000
    %v4516 = vunpack.c.h.b16 %v3000
    %v4517 = vunpack.c.l.b16 %v3001
    %v4518 = vunpack.c.h.b16 %v3001
    %v4519 = vunpack.c.l.b16 %v3002
    %v4520 = vunpack.c.h.b16 %v3002
    %v4521 = vunpack.c.l.b16 %v3003
    %v4522 = vunpack.c.h.b16 %v3003
    %v4523 = vunpack.c.l.b16 %v3004
    %v4524 = vunpack.c.h.b16 %v3004
    %v4525 = vunpack.c.l.b16 %v3005
    %v4526 = vunpack.c.h.b16 %v3005
    %v4527 = vunpack.c.l.b16 %v3006
    %v4528 = vunpack.c.h.b16 %v3006
    %v4529 = vunpack.c.l.b16 %v3007
    %v4530 = vunpack.c.h.b16 %v3007
    %v4531 = vunpack.c.l.b16 %v3008
    %v4532 = vunpack.c.h.b16 %v3008
    %v4533 = vunpack.c.l.b16 %v3009
    %v4534 = vunpack.c.h.b16 %v3009
    %v4535 = vunpack.c.l.b16 %v3010
    %v4536 = vunpack.c.h.b16 %v3010
    %v4537 = vunpack.c.l.b16 %v3011
    %v4538 = vunpack.c.h.b16 %v3011
    %v4539 = vunpack.c.l.b16 %v3012
    %v4540 = vunpack.c.h.b16 %v3012
    %v4541 = vunpack.c.l.b16 %v3013
    %v4542 = vunpack.c.h.b16 %v3013
    %v4543 = vunpack.c.l.b16 %v3014
    %v4544 = vunpack.c.h.b16 %v3014
    %v4545 = vunpack.c.l.b16 %v3015
    %v4546 = vunpack.c.h.b16 %v3015
    %v4547 = vunpack.c.l.b16 %v3016
    %v4548 = vunpack.c.h.b16 %v3016
    %v4549 = vunpack.c.l.b16 %v3017
    %v4550 = vunpack.c.h.b16 %v3017
    %v4551 = vunpack.c.l.b16 %v3018
    %v4552 = vunpack.c.h.b16 %v3018
    %v4553 = vunpack.c.l.b16 %v3019
    %v4554 = vunpack.c.h.b16 %v3019
    %v4555 = vunpack.c.l.b16 %v3020
    %v4556 = vunpack.c.h.b16 %v3020
    %v4557 = vunpack.c.l.b16 %v3021
    %v4558 = vunpack.c.h.b16 %v3021
    %v4559 = vunpack.c.l.b16 %v3022
    %v4560 = vunpack.c.h.b16 %v3022
    %v4561 = vunpack.c.l.b16 %v3023
    %v4562 = vunpack.c.h.b16 %v3023
    %v4563 = vunpack.c.l.b16 %v3024
    %v4564 = vunpack.c.h.b16 %v3024
    %v4565 = vunpack.c.l.b16 %v3025
    %v4566 = vunpack.c.h.b16 %v3025
    %v4567 = vunpack.c.l.b16 %v3026
    %v4568 = vunpack.c.h.b16 %v3026
    %v4569 = vunpack.c.l.b16 %v3027
    %v4570 = vunpack.c.h.b16 %v3027
    %v4571 = vunpack.c.l.b16 %v3028
    %v4572 = vunpack.c.h.b16 %v3028
    %v4573 = vunpack.c.l.b16 %v3029
    %v4574 = vunpack.c.h.b16 %v3029
    %v4575 = vunpack.c.l.b16 %v3030
    %v4576 = vunpack.c.h.b16 %v3030
    %v4577 = vunpack.c.l.b16 %v3031
    %v4578 = vunpack.c.h.b16 %v3031
    %v4579 = vunpack.c.l.b16 %v3032
    %v4580 = vunpack.c.h.b16 %v3032
    %v4581 = vunpack.c.l.b16 %v3033
    %v4582 = vunpack.c.h.b16 %v3033
    %v4583 = vunpack.c.l.b16 %v3034
    %v4584 = vunpack.c.h.b16 %v3034
    %v4585 = vunpack.c.l.b16 %v3035
    %v4586 = vunpack.c.h.b16 %v3035
    %v4587 = vunpack.c.l.b16 %v3036
    %v4588 = vunpack.c.h.b16 %v3036
    %v4589 = vunpack.c.l.b16 %v3037
    %v4590 = vunpack.c.h.b16 %v3037
    %v4591 = vunpack.c.l.b16 %v3038
    %v4592 = vunpack.c.h.b16 %v3038
    %v4593 = vunpack.c.l.b16 %v3039
    %v4594 = vunpack.c.h.b16 %v3039
    %v4595 = vunpack.c.l.b16 %v3040
    %v4596 = vunpack.c.h.b16 %v3040
    %v4597 = vunpack.c.l.b16 %v3041
    %v4598 = vunpack.c.h.b16 %v3041
    %v4599 = vunpack.c.l.b16 %v3042
    %v4600 = vunpack.c.h.b16 %v3042
    %v4601 = vunpack.c.l.b16 %v3043
    %v4602 = vunpack.c.h.b16 %v3043
    %v4603 = vunpack.c.l.b16 %v3044
    %v4604 = vunpack.c.h.b16 %v3044
    %v4605 = vunpack.c.l.b16 %v3045
    %v4606 = vunpack.c.h.b16 %v3045
    %v4607 = vunpack.c.l.b16 %v3046
    %v4608 = vunpack.c.h.b16 %v3046
    %v4609 = vunpack.c.l.b16 %v3047
    %v4610 = vunpack.c.h.b16 %v3047
    %v4611 = vunpack.c.l.b16 %v3048
    %v4612 = vunpack.c.h.b16 %v3048
    %v4613 = vunpack.c.l.b16 %v3049
    %v4614 = vunpack.c.h.b16 %v3049
    %v4615 = vunpack.c.l.b16 %v3050
    %v4616 = vunpack.c.h.b16 %v3050
    %v4617 = vunpack.c.l.b16 %v3051
    %v4618 = vunpack.c.h.b16 %v3051
    %v4619 = vunpack.c.l.b16 %v3052
    %v4620 = vunpack.c.h.b16 %v3052
    %v4621 = vunpack.c.l.b16 %v3053
    %v4622 = vunpack.c.h.b16 %v3053
    %v4623 = vunpack.c.l.b16 %v3054
    %v4624 = vunpack.c.h.b16 %v3054
    %v4625 = vunpack.c.l.b16 %v3055
    %v4626 = vunpack.c.h.b16 %v3055
    %v4627 = vunpack.c.l.b16 %v3056
    %v4628 = vunpack.c.h.b16 %v3056
    %v4629 = vunpack.c.l.b16 %v3057
    %v4630 = vunpack.c.h.b16 %v3057
    %v4631 = vunpack.c.l.b16 %v3058
    %v4632 = vunpack.c.h.b16 %v3058
    %v4633 = vunpack.c.l.b16 %v3059
    %v4634 = vunpack.c.h.b16 %v3059
    %v4635 = vunpack.c.l.b16 %v3060
    %v4636 = vunpack.c.h.b16 %v3060
    %v4637 = vunpack.c.l.b16 %v3061
    %v4638 = vunpack.c.h.b16 %v3061
    %v4639 = vunpack.c.l.b16 %v3062
    %v4640 = vunpack.c.h.b16 %v3062
    %v4641 = vpack.c.b16 %v3625, %v3617
    %v4642 = vpack.c.b16 %v3626, %v3618
    %v4643 = vpack.c.b16 %v3627, %v3619
    %v4644 = vpack.c.b16 %v3628, %v3620
    %v4645 = vpack.c.b16 %v3629, %v3621
    %v4646 = vpack.c.b16 %v3630, %v3622
    %v4647 = vpack.c.b16 %v3631, %v3623
    %v4648 = vpack.c.b16 %v3632, %v3624
    %v4649 = vpack.c.b16 %v3641, %v3633
    %v4650 = vpack.c.b16 %v3642, %v3634
    %v4651 = vpack.c.b16 %v3643, %v3635
    %v4652 = vpack.c.b16 %v3644, %v3636
    %v4653 = vpack.c.b16 %v3645, %v3637
    %v4654 = vpack.c.b16 %v3646, %v3638
    %v4655 = vpack.c.b16 %v3647, %v3639
    %v4656 = vpack.c.b16 %v3648, %v3640
    %v4657 = vpack.c.b16 %v3657, %v3649
    %v4658 = vpack.c.b16 %v3658, %v3650
    %v4659 = vpack.c.b16 %v3659, %v3651
    %v4660 = vpack.c.b16 %v3660, %v3652
    %v4661 = vpack.c.b16 %v3661, %v3653
    %v4662 = vpack.c.b16 %v3662, %v3654
    %v4663 = vpack.c.b16 %v3663, %v3655
    %v4664 = vpack.c.b16 %v3664, %v3656
    %v4665 = vpack.c.b16 %v3673, %v3665
    %v4666 = vpack.c.b16 %v3674, %v3666
    %v4667 = vpack.c.b16 %v3675, %v3667
    %v4668 = vpack.c.b16 %v3676, %v3668
    %v4669 = vpack.c.b16 %v3677, %v3669
    %v4670 = vpack.c.b16 %v3678, %v3670
    %v4671 = vpack.c.b16 %v3679, %v3671
    %v4672 = vpack.c.b16 %v3680, %v3672
    %v4673 = vpack.c.b16 %v3689, %v3681
    %v4674 = vpack.c.b16 %v3690, %v3682
    %v4675 = vpack.c.b16 %v3691, %v3683
    %v4676 = vpack.c.b16 %v3692, %v3684
    %v4677 = vpack.c.b16 %v3693, %v3685
    %v4678 = vpack.c.b16 %v3694, %v3686
    %v4679 = vpack.c.b16 %v3695, %v3687
    %v4680 = vpack.c.b16 %v3696, %v3688
    %v4681 = vpack.c.b16 %v3705, %v3697
    %v4682 = vpack.c.b16 %v3706, %v3698
    %v4683 = vpack.c.b16 %v3707, %v3699
    %v4684 = vpack.c.b16 %v3708, %v3700
    %v4685 = vpack.c.b16 %v3709, %v3701
    %v4686 = vpack.c.b16 %v3710, %v3702
    %v4687 = vpack.c.b16 %v3711, %v3703
    %v4688 = vpack.c.b16 %v3712, %v3704
    %v4689 = vpack.c.b16 %v3721, %v3713
    %v4690 = vpack.c.b16 %v3722, %v3714
    %v4691 = vpack.c.b16 %v3723, %v3715
    %v4692 = vpack.c.b16 %v3724, %v3716
    %v4693 = vpack.c.b16 %v3725, %v3717
    %v4694 = vpack.c.b16 %v3726, %v3718
    %v4695 = vpack.c.b16 %v3727, %v3719
    %v4696 = vpack.c.b16 %v3728, %v3720
    %v4697 = vpack.c.b16 %v3737, %v3729
    %v4698 = vpack.c.b16 %v3738, %v3730
    %v4699 = vpack.c.b16 %v3739, %v3731
    %v4700 = vpack.c.b16 %v3740, %v3732
    %v4701 = vpack.c.b16 %v3741, %v3733
    %v4702 = vpack.c.b16 %v3742, %v3734
    %v4703 = vpack.c.b16 %v3743, %v3735
    %v4704 = vpack.c.b16 %v3744, %v3736
    %v4705 = vpack.c.b16 %v3753, %v3745
    %v4706 = vpack.c.b16 %v3754, %v3746
    %v4707 = vpack.c.b16 %v3755, %v3747
    %v4708 = vpack.c.b16 %v3756, %v3748
    %v4709 = vpack.c.b16 %v3757, %v3749
    %v4710 = vpack.c.b16 %v3758, %v3750
    %v4711 = vpack.c.b16 %v3759, %v3751
    %v4712 = vpack.c.b16 %v3760, %v3752
    %v4713 = vpack.c.b16 %v3769, %v3761
    %v4714 = vpack.c.b16 %v3770, %v3762
    %v4715 = vpack.c.b16 %v3771, %v3763
    %v4716 = vpack.c.b16 %v3772, %v3764
    %v4717 = vpack.c.b16 %v3773, %v3765
    %v4718 = vpack.c.b16 %v3774, %v3766
    %v4719 = vpack.c.b16 %v3775, %v3767
    %v4720 = vpack.c.b16 %v3776, %v3768
    %v4721 = vpack.c.b16 %v3785, %v3777
    %v4722 = vpack.c.b16 %v3786, %v3778
    %v4723 = vpack.c.b16 %v3787, %v3779
    %v4724 = vpack.c.b16 %v3788, %v3780
    %v4725 = vpack.c.b16 %v3789, %v3781
    %v4726 = vpack.c.b16 %v3790, %v3782
    %v4727 = vpack.c.b16 %v3791, %v3783
    %v4728 = vpack.c.b16 %v3792, %v3784
    %v4729 = vpack.c.b16 %v3801, %v3793
    %v4730 = vpack.c.b16 %v3802, %v3794
    %v4731 = vpack.c.b16 %v3803, %v3795
    %v4732 = vpack.c.b16 %v3804, %v3796
    %v4733 = vpack.c.b16 %v3805, %v3797
    %v4734 = vpack.c.b16 %v3806, %v3798
    %v4735 = vpack.c.b16 %v3807, %v3799
    %v4736 = vpack.c.b16 %v3808, %v3800
    %v4737 = vpack.c.b16 %v3817, %v3809
    %v4738 = vpack.c.b16 %v3818, %v3810
    %v4739 = vpack.c.b16 %v3819, %v3811
    %v4740 = vpack.c.b16 %v3820, %v3812
    %v4741 = vpack.c.b16 %v3821, %v3813
    %v4742 = vpack.c.b16 %v3822, %v3814
    %v4743 = vpack.c.b16 %v3823, %v3815
    %v4744 = vpack.c.b16 %v3824, %v3816
    %v4745 = vpack.c.b16 %v3833, %v3825
    %v4746 = vpack.c.b16 %v3834, %v3826
    %v4747 = vpack.c.b16 %v3835, %v3827
    %v4748 = vpack.c.b16 %v3836, %v3828
    %v4749 = vpack.c.b16 %v3837, %v3829
    %v4750 = vpack.c.b16 %v3838, %v3830
    %v4751 = vpack.c.b16 %v3839, %v3831
    %v4752 = vpack.c.b16 %v3840, %v3832
    %v4753 = vpack.c.b16 %v3849, %v3841
    %v4754 = vpack.c.b16 %v3850, %v3842
    %v4755 = vpack.c.b16 %v3851, %v3843
    %v4756 = vpack.c.b16 %v3852, %v3844
    %v4757 = vpack.c.b16 %v3853, %v3845
    %v4758 = vpack.c.b16 %v3854, %v3846
    %v4759 = vpack.c.b16 %v3855, %v3847
    %v4760 = vpack.c.b16 %v3856, %v3848
    %v4761 = vpack.c.b16 %v3865, %v3857
    %v4762 = vpack.c.b16 %v3866, %v3858
    %v4763 = vpack.c.b16 %v3867, %v3859
    %v4764 = vpack.c.b16 %v3868, %v3860
    %v4765 = vpack.c.b16 %v3869, %v3861
    %v4766 = vpack.c.b16 %v3870, %v3862
    %v4767 = vpack.c.b16 %v3871, %v3863
    %v4768 = vpack.c.b16 %v3872, %v3864
    %v4769 = vpack.c.b16 %v3881, %v3873
    %v4770 = vpack.c.b16 %v3882, %v3874
    %v4771 = vpack.c.b16 %v3883, %v3875
    %v4772 = vpack.c.b16 %v3884, %v3876
    %v4773 = vpack.c.b16 %v3885, %v3877
    %v4774 = vpack.c.b16 %v3886, %v3878
    %v4775 = vpack.c.b16 %v3887, %v3879
    %v4776 = vpack.c.b16 %v3888, %v3880
    %v4777 = vpack.c.b16 %v3897, %v3889
    %v4778 = vpack.c.b16 %v3898, %v3890
    %v4779 = vpack.c.b16 %v3899, %v3891
    %v4780 = vpack.c.b16 %v3900, %v3892
    %v4781 = vpack.c.b16 %v3901, %v3893
    %v4782 = vpack.c.b16 %v3902, %v3894
    %v4783 = vpack.c.b16 %v3903, %v3895
    %v4784 = vpack.c.b16 %v3904, %v3896
    %v4785 = vpack.c.b16 %v3913, %v3905
    %v4786 = vpack.c.b16 %v3914, %v3906
    %v4787 = vpack.c.b16 %v3915, %v3907
    %v4788 = vpack.c.b16 %v3916, %v3908
    %v4789 = vpack.c.b16 %v3917, %v3909
    %v4790 = vpack.c.b16 %v3918, %v3910
    %v4791 = vpack.c.b16 %v3919, %v3911
    %v4792 = vpack.c.b16 %v3920, %v3912
    %v4793 = vpack.c.b16 %v3929, %v3921
    %v4794 = vpack.c.b16 %v3930, %v3922
    %v4795 = vpack.c.b16 %v3931, %v3923
    %v4796 = vpack.c.b16 %v3932, %v3924
    %v4797 = vpack.c.b16 %v3933, %v3925
    %v4798 = vpack.c.b16 %v3934, %v3926
    %v4799 = vpack.c.b16 %v3935, %v3927
    %v4800 = vpack.c.b16 %v3936, %v3928
    %v4801 = vpack.c.b16 %v3945, %v3937
    %v4802 = vpack.c.b16 %v3946, %v3938
    %v4803 = vpack.c.b16 %v3947, %v3939
    %v4804 = vpack.c.b16 %v3948, %v3940
    %v4805 = vpack.c.b16 %v3949, %v3941
    %v4806 = vpack.c.b16 %v3950, %v3942
    %v4807 = vpack.c.b16 %v3951, %v3943
    %v4808 = vpack.c.b16 %v3952, %v3944
    %v4809 = vpack.c.b16 %v3961, %v3953
    %v4810 = vpack.c.b16 %v3962, %v3954
    %v4811 = vpack.c.b16 %v3963, %v3955
    %v4812 = vpack.c.b16 %v3964, %v3956
    %v4813 = vpack.c.b16 %v3965, %v3957
    %v4814 = vpack.c.b16 %v3966, %v3958
    %v4815 = vpack.c.b16 %v3967, %v3959
    %v4816 = vpack.c.b16 %v3968, %v3960
    %v4817 = vpack.c.b16 %v3977, %v3969
    %v4818 = vpack.c.b16 %v3978, %v3970
    %v4819 = vpack.c.b16 %v3979, %v3971
    %v4820 = vpack.c.b16 %v3980, %v3972
    %v4821 = vpack.c.b16 %v3981, %v3973
    %v4822 = vpack.c.b16 %v3982, %v3974
    %v4823 = vpack.c.b16 %v3983, %v3975
    %v4824 = vpack.c.b16 %v3984, %v3976
    %v4825 = vpack.c.b16 %v3993, %v3985
    %v4826 = vpack.c.b16 %v3994, %v3986
    %v4827 = vpack.c.b16 %v3995, %v3987
    %v4828 = vpack.c.b16 %v3996, %v3988
    %v4829 = vpack.c.b16 %v3997, %v3989
    %v4830 = vpack.c.b16 %v3998, %v3990
    %v4831 = vpack.c.b16 %v3999, %v3991
    %v4832 = vpack.c.b16 %v4000, %v3992
    %v4833 = vpack.c.b16 %v4009, %v4001
    %v4834 = vpack.c.b16 %v4010, %v4002
    %v4835 = vpack.c.b16 %v4011, %v4003
    %v4836 = vpack.c.b16 %v4012, %v4004
    %v4837 = vpack.c.b16 %v4013, %v4005
    %v4838 = vpack.c.b16 %v4014, %v4006
    %v4839 = vpack.c.b16 %v4015, %v4007
    %v4840 = vpack.c.b16 %v4016, %v4008
    %v4841 = vpack.c.b16 %v4025, %v4017
    %v4842 = vpack.c.b16 %v4026, %v4018
    %v4843 = vpack.c.b16 %v4027, %v4019
    %v4844 = vpack.c.b16 %v4028, %v4020
    %v4845 = vpack.c.b16 %v4029, %v4021
    %v4846 = vpack.c.b16 %v4030, %v4022
    %v4847 = vpack.c.b16 %v4031, %v4023
    %v4848 = vpack.c.b16 %v4032, %v4024
    %v4849 = vpack.c.b16 %v4041, %v4033
    %v4850 = vpack.c.b16 %v4042, %v4034
    %v4851 = vpack.c.b16 %v4043, %v4035
    %v4852 = vpack.c.b16 %v4044, %v4036
    %v4853 = vpack.c.b16 %v4045, %v4037
    %v4854 = vpack.c.b16 %v4046, %v4038
    %v4855 = vpack.c.b16 %v4047, %v4039
    %v4856 = vpack.c.b16 %v4048, %v4040
    %v4857 = vpack.c.b16 %v4057, %v4049
    %v4858 = vpack.c.b16 %v4058, %v4050
    %v4859 = vpack.c.b16 %v4059, %v4051
    %v4860 = vpack.c.b16 %v4060, %v4052
    %v4861 = vpack.c.b16 %v4061, %v4053
    %v4862 = vpack.c.b16 %v4062, %v4054
    %v4863 = vpack.c.b16 %v4063, %v4055
    %v4864 = vpack.c.b16 %v4064, %v4056
    %v4865 = vpack.c.b16 %v4073, %v4065
    %v4866 = vpack.c.b16 %v4074, %v4066
    %v4867 = vpack.c.b16 %v4075, %v4067
    %v4868 = vpack.c.b16 %v4076, %v4068
    %v4869 = vpack.c.b16 %v4077, %v4069
    %v4870 = vpack.c.b16 %v4078, %v4070
    %v4871 = vpack.c.b16 %v4079, %v4071
    %v4872 = vpack.c.b16 %v4080, %v4072
    %v4873 = vpack.c.b16 %v4089, %v4081
    %v4874 = vpack.c.b16 %v4090, %v4082
    %v4875 = vpack.c.b16 %v4091, %v4083
    %v4876 = vpack.c.b16 %v4092, %v4084
    %v4877 = vpack.c.b16 %v4093, %v4085
    %v4878 = vpack.c.b16 %v4094, %v4086
    %v4879 = vpack.c.b16 %v4095, %v4087
    %v4880 = vpack.c.b16 %v4096, %v4088
    %v4881 = vpack.c.b16 %v4105, %v4097
    %v4882 = vpack.c.b16 %v4106, %v4098
    %v4883 = vpack.c.b16 %v4107, %v4099
    %v4884 = vpack.c.b16 %v4108, %v4100
    %v4885 = vpack.c.b16 %v4109, %v4101
    %v4886 = vpack.c.b16 %v4110, %v4102
    %v4887 = vpack.c.b16 %v4111, %v4103
    %v4888 = vpack.c.b16 %v4112, %v4104
    %v4889 = vpack.c.b16 %v4121, %v4113
    %v4890 = vpack.c.b16 %v4122, %v4114
    %v4891 = vpack.c.b16 %v4123, %v4115
    %v4892 = vpack.c.b16 %v4124, %v4116
    %v4893 = vpack.c.b16 %v4125, %v4117
    %v4894 = vpack.c.b16 %v4126, %v4118
    %v4895 = vpack.c.b16 %v4127, %v4119
    %v4896 = vpack.c.b16 %v4128, %v4120
    %v4897 = vpack.c.b16 %v4137, %v4129
    %v4898 = vpack.c.b16 %v4138, %v4130
    %v4899 = vpack.c.b16 %v4139, %v4131
    %v4900 = vpack.c.b16 %v4140, %v4132
    %v4901 = vpack.c.b16 %v4141, %v4133
    %v4902 = vpack.c.b16 %v4142, %v4134
    %v4903 = vpack.c.b16 %v4143, %v4135
    %v4904 = vpack.c.b16 %v4144, %v4136
    %v4905 = vpack.c.b16 %v4153, %v4145
    %v4906 = vpack.c.b16 %v4154, %v4146
    %v4907 = vpack.c.b16 %v4155, %v4147
    %v4908 = vpack.c.b16 %v4156, %v4148
    %v4909 = vpack.c.b16 %v4157, %v4149
    %v4910 = vpack.c.b16 %v4158, %v4150
    %v4911 = vpack.c.b16 %v4159, %v4151
    %v4912 = vpack.c.b16 %v4160, %v4152
    %v4913 = vpack.c.b16 %v4169, %v4161
    %v4914 = vpack.c.b16 %v4170, %v4162
    %v4915 = vpack.c.b16 %v4171, %v4163
    %v4916 = vpack.c.b16 %v4172, %v4164
    %v4917 = vpack.c.b16 %v4173, %v4165
    %v4918 = vpack.c.b16 %v4174, %v4166
    %v4919 = vpack.c.b16 %v4175, %v4167
    %v4920 = vpack.c.b16 %v4176, %v4168
    %v4921 = vpack.c.b16 %v4185, %v4177
    %v4922 = vpack.c.b16 %v4186, %v4178
    %v4923 = vpack.c.b16 %v4187, %v4179
    %v4924 = vpack.c.b16 %v4188, %v4180
    %v4925 = vpack.c.b16 %v4189, %v4181
    %v4926 = vpack.c.b16 %v4190, %v4182
    %v4927 = vpack.c.b16 %v4191, %v4183
    %v4928 = vpack.c.b16 %v4192, %v4184
    %v4929 = vpack.c.b16 %v4201, %v4193
    %v4930 = vpack.c.b16 %v4202, %v4194
    %v4931 = vpack.c.b16 %v4203, %v4195
    %v4932 = vpack.c.b16 %v4204, %v4196
    %v4933 = vpack.c.b16 %v4205, %v4197
    %v4934 = vpack.c.b16 %v4206, %v4198
    %v4935 = vpack.c.b16 %v4207, %v4199
    %v4936 = vpack.c.b16 %v4208, %v4200
    %v4937 = vpack.c.b16 %v4217, %v4209
    %v4938 = vpack.c.b16 %v4218, %v4210
    %v4939 = vpack.c.b16 %v4219, %v4211
    %v4940 = vpack.c.b16 %v4220, %v4212
    %v4941 = vpack.c.b16 %v4221, %v4213
    %v4942 = vpack.c.b16 %v4222, %v4214
    %v4943 = vpack.c.b16 %v4223, %v4215
    %v4944 = vpack.c.b16 %v4224, %v4216
    %v4945 = vpack.c.b16 %v4233, %v4225
    %v4946 = vpack.c.b16 %v4234, %v4226
    %v4947 = vpack.c.b16 %v4235, %v4227
    %v4948 = vpack.c.b16 %v4236, %v4228
    %v4949 = vpack.c.b16 %v4237, %v4229
    %v4950 = vpack.c.b16 %v4238, %v4230
    %v4951 = vpack.c.b16 %v4239, %v4231
    %v4952 = vpack.c.b16 %v4240, %v4232
    %v4953 = vpack.c.b16 %v4249, %v4241
    %v4954 = vpack.c.b16 %v4250, %v4242
    %v4955 = vpack.c.b16 %v4251, %v4243
    %v4956 = vpack.c.b16 %v4252, %v4244
    %v4957 = vpack.c.b16 %v4253, %v4245
    %v4958 = vpack.c.b16 %v4254, %v4246
    %v4959 = vpack.c.b16 %v4255, %v4247
    %v4960 = vpack.c.b16 %v4256, %v4248
    %v4961 = vpack.c.b16 %v4265, %v4257
    %v4962 = vpack.c.b16 %v4266, %v4258
    %v4963 = vpack.c.b16 %v4267, %v4259
    %v4964 = vpack.c.b16 %v4268, %v4260
    %v4965 = vpack.c.b16 %v4269, %v4261
    %v4966 = vpack.c.b16 %v4270, %v4262
    %v4967 = vpack.c.b16 %v4271, %v4263
    %v4968 = vpack.c.b16 %v4272, %v4264
    %v4969 = vpack.c.b16 %v4281, %v4273
    %v4970 = vpack.c.b16 %v4282, %v4274
    %v4971 = vpack.c.b16 %v4283, %v4275
    %v4972 = vpack.c.b16 %v4284, %v4276
    %v4973 = vpack.c.b16 %v4285, %v4277
    %v4974 = vpack.c.b16 %v4286, %v4278
    %v4975 = vpack.c.b16 %v4287, %v4279
    %v4976 = vpack.c.b16 %v4288, %v4280
    %v4977 = vpack.c.b16 %v4297, %v4289
    %v4978 = vpack.c.b16 %v4298, %v4290
    %v4979 = vpack.c.b16 %v4299, %v4291
    %v4980 = vpack.c.b16 %v4300, %v4292
    %v4981 = vpack.c.b16 %v4301, %v4293
    %v4982 = vpack.c.b16 %v4302, %v4294
    %v4983 = vpack.c.b16 %v4303, %v4295
    %v4984 = vpack.c.b16 %v4304, %v4296
    %v4985 = vpack.c.b16 %v4313, %v4305
    %v4986 = vpack.c.b16 %v4314, %v4306
    %v4987 = vpack.c.b16 %v4315, %v4307
    %v4988 = vpack.c.b16 %v4316, %v4308
    %v4989 = vpack.c.b16 %v4317, %v4309
    %v4990 = vpack.c.b16 %v4318, %v4310
    %v4991 = vpack.c.b16 %v4319, %v4311
    %v4992 = vpack.c.b16 %v4320, %v4312
    %v4993 = vpack.c.b16 %v4329, %v4321
    %v4994 = vpack.c.b16 %v4330, %v4322
    %v4995 = vpack.c.b16 %v4331, %v4323
    %v4996 = vpack.c.b16 %v4332, %v4324
    %v4997 = vpack.c.b16 %v4333, %v4325
    %v4998 = vpack.c.b16 %v4334, %v4326
    %v4999 = vpack.c.b16 %v4335, %v4327
    %v5000 = vpack.c.b16 %v4336, %v4328
    %v5001 = vpack.c.b16 %v4345, %v4337
    %v5002 = vpack.c.b16 %v4346, %v4338
    %v5003 = vpack.c.b16 %v4347, %v4339
    %v5004 = vpack.c.b16 %v4348, %v4340
    %v5005 = vpack.c.b16 %v4349, %v4341
    %v5006 = vpack.c.b16 %v4350, %v4342
    %v5007 = vpack.c.b16 %v4351, %v4343
    %v5008 = vpack.c.b16 %v4352, %v4344
    %v5009 = vpack.c.b16 %v4361, %v4353
    %v5010 = vpack.c.b16 %v4362, %v4354
    %v5011 = vpack.c.b16 %v4363, %v4355
    %v5012 = vpack.c.b16 %v4364, %v4356
    %v5013 = vpack.c.b16 %v4365, %v4357
    %v5014 = vpack.c.b16 %v4366, %v4358
    %v5015 = vpack.c.b16 %v4367, %v4359
    %v5016 = vpack.c.b16 %v4368, %v4360
    %v5017 = vpack.c.b16 %v4377, %v4369
    %v5018 = vpack.c.b16 %v4378, %v4370
    %v5019 = vpack.c.b16 %v4379, %v4371
    %v5020 = vpack.c.b16 %v4380, %v4372
    %v5021 = vpack.c.b16 %v4381, %v4373
    %v5022 = vpack.c.b16 %v4382, %v4374
    %v5023 = vpack.c.b16 %v4383, %v4375
    %v5024 = vpack.c.b16 %v4384, %v4376
    %v5025 = vpack.c.b16 %v4393, %v4385
    %v5026 = vpack.c.b16 %v4394, %v4386
    %v5027 = vpack.c.b16 %v4395, %v4387
    %v5028 = vpack.c.b16 %v4396, %v4388
    %v5029 = vpack.c.b16 %v4397, %v4389
    %v5030 = vpack.c.b16 %v4398, %v4390
    %v5031 = vpack.c.b16 %v4399, %v4391
    %v5032 = vpack.c.b16 %v4400, %v4392
    %v5033 = vpack.c.b16 %v4409, %v4401
    %v5034 = vpack.c.b16 %v4410, %v4402
    %v5035 = vpack.c.b16 %v4411, %v4403
    %v5036 = vpack.c.b16 %v4412, %v4404
    %v5037 = vpack.c.b16 %v4413, %v4405
    %v5038 = vpack.c.b16 %v4414, %v4406
    %v5039 = vpack.c.b16 %v4415, %v4407
    %v5040 = vpack.c.b16 %v4416, %v4408
    %v5041 = vpack.c.b16 %v4425, %v4417
    %v5042 = vpack.c.b16 %v4426, %v4418
    %v5043 = vpack.c.b16 %v4427, %v4419
    %v5044 = vpack.c.b16 %v4428, %v4420
    %v5045 = vpack.c.b16 %v4429, %v4421
    %v5046 = vpack.c.b16 %v4430, %v4422
    %v5047 = vpack.c.b16 %v4431, %v4423
    %v5048 = vpack.c.b16 %v4432, %v4424
    %v5049 = vpack.c.b16 %v4441, %v4433
    %v5050 = vpack.c.b16 %v4442, %v4434
    %v5051 = vpack.c.b16 %v4443, %v4435
    %v5052 = vpack.c.b16 %v4444, %v4436
    %v5053 = vpack.c.b16 %v4445, %v4437
    %v5054 = vpack.c.b16 %v4446, %v4438
    %v5055 = vpack.c.b16 %v4447, %v4439
    %v5056 = vpack.c.b16 %v4448, %v4440
    %v5057 = vpack.c.b16 %v4457, %v4449
    %v5058 = vpack.c.b16 %v4458, %v4450
    %v5059 = vpack.c.b16 %v4459, %v4451
    %v5060 = vpack.c.b16 %v4460, %v4452
    %v5061 = vpack.c.b16 %v4461, %v4453
    %v5062 = vpack.c.b16 %v4462, %v4454
    %v5063 = vpack.c.b16 %v4463, %v4455
    %v5064 = vpack.c.b16 %v4464, %v4456
    %v5065 = vpack.c.b16 %v4473, %v4465
    %v5066 = vpack.c.b16 %v4474, %v4466
    %v5067 = vpack.c.b16 %v4475, %v4467
    %v5068 = vpack.c.b16 %v4476, %v4468
    %v5069 = vpack.c.b16 %v4477, %v4469
    %v5070 = vpack.c.b16 %v4478, %v4470
    %v5071 = vpack.c.b16 %v4479, %v4471
    %v5072 = vpack.c.b16 %v4480, %v4472
    %v5073 = vpack.c.b16 %v4489, %v4481
    %v5074 = vpack.c.b16 %v4490, %v4482
    %v5075 = vpack.c.b16 %v4491, %v4483
    %v5076 = vpack.c.b16 %v4492, %v4484
    %v5077 = vpack.c.b16 %v4493, %v4485
    %v5078 = vpack.c.b16 %v4494, %v4486
    %v5079 = vpack.c.b16 %v4495, %v4487
    %v5080 = vpack.c.b16 %v4496, %v4488
    %v5081 = vpack.c.b16 %v4505, %v4497
    %v5082 = vpack.c.b16 %v4506, %v4498
    %v5083 = vpack.c.b16 %v4507, %v4499
    %v5084 = vpack.c.b16 %v4508, %v4500
    %v5085 = vpack.c.b16 %v4509, %v4501
    %v5086 = vpack.c.b16 %v4510, %v4502
    %v5087 = vpack.c.b16 %v4511, %v4503
    %v5088 = vpack.c.b16 %v4512, %v4504
    %v5089 = vpack.c.b16 %v4521, %v4513
    %v5090 = vpack.c.b16 %v4522, %v4514
    %v5091 = vpack.c.b16 %v4523, %v4515
    %v5092 = vpack.c.b16 %v4524, %v4516
    %v5093 = vpack.c.b16 %v4525, %v4517
    %v5094 = vpack.c.b16 %v4526, %v4518
    %v5095 = vpack.c.b16 %v4527, %v4519
    %v5096 = vpack.c.b16 %v4528, %v4520
    %v5097 = vpack.c.b16 %v4537, %v4529
    %v5098 = vpack.c.b16 %v4538, %v4530
    %v5099 = vpack.c.b16 %v4539, %v4531
    %v5100 = vpack.c.b16 %v4540, %v4532
    %v5101 = vpack.c.b16 %v4541, %v4533
    %v5102 = vpack.c.b16 %v4542, %v4534
    %v5103 = vpack.c.b16 %v4543, %v4535
    %v5104 = vpack.c.b16 %v4544, %v4536
    %v5105 = vpack.c.b16 %v4553, %v4545
    %v5106 = vpack.c.b16 %v4554, %v4546
    %v5107 = vpack.c.b16 %v4555, %v4547
    %v5108 = vpack.c.b16 %v4556, %v4548
    %v5109 = vpack.c.b16 %v4557, %v4549
    %v5110 = vpack.c.b16 %v4558, %v4550
    %v5111 = vpack.c.b16 %v4559, %v4551
    %v5112 = vpack.c.b16 %v4560, %v4552
    %v5113 = vpack.c.b16 %v4569, %v4561
    %v5114 = vpack.c.b16 %v4570, %v4562
    %v5115 = vpack.c.b16 %v4571, %v4563
    %v5116 = vpack.c.b16 %v4572, %v4564
    %v5117 = vpack.c.b16 %v4573, %v4565
    %v5118 = vpack.c.b16 %v4574, %v4566
    %v5119 = vpack.c.b16 %v4575, %v4567
    %v5120 = vpack.c.b16 %v4576, %v4568
    %v5121 = vpack.c.b16 %v4585, %v4577
    %v5122 = vpack.c.b16 %v4586, %v4578
    %v5123 = vpack.c.b16 %v4587, %v4579
    %v5124 = vpack.c.b16 %v4588, %v4580
    %v5125 = vpack.c.b16 %v4589, %v4581
    %v5126 = vpack.c.b16 %v4590, %v4582
    %v5127 = vpack.c.b16 %v4591, %v4583
    %v5128 = vpack.c.b16 %v4592, %v4584
    %v5129 = vpack.c.b16 %v4601, %v4593
    %v5130 = vpack.c.b16 %v4602, %v4594
    %v5131 = vpack.c.b16 %v4603, %v4595
    %v5132 = vpack.c.b16 %v4604, %v4596
    %v5133 = vpack.c.b16 %v4605, %v4597
    %v5134 = vpack.c.b16 %v4606, %v4598
    %v5135 = vpack.c.b16 %v4607, %v4599
    %v5136 = vpack.c.b16 %v4608, %v4600
    %v5137 = vpack.c.b16 %v4617, %v4609
    %v5138 = vpack.c.b16 %v4618, %v4610
    %v5139 = vpack.c.b16 %v4619, %v4611
    %v5140 = vpack.c.b16 %v4620, %v4612
    %v5141 = vpack.c.b16 %v4621, %v4613
    %v5142 = vpack.c.b16 %v4622, %v4614
    %v5143 = vpack.c.b16 %v4623, %v4615
    %v5144 = vpack.c.b16 %v4624, %v4616
    %v5145 = vpack.c.b16 %v4633, %v4625
    %v5146 = vpack.c.b16 %v4634, %v4626
    %v5147 = vpack.c.b16 %v4635, %v4627
    %v5148 = vpack.c.b16 %v4636, %v4628
    %v5149 = vpack.c.b16 %v4637, %v4629
    %v5150 = vpack.c.b16 %v4638, %v4630
    %v5151 = vpack.c.b16 %v4639, %v4631
    %v5152 = vpack.c.b16 %v4640, %v4632
    %5665 = vmatprep.subr.bf16.mxu0 %v4698
    %5666 = vmatpush1.bf16.msra.mxu0 %v4697
    %5667 = vmatprep.subr.bf16.mxu0 %v4690
    %5668 = vmatpush1.bf16.msra.mxu0 %v4689
    %5669 = vmatprep.subr.bf16.mxu0 %v4682
    %5670 = vmatpush1.bf16.msra.mxu0 %v4681
    %5671 = vmatprep.subr.bf16.mxu0 %v4674
    %5672 = vmatpush1.bf16.msra.mxu0 %v4673
    %5673 = vmatprep.subr.bf16.mxu0 %v4666
    %5674 = vmatpush1.bf16.msra.mxu0 %v4665
    %5675 = vmatprep.subr.bf16.mxu0 %v4658
    %5676 = vmatpush1.bf16.msra.mxu0 %v4657
    %5677 = vmatprep.subr.bf16.mxu0 %v4650
    %5678 = vmatpush1.bf16.msra.mxu0 %v4649
    %5679 = vmatprep.subr.bf16.mxu0 %v4642
    %5680 = vmatpush1.bf16.msra.mxu0 %v4641
    %5681 = vmatprep.subr.bf16.mxu0 %v4762
    %5682 = vmatpush2.bf16.msra.mxu0 %v4761
    %5683 = vmatprep.subr.bf16.mxu0 %v4754
    %5684 = vmatpush2.bf16.msra.mxu0 %v4753
    %5685 = vmatprep.subr.bf16.mxu0 %v4746
    %5686 = vmatpush2.bf16.msra.mxu0 %v4745
    %5687 = vmatprep.subr.bf16.mxu0 %v4738
    %5688 = vmatpush2.bf16.msra.mxu0 %v4737
    %5689 = vmatprep.subr.bf16.mxu0 %v4730
    %5690 = vmatpush2.bf16.msra.mxu0 %v4729
    %5691 = vmatprep.subr.bf16.mxu0 %v4722
    %5692 = vmatpush2.bf16.msra.mxu0 %v4721
    %5693 = vmatprep.subr.bf16.mxu0 %v4714
    %5694 = vmatpush2.bf16.msra.mxu0 %v4713
    %5695 = vmatprep.subr.bf16.mxu0 %v4706
    %5696 = vmatpush2.bf16.msra.mxu0 %v4705
    %5697 = vmatprep.mubr.bf16.mxu0 %v2540
    %5698 = vmatmul.mubr.bf16.gmra.mxu0 %v2539
    %v5699 = vpop.f32.mrf.mxu0
    %v5700 = vadd.f32 %v3068, %v5699
    %v5701 = vpop.f32.mrf.mxu0
    %v5702 = vadd.f32 %v3072, %v5701
    %v5703 = vpop.f32.mrf.mxu0
    %v5704 = vpop.f32.mrf.mxu0
    %5705 = vdwg.mxu0
    %5706 = vmatprep.subr.bf16.mxu0 %v4826
    %5707 = vmatpush1.bf16.msra.mxu0 %v4825
    %5708 = vmatprep.subr.bf16.mxu0 %v4818
    %5709 = vmatpush1.bf16.msra.mxu0 %v4817
    %5710 = vmatprep.subr.bf16.mxu0 %v4810
    %5711 = vmatpush1.bf16.msra.mxu0 %v4809
    %5712 = vmatprep.subr.bf16.mxu0 %v4802
    %5713 = vmatpush1.bf16.msra.mxu0 %v4801
    %5714 = vmatprep.subr.bf16.mxu0 %v4794
    %5715 = vmatpush1.bf16.msra.mxu0 %v4793
    %5716 = vmatprep.subr.bf16.mxu0 %v4786
    %5717 = vmatpush1.bf16.msra.mxu0 %v4785
    %5718 = vmatprep.subr.bf16.mxu0 %v4778
    %5719 = vmatpush1.bf16.msra.mxu0 %v4777
    %5720 = vmatprep.subr.bf16.mxu0 %v4770
    %5721 = vmatpush1.bf16.msra.mxu0 %v4769
    %5722 = vmatprep.subr.bf16.mxu0 %v4890
    %5723 = vmatpush2.bf16.msra.mxu0 %v4889
    %5724 = vmatprep.subr.bf16.mxu0 %v4882
    %5725 = vmatpush2.bf16.msra.mxu0 %v4881
    %5726 = vmatprep.subr.bf16.mxu0 %v4874
    %5727 = vmatpush2.bf16.msra.mxu0 %v4873
    %5728 = vmatprep.subr.bf16.mxu0 %v4866
    %5729 = vmatpush2.bf16.msra.mxu0 %v4865
    %5730 = vmatprep.subr.bf16.mxu0 %v4858
    %5731 = vmatpush2.bf16.msra.mxu0 %v4857
    %5732 = vmatprep.subr.bf16.mxu0 %v4850
    %5733 = vmatpush2.bf16.msra.mxu0 %v4849
    %5734 = vmatprep.subr.bf16.mxu0 %v4842
    %5735 = vmatpush2.bf16.msra.mxu0 %v4841
    %5736 = vmatprep.subr.bf16.mxu0 %v4834
    %5737 = vmatpush2.bf16.msra.mxu0 %v4833
    %5738 = vmatprep.mubr.bf16.mxu0 %v2542
    %5739 = vmatmul.mubr.bf16.gmra.mxu0 %v2541
    %v5740 = vpop.f32.mrf.mxu0
    %v5741 = vadd.f32 %v5700, %v5740
    %v5742 = vpop.f32.mrf.mxu0
    %v5743 = vadd.f32 %v5702, %v5742
    %v5744 = vpop.f32.mrf.mxu0
    %v5745 = vpop.f32.mrf.mxu0
    %5746 = vdwg.mxu0
    %5747 = vmatprep.subr.bf16.mxu0 %v4954
    %5748 = vmatpush1.bf16.msra.mxu0 %v4953
    %5749 = vmatprep.subr.bf16.mxu0 %v4946
    %5750 = vmatpush1.bf16.msra.mxu0 %v4945
    %5751 = vmatprep.subr.bf16.mxu0 %v4938
    %5752 = vmatpush1.bf16.msra.mxu0 %v4937
    %5753 = vmatprep.subr.bf16.mxu0 %v4930
    %5754 = vmatpush1.bf16.msra.mxu0 %v4929
    %5755 = vmatprep.subr.bf16.mxu0 %v4922
    %5756 = vmatpush1.bf16.msra.mxu0 %v4921
    %5757 = vmatprep.subr.bf16.mxu0 %v4914
    %5758 = vmatpush1.bf16.msra.mxu0 %v4913
    %5759 = vmatprep.subr.bf16.mxu0 %v4906
    %5760 = vmatpush1.bf16.msra.mxu0 %v4905
    %5761 = vmatprep.subr.bf16.mxu0 %v4898
    %5762 = vmatpush1.bf16.msra.mxu0 %v4897
    %5763 = vmatprep.subr.bf16.mxu0 %v5018
    %5764 = vmatpush2.bf16.msra.mxu0 %v5017
    %5765 = vmatprep.subr.bf16.mxu0 %v5010
    %5766 = vmatpush2.bf16.msra.mxu0 %v5009
    %5767 = vmatprep.subr.bf16.mxu0 %v5002
    %5768 = vmatpush2.bf16.msra.mxu0 %v5001
    %5769 = vmatprep.subr.bf16.mxu0 %v4994
    %5770 = vmatpush2.bf16.msra.mxu0 %v4993
    %5771 = vmatprep.subr.bf16.mxu0 %v4986
    %5772 = vmatpush2.bf16.msra.mxu0 %v4985
    %5773 = vmatprep.subr.bf16.mxu0 %v4978
    %5774 = vmatpush2.bf16.msra.mxu0 %v4977
    %5775 = vmatprep.subr.bf16.mxu0 %v4970
    %5776 = vmatpush2.bf16.msra.mxu0 %v4969
    %5777 = vmatprep.subr.bf16.mxu0 %v4962
    %5778 = vmatpush2.bf16.msra.mxu0 %v4961
    %5779 = vmatprep.mubr.bf16.mxu0 %v2544
    %5780 = vmatmul.mubr.bf16.gmra.mxu0 %v2543
    %v5781 = vpop.f32.mrf.mxu0
    %v5782 = vadd.f32 %v5741, %v5781
    %v5783 = vpop.f32.mrf.mxu0
    %v5784 = vadd.f32 %v5743, %v5783
    %v5785 = vpop.f32.mrf.mxu0
    %v5786 = vpop.f32.mrf.mxu0
    %5787 = vdwg.mxu0
    %5788 = vmatprep.subr.bf16.mxu0 %v5082
    %5789 = vmatpush1.bf16.msra.mxu0 %v5081
    %5790 = vmatprep.subr.bf16.mxu0 %v5074
    %5791 = vmatpush1.bf16.msra.mxu0 %v5073
    %5792 = vmatprep.subr.bf16.mxu0 %v5066
    %5793 = vmatpush1.bf16.msra.mxu0 %v5065
    %5794 = vmatprep.subr.bf16.mxu0 %v5058
    %5795 = vmatpush1.bf16.msra.mxu0 %v5057
    %5796 = vmatprep.subr.bf16.mxu0 %v5050
    %5797 = vmatpush1.bf16.msra.mxu0 %v5049
    %5798 = vmatprep.subr.bf16.mxu0 %v5042
    %5799 = vmatpush1.bf16.msra.mxu0 %v5041
    %5800 = vmatprep.subr.bf16.mxu0 %v5034
    %5801 = vmatpush1.bf16.msra.mxu0 %v5033
    %5802 = vmatprep.subr.bf16.mxu0 %v5026
    %5803 = vmatpush1.bf16.msra.mxu0 %v5025
    %5804 = vmatprep.subr.bf16.mxu0 %v5146
    %5805 = vmatpush2.bf16.msra.mxu0 %v5145
    %5806 = vmatprep.subr.bf16.mxu0 %v5138
    %5807 = vmatpush2.bf16.msra.mxu0 %v5137
    %5808 = vmatprep.subr.bf16.mxu0 %v5130
    %5809 = vmatpush2.bf16.msra.mxu0 %v5129
    %5810 = vmatprep.subr.bf16.mxu0 %v5122
    %5811 = vmatpush2.bf16.msra.mxu0 %v5121
    %5812 = vmatprep.subr.bf16.mxu0 %v5114
    %5813 = vmatpush2.bf16.msra.mxu0 %v5113
    %5814 = vmatprep.subr.bf16.mxu0 %v5106
    %5815 = vmatpush2.bf16.msra.mxu0 %v5105
    %5816 = vmatprep.subr.bf16.mxu0 %v5098
    %5817 = vmatpush2.bf16.msra.mxu0 %v5097
    %5818 = vmatprep.subr.bf16.mxu0 %v5090
    %5819 = vmatpush2.bf16.msra.mxu0 %v5089
    %5820 = vmatprep.mubr.bf16.mxu0 %v2546
    %5821 = vmatmul.mubr.bf16.gmra.mxu0 %v2545
    %v5822 = vpop.f32.mrf.mxu0
    %v5823 = vadd.f32 %v5782, %v5822
    %v5824 = vpop.f32.mrf.mxu0
    %v5825 = vadd.f32 %v5784, %v5824
    %v5826 = vpop.f32.mrf.mxu0
    %v5827 = vpop.f32.mrf.mxu0
    %5828 = vdwg.mxu0
    %5829 = vmatprep.subr.bf16.mxu0 %v4700
    %5830 = vmatpush1.bf16.msra.mxu0 %v4699
    %5831 = vmatprep.subr.bf16.mxu0 %v4692
    %5832 = vmatpush1.bf16.msra.mxu0 %v4691
    %5833 = vmatprep.subr.bf16.mxu0 %v4684
    %5834 = vmatpush1.bf16.msra.mxu0 %v4683
    %5835 = vmatprep.subr.bf16.mxu0 %v4676
    %5836 = vmatpush1.bf16.msra.mxu0 %v4675
    %5837 = vmatprep.subr.bf16.mxu0 %v4668
    %5838 = vmatpush1.bf16.msra.mxu0 %v4667
    %5839 = vmatprep.subr.bf16.mxu0 %v4660
    %5840 = vmatpush1.bf16.msra.mxu0 %v4659
    %5841 = vmatprep.subr.bf16.mxu0 %v4652
    %5842 = vmatpush1.bf16.msra.mxu0 %v4651
    %5843 = vmatprep.subr.bf16.mxu0 %v4644
    %5844 = vmatpush1.bf16.msra.mxu0 %v4643
    %5845 = vmatprep.subr.bf16.mxu0 %v4764
    %5846 = vmatpush2.bf16.msra.mxu0 %v4763
    %5847 = vmatprep.subr.bf16.mxu0 %v4756
    %5848 = vmatpush2.bf16.msra.mxu0 %v4755
    %5849 = vmatprep.subr.bf16.mxu0 %v4748
    %5850 = vmatpush2.bf16.msra.mxu0 %v4747
    %5851 = vmatprep.subr.bf16.mxu0 %v4740
    %5852 = vmatpush2.bf16.msra.mxu0 %v4739
    %5853 = vmatprep.subr.bf16.mxu0 %v4732
    %5854 = vmatpush2.bf16.msra.mxu0 %v4731
    %5855 = vmatprep.subr.bf16.mxu0 %v4724
    %5856 = vmatpush2.bf16.msra.mxu0 %v4723
    %5857 = vmatprep.subr.bf16.mxu0 %v4716
    %5858 = vmatpush2.bf16.msra.mxu0 %v4715
    %5859 = vmatprep.subr.bf16.mxu0 %v4708
    %5860 = vmatpush2.bf16.msra.mxu0 %v4707
    %5861 = vmatprep.mubr.bf16.mxu0 %v2540
    %5862 = vmatmul.mubr.bf16.gmra.mxu0 %v2539
    %v5863 = vpop.f32.mrf.mxu0
    %v5864 = vadd.f32 %v3076, %v5863
    %v5865 = vpop.f32.mrf.mxu0
    %v5866 = vadd.f32 %v3080, %v5865
    %v5867 = vpop.f32.mrf.mxu0
    %v5868 = vpop.f32.mrf.mxu0
    %5869 = vdwg.mxu0
    %5870 = vmatprep.subr.bf16.mxu0 %v4828
    %5871 = vmatpush1.bf16.msra.mxu0 %v4827
    %5872 = vmatprep.subr.bf16.mxu0 %v4820
    %5873 = vmatpush1.bf16.msra.mxu0 %v4819
    %5874 = vmatprep.subr.bf16.mxu0 %v4812
    %5875 = vmatpush1.bf16.msra.mxu0 %v4811
    %5876 = vmatprep.subr.bf16.mxu0 %v4804
    %5877 = vmatpush1.bf16.msra.mxu0 %v4803
    %5878 = vmatprep.subr.bf16.mxu0 %v4796
    %5879 = vmatpush1.bf16.msra.mxu0 %v4795
    %5880 = vmatprep.subr.bf16.mxu0 %v4788
    %5881 = vmatpush1.bf16.msra.mxu0 %v4787
    %5882 = vmatprep.subr.bf16.mxu0 %v4780
    %5883 = vmatpush1.bf16.msra.mxu0 %v4779
    %5884 = vmatprep.subr.bf16.mxu0 %v4772
    %5885 = vmatpush1.bf16.msra.mxu0 %v4771
    %5886 = vmatprep.subr.bf16.mxu0 %v4892
    %5887 = vmatpush2.bf16.msra.mxu0 %v4891
    %5888 = vmatprep.subr.bf16.mxu0 %v4884
    %5889 = vmatpush2.bf16.msra.mxu0 %v4883
    %5890 = vmatprep.subr.bf16.mxu0 %v4876
    %5891 = vmatpush2.bf16.msra.mxu0 %v4875
    %5892 = vmatprep.subr.bf16.mxu0 %v4868
    %5893 = vmatpush2.bf16.msra.mxu0 %v4867
    %5894 = vmatprep.subr.bf16.mxu0 %v4860
    %5895 = vmatpush2.bf16.msra.mxu0 %v4859
    %5896 = vmatprep.subr.bf16.mxu0 %v4852
    %5897 = vmatpush2.bf16.msra.mxu0 %v4851
    %5898 = vmatprep.subr.bf16.mxu0 %v4844
    %5899 = vmatpush2.bf16.msra.mxu0 %v4843
    %5900 = vmatprep.subr.bf16.mxu0 %v4836
    %5901 = vmatpush2.bf16.msra.mxu0 %v4835
    %5902 = vmatprep.mubr.bf16.mxu0 %v2542
    %5903 = vmatmul.mubr.bf16.gmra.mxu0 %v2541
    %v5904 = vpop.f32.mrf.mxu0
    %v5905 = vadd.f32 %v5864, %v5904
    %v5906 = vpop.f32.mrf.mxu0
    %v5907 = vadd.f32 %v5866, %v5906
    %v5908 = vpop.f32.mrf.mxu0
    %v5909 = vpop.f32.mrf.mxu0
    %5910 = vdwg.mxu0
    %5911 = vmatprep.subr.bf16.mxu0 %v4956
    %5912 = vmatpush1.bf16.msra.mxu0 %v4955
    %5913 = vmatprep.subr.bf16.mxu0 %v4948
    %5914 = vmatpush1.bf16.msra.mxu0 %v4947
    %5915 = vmatprep.subr.bf16.mxu0 %v4940
    %5916 = vmatpush1.bf16.msra.mxu0 %v4939
    %5917 = vmatprep.subr.bf16.mxu0 %v4932
    %5918 = vmatpush1.bf16.msra.mxu0 %v4931
    %5919 = vmatprep.subr.bf16.mxu0 %v4924
    %5920 = vmatpush1.bf16.msra.mxu0 %v4923
    %5921 = vmatprep.subr.bf16.mxu0 %v4916
    %5922 = vmatpush1.bf16.msra.mxu0 %v4915
    %5923 = vmatprep.subr.bf16.mxu0 %v4908
    %5924 = vmatpush1.bf16.msra.mxu0 %v4907
    %5925 = vmatprep.subr.bf16.mxu0 %v4900
    %5926 = vmatpush1.bf16.msra.mxu0 %v4899
    %5927 = vmatprep.subr.bf16.mxu0 %v5020
    %5928 = vmatpush2.bf16.msra.mxu0 %v5019
    %5929 = vmatprep.subr.bf16.mxu0 %v5012
    %5930 = vmatpush2.bf16.msra.mxu0 %v5011
    %5931 = vmatprep.subr.bf16.mxu0 %v5004
    %5932 = vmatpush2.bf16.msra.mxu0 %v5003
    %5933 = vmatprep.subr.bf16.mxu0 %v4996
    %5934 = vmatpush2.bf16.msra.mxu0 %v4995
    %5935 = vmatprep.subr.bf16.mxu0 %v4988
    %5936 = vmatpush2.bf16.msra.mxu0 %v4987
    %5937 = vmatprep.subr.bf16.mxu0 %v4980
    %5938 = vmatpush2.bf16.msra.mxu0 %v4979
    %5939 = vmatprep.subr.bf16.mxu0 %v4972
    %5940 = vmatpush2.bf16.msra.mxu0 %v4971
    %5941 = vmatprep.subr.bf16.mxu0 %v4964
    %5942 = vmatpush2.bf16.msra.mxu0 %v4963
    %5943 = vmatprep.mubr.bf16.mxu0 %v2544
    %5944 = vmatmul.mubr.bf16.gmra.mxu0 %v2543
    %v5945 = vpop.f32.mrf.mxu0
    %v5946 = vadd.f32 %v5905, %v5945
    %v5947 = vpop.f32.mrf.mxu0
    %v5948 = vadd.f32 %v5907, %v5947
    %v5949 = vpop.f32.mrf.mxu0
    %v5950 = vpop.f32.mrf.mxu0
    %5951 = vdwg.mxu0
    %5952 = vmatprep.subr.bf16.mxu0 %v5084
    %5953 = vmatpush1.bf16.msra.mxu0 %v5083
    %5954 = vmatprep.subr.bf16.mxu0 %v5076
    %5955 = vmatpush1.bf16.msra.mxu0 %v5075
    %5956 = vmatprep.subr.bf16.mxu0 %v5068
    %5957 = vmatpush1.bf16.msra.mxu0 %v5067
    %5958 = vmatprep.subr.bf16.mxu0 %v5060
    %5959 = vmatpush1.bf16.msra.mxu0 %v5059
    %5960 = vmatprep.subr.bf16.mxu0 %v5052
    %5961 = vmatpush1.bf16.msra.mxu0 %v5051
    %5962 = vmatprep.subr.bf16.mxu0 %v5044
    %5963 = vmatpush1.bf16.msra.mxu0 %v5043
    %5964 = vmatprep.subr.bf16.mxu0 %v5036
    %5965 = vmatpush1.bf16.msra.mxu0 %v5035
    %5966 = vmatprep.subr.bf16.mxu0 %v5028
    %5967 = vmatpush1.bf16.msra.mxu0 %v5027
    %5968 = vmatprep.subr.bf16.mxu0 %v5148
    %5969 = vmatpush2.bf16.msra.mxu0 %v5147
    %5970 = vmatprep.subr.bf16.mxu0 %v5140
    %5971 = vmatpush2.bf16.msra.mxu0 %v5139
    %5972 = vmatprep.subr.bf16.mxu0 %v5132
    %5973 = vmatpush2.bf16.msra.mxu0 %v5131
    %5974 = vmatprep.subr.bf16.mxu0 %v5124
    %5975 = vmatpush2.bf16.msra.mxu0 %v5123
    %5976 = vmatprep.subr.bf16.mxu0 %v5116
    %5977 = vmatpush2.bf16.msra.mxu0 %v5115
    %5978 = vmatprep.subr.bf16.mxu0 %v5108
    %5979 = vmatpush2.bf16.msra.mxu0 %v5107
    %5980 = vmatprep.subr.bf16.mxu0 %v5100
    %5981 = vmatpush2.bf16.msra.mxu0 %v5099
    %5982 = vmatprep.subr.bf16.mxu0 %v5092
    %5983 = vmatpush2.bf16.msra.mxu0 %v5091
    %5984 = vmatprep.mubr.bf16.mxu0 %v2546
    %5985 = vmatmul.mubr.bf16.gmra.mxu0 %v2545
    %v5986 = vpop.f32.mrf.mxu0
    %v5987 = vadd.f32 %v5946, %v5986
    %v5988 = vpop.f32.mrf.mxu0
    %v5989 = vadd.f32 %v5948, %v5988
    %v5990 = vpop.f32.mrf.mxu0
    %v5991 = vpop.f32.mrf.mxu0
    %5992 = vdwg.mxu0
    %5993 = vmatprep.subr.bf16.mxu0 %v4702
    %5994 = vmatpush1.bf16.msra.mxu0 %v4701
    %5995 = vmatprep.subr.bf16.mxu0 %v4694
    %5996 = vmatpush1.bf16.msra.mxu0 %v4693
    %5997 = vmatprep.subr.bf16.mxu0 %v4686
    %5998 = vmatpush1.bf16.msra.mxu0 %v4685
    %5999 = vmatprep.subr.bf16.mxu0 %v4678
    %6000 = vmatpush1.bf16.msra.mxu0 %v4677
    %6001 = vmatprep.subr.bf16.mxu0 %v4670
    %6002 = vmatpush1.bf16.msra.mxu0 %v4669
    %6003 = vmatprep.subr.bf16.mxu0 %v4662
    %6004 = vmatpush1.bf16.msra.mxu0 %v4661
    %6005 = vmatprep.subr.bf16.mxu0 %v4654
    %6006 = vmatpush1.bf16.msra.mxu0 %v4653
    %6007 = vmatprep.subr.bf16.mxu0 %v4646
    %6008 = vmatpush1.bf16.msra.mxu0 %v4645
    %6009 = vmatprep.subr.bf16.mxu0 %v4766
    %6010 = vmatpush2.bf16.msra.mxu0 %v4765
    %6011 = vmatprep.subr.bf16.mxu0 %v4758
    %6012 = vmatpush2.bf16.msra.mxu0 %v4757
    %6013 = vmatprep.subr.bf16.mxu0 %v4750
    %6014 = vmatpush2.bf16.msra.mxu0 %v4749
    %6015 = vmatprep.subr.bf16.mxu0 %v4742
    %6016 = vmatpush2.bf16.msra.mxu0 %v4741
    %6017 = vmatprep.subr.bf16.mxu0 %v4734
    %6018 = vmatpush2.bf16.msra.mxu0 %v4733
    %6019 = vmatprep.subr.bf16.mxu0 %v4726
    %6020 = vmatpush2.bf16.msra.mxu0 %v4725
    %6021 = vmatprep.subr.bf16.mxu0 %v4718
    %6022 = vmatpush2.bf16.msra.mxu0 %v4717
    %6023 = vmatprep.subr.bf16.mxu0 %v4710
    %6024 = vmatpush2.bf16.msra.mxu0 %v4709
    %6025 = vmatprep.mubr.bf16.mxu0 %v2540
    %6026 = vmatmul.mubr.bf16.gmra.mxu0 %v2539
    %v6027 = vpop.f32.mrf.mxu0
    %v6028 = vadd.f32 %v3084, %v6027
    %v6029 = vpop.f32.mrf.mxu0
    %v6030 = vadd.f32 %v3088, %v6029
    %v6031 = vpop.f32.mrf.mxu0
    %v6032 = vpop.f32.mrf.mxu0
    %6033 = vdwg.mxu0
    %6034 = vmatprep.subr.bf16.mxu0 %v4830
    %6035 = vmatpush1.bf16.msra.mxu0 %v4829
    %6036 = vmatprep.subr.bf16.mxu0 %v4822
    %6037 = vmatpush1.bf16.msra.mxu0 %v4821
    %6038 = vmatprep.subr.bf16.mxu0 %v4814
    %6039 = vmatpush1.bf16.msra.mxu0 %v4813
    %6040 = vmatprep.subr.bf16.mxu0 %v4806
    %6041 = vmatpush1.bf16.msra.mxu0 %v4805
    %6042 = vmatprep.subr.bf16.mxu0 %v4798
    %6043 = vmatpush1.bf16.msra.mxu0 %v4797
    %6044 = vmatprep.subr.bf16.mxu0 %v4790
    %6045 = vmatpush1.bf16.msra.mxu0 %v4789
    %6046 = vmatprep.subr.bf16.mxu0 %v4782
    %6047 = vmatpush1.bf16.msra.mxu0 %v4781
    %6048 = vmatprep.subr.bf16.mxu0 %v4774
    %6049 = vmatpush1.bf16.msra.mxu0 %v4773
    %6050 = vmatprep.subr.bf16.mxu0 %v4894
    %6051 = vmatpush2.bf16.msra.mxu0 %v4893
    %6052 = vmatprep.subr.bf16.mxu0 %v4886
    %6053 = vmatpush2.bf16.msra.mxu0 %v4885
    %6054 = vmatprep.subr.bf16.mxu0 %v4878
    %6055 = vmatpush2.bf16.msra.mxu0 %v4877
    %6056 = vmatprep.subr.bf16.mxu0 %v4870
    %6057 = vmatpush2.bf16.msra.mxu0 %v4869
    %6058 = vmatprep.subr.bf16.mxu0 %v4862
    %6059 = vmatpush2.bf16.msra.mxu0 %v4861
    %6060 = vmatprep.subr.bf16.mxu0 %v4854
    %6061 = vmatpush2.bf16.msra.mxu0 %v4853
    %6062 = vmatprep.subr.bf16.mxu0 %v4846
    %6063 = vmatpush2.bf16.msra.mxu0 %v4845
    %6064 = vmatprep.subr.bf16.mxu0 %v4838
    %6065 = vmatpush2.bf16.msra.mxu0 %v4837
    %6066 = vmatprep.mubr.bf16.mxu0 %v2542
    %6067 = vmatmul.mubr.bf16.gmra.mxu0 %v2541
    %v6068 = vpop.f32.mrf.mxu0
    %v6069 = vadd.f32 %v6028, %v6068
    %v6070 = vpop.f32.mrf.mxu0
    %v6071 = vadd.f32 %v6030, %v6070
    %v6072 = vpop.f32.mrf.mxu0
    %v6073 = vpop.f32.mrf.mxu0
    %6074 = vdwg.mxu0
    %6075 = vmatprep.subr.bf16.mxu0 %v4958
    %6076 = vmatpush1.bf16.msra.mxu0 %v4957
    %6077 = vmatprep.subr.bf16.mxu0 %v4950
    %6078 = vmatpush1.bf16.msra.mxu0 %v4949
    %6079 = vmatprep.subr.bf16.mxu0 %v4942
    %6080 = vmatpush1.bf16.msra.mxu0 %v4941
    %6081 = vmatprep.subr.bf16.mxu0 %v4934
    %6082 = vmatpush1.bf16.msra.mxu0 %v4933
    %6083 = vmatprep.subr.bf16.mxu0 %v4926
    %6084 = vmatpush1.bf16.msra.mxu0 %v4925
    %6085 = vmatprep.subr.bf16.mxu0 %v4918
    %6086 = vmatpush1.bf16.msra.mxu0 %v4917
    %6087 = vmatprep.subr.bf16.mxu0 %v4910
    %6088 = vmatpush1.bf16.msra.mxu0 %v4909
    %6089 = vmatprep.subr.bf16.mxu0 %v4902
    %6090 = vmatpush1.bf16.msra.mxu0 %v4901
    %6091 = vmatprep.subr.bf16.mxu0 %v5022
    %6092 = vmatpush2.bf16.msra.mxu0 %v5021
    %6093 = vmatprep.subr.bf16.mxu0 %v5014
    %6094 = vmatpush2.bf16.msra.mxu0 %v5013
    %6095 = vmatprep.subr.bf16.mxu0 %v5006
    %6096 = vmatpush2.bf16.msra.mxu0 %v5005
    %6097 = vmatprep.subr.bf16.mxu0 %v4998
    %6098 = vmatpush2.bf16.msra.mxu0 %v4997
    %6099 = vmatprep.subr.bf16.mxu0 %v4990
    %6100 = vmatpush2.bf16.msra.mxu0 %v4989
    %6101 = vmatprep.subr.bf16.mxu0 %v4982
    %6102 = vmatpush2.bf16.msra.mxu0 %v4981
    %6103 = vmatprep.subr.bf16.mxu0 %v4974
    %6104 = vmatpush2.bf16.msra.mxu0 %v4973
    %6105 = vmatprep.subr.bf16.mxu0 %v4966
    %6106 = vmatpush2.bf16.msra.mxu0 %v4965
    %6107 = vmatprep.mubr.bf16.mxu0 %v2544
    %6108 = vmatmul.mubr.bf16.gmra.mxu0 %v2543
    %v6109 = vpop.f32.mrf.mxu0
    %v6110 = vadd.f32 %v6069, %v6109
    %v6111 = vpop.f32.mrf.mxu0
    %v6112 = vadd.f32 %v6071, %v6111
    %v6113 = vpop.f32.mrf.mxu0
    %v6114 = vpop.f32.mrf.mxu0
    %6115 = vdwg.mxu0
    %6116 = vmatprep.subr.bf16.mxu0 %v5086
    %6117 = vmatpush1.bf16.msra.mxu0 %v5085
    %6118 = vmatprep.subr.bf16.mxu0 %v5078
    %6119 = vmatpush1.bf16.msra.mxu0 %v5077
    %6120 = vmatprep.subr.bf16.mxu0 %v5070
    %6121 = vmatpush1.bf16.msra.mxu0 %v5069
    %6122 = vmatprep.subr.bf16.mxu0 %v5062
    %6123 = vmatpush1.bf16.msra.mxu0 %v5061
    %6124 = vmatprep.subr.bf16.mxu0 %v5054
    %6125 = vmatpush1.bf16.msra.mxu0 %v5053
    %6126 = vmatprep.subr.bf16.mxu0 %v5046
    %6127 = vmatpush1.bf16.msra.mxu0 %v5045
    %6128 = vmatprep.subr.bf16.mxu0 %v5038
    %6129 = vmatpush1.bf16.msra.mxu0 %v5037
    %6130 = vmatprep.subr.bf16.mxu0 %v5030
    %6131 = vmatpush1.bf16.msra.mxu0 %v5029
    %6132 = vmatprep.subr.bf16.mxu0 %v5150
    %6133 = vmatpush2.bf16.msra.mxu0 %v5149
    %6134 = vmatprep.subr.bf16.mxu0 %v5142
    %6135 = vmatpush2.bf16.msra.mxu0 %v5141
    %6136 = vmatprep.subr.bf16.mxu0 %v5134
    %6137 = vmatpush2.bf16.msra.mxu0 %v5133
    %6138 = vmatprep.subr.bf16.mxu0 %v5126
    %6139 = vmatpush2.bf16.msra.mxu0 %v5125
    %6140 = vmatprep.subr.bf16.mxu0 %v5118
    %6141 = vmatpush2.bf16.msra.mxu0 %v5117
    %6142 = vmatprep.subr.bf16.mxu0 %v5110
    %6143 = vmatpush2.bf16.msra.mxu0 %v5109
    %6144 = vmatprep.subr.bf16.mxu0 %v5102
    %6145 = vmatpush2.bf16.msra.mxu0 %v5101
    %6146 = vmatprep.subr.bf16.mxu0 %v5094
    %6147 = vmatpush2.bf16.msra.mxu0 %v5093
    %6148 = vmatprep.mubr.bf16.mxu0 %v2546
    %6149 = vmatmul.mubr.bf16.gmra.mxu0 %v2545
    %v6150 = vpop.f32.mrf.mxu0
    %v6151 = vadd.f32 %v6110, %v6150
    %v6152 = vpop.f32.mrf.mxu0
    %v6153 = vadd.f32 %v6112, %v6152
    %v6154 = vpop.f32.mrf.mxu0
    %v6155 = vpop.f32.mrf.mxu0
    %6156 = vdwg.mxu0
    %6157 = vmatprep.subr.bf16.mxu0 %v4704
    %6158 = vmatpush1.bf16.msra.mxu0 %v4703
    %6159 = vmatprep.subr.bf16.mxu0 %v4696
    %6160 = vmatpush1.bf16.msra.mxu0 %v4695
    %6161 = vmatprep.subr.bf16.mxu0 %v4688
    %6162 = vmatpush1.bf16.msra.mxu0 %v4687
    %6163 = vmatprep.subr.bf16.mxu0 %v4680
    %6164 = vmatpush1.bf16.msra.mxu0 %v4679
    %6165 = vmatprep.subr.bf16.mxu0 %v4672
    %6166 = vmatpush1.bf16.msra.mxu0 %v4671
    %6167 = vmatprep.subr.bf16.mxu0 %v4664
    %6168 = vmatpush1.bf16.msra.mxu0 %v4663
    %6169 = vmatprep.subr.bf16.mxu0 %v4656
    %6170 = vmatpush1.bf16.msra.mxu0 %v4655
    %6171 = vmatprep.subr.bf16.mxu0 %v4648
    %6172 = vmatpush1.bf16.msra.mxu0 %v4647
    %6173 = vmatprep.subr.bf16.mxu0 %v4768
    %6174 = vmatpush2.bf16.msra.mxu0 %v4767
    %6175 = vmatprep.subr.bf16.mxu0 %v4760
    %6176 = vmatpush2.bf16.msra.mxu0 %v4759
    %6177 = vmatprep.subr.bf16.mxu0 %v4752
    %6178 = vmatpush2.bf16.msra.mxu0 %v4751
    %6179 = vmatprep.subr.bf16.mxu0 %v4744
    %6180 = vmatpush2.bf16.msra.mxu0 %v4743
    %6181 = vmatprep.subr.bf16.mxu0 %v4736
    %6182 = vmatpush2.bf16.msra.mxu0 %v4735
    %6183 = vmatprep.subr.bf16.mxu0 %v4728
    %6184 = vmatpush2.bf16.msra.mxu0 %v4727
    %6185 = vmatprep.subr.bf16.mxu0 %v4720
    %6186 = vmatpush2.bf16.msra.mxu0 %v4719
    %6187 = vmatprep.subr.bf16.mxu0 %v4712
    %6188 = vmatpush2.bf16.msra.mxu0 %v4711
    %6189 = vmatprep.mubr.bf16.mxu0 %v2540
    %6190 = vmatmul.mubr.bf16.gmra.mxu0 %v2539
    %v6191 = vpop.f32.mrf.mxu0
    %v6192 = vadd.f32 %v3092, %v6191
    %v6193 = vpop.f32.mrf.mxu0
    %v6194 = vadd.f32 %v3096, %v6193
    %v6195 = vpop.f32.mrf.mxu0
    %v6196 = vpop.f32.mrf.mxu0
    %6197 = vdwg.mxu0
    %6198 = vmatprep.subr.bf16.mxu0 %v4832
    %6199 = vmatpush1.bf16.msra.mxu0 %v4831
    %6200 = vmatprep.subr.bf16.mxu0 %v4824
    %6201 = vmatpush1.bf16.msra.mxu0 %v4823
    %6202 = vmatprep.subr.bf16.mxu0 %v4816
    %6203 = vmatpush1.bf16.msra.mxu0 %v4815
    %6204 = vmatprep.subr.bf16.mxu0 %v4808
    %6205 = vmatpush1.bf16.msra.mxu0 %v4807
    %6206 = vmatprep.subr.bf16.mxu0 %v4800
    %6207 = vmatpush1.bf16.msra.mxu0 %v4799
    %6208 = vmatprep.subr.bf16.mxu0 %v4792
    %6209 = vmatpush1.bf16.msra.mxu0 %v4791
    %6210 = vmatprep.subr.bf16.mxu0 %v4784
    %6211 = vmatpush1.bf16.msra.mxu0 %v4783
    %6212 = vmatprep.subr.bf16.mxu0 %v4776
    %6213 = vmatpush1.bf16.msra.mxu0 %v4775
    %6214 = vmatprep.subr.bf16.mxu0 %v4896
    %6215 = vmatpush2.bf16.msra.mxu0 %v4895
    %6216 = vmatprep.subr.bf16.mxu0 %v4888
    %6217 = vmatpush2.bf16.msra.mxu0 %v4887
    %6218 = vmatprep.subr.bf16.mxu0 %v4880
    %6219 = vmatpush2.bf16.msra.mxu0 %v4879
    %6220 = vmatprep.subr.bf16.mxu0 %v4872
    %6221 = vmatpush2.bf16.msra.mxu0 %v4871
    %6222 = vmatprep.subr.bf16.mxu0 %v4864
    %6223 = vmatpush2.bf16.msra.mxu0 %v4863
    %6224 = vmatprep.subr.bf16.mxu0 %v4856
    %6225 = vmatpush2.bf16.msra.mxu0 %v4855
    %6226 = vmatprep.subr.bf16.mxu0 %v4848
    %6227 = vmatpush2.bf16.msra.mxu0 %v4847
    %6228 = vmatprep.subr.bf16.mxu0 %v4840
    %6229 = vmatpush2.bf16.msra.mxu0 %v4839
    %6230 = vmatprep.mubr.bf16.mxu0 %v2542
    %6231 = vmatmul.mubr.bf16.gmra.mxu0 %v2541
    %v6232 = vpop.f32.mrf.mxu0
    %v6233 = vadd.f32 %v6192, %v6232
    %v6234 = vpop.f32.mrf.mxu0
    %v6235 = vadd.f32 %v6194, %v6234
    %v6236 = vpop.f32.mrf.mxu0
    %v6237 = vpop.f32.mrf.mxu0
    %6238 = vdwg.mxu0
    %6239 = vmatprep.subr.bf16.mxu0 %v4960
    %6240 = vmatpush1.bf16.msra.mxu0 %v4959
    %6241 = vmatprep.subr.bf16.mxu0 %v4952
    %6242 = vmatpush1.bf16.msra.mxu0 %v4951
    %6243 = vmatprep.subr.bf16.mxu0 %v4944
    %6244 = vmatpush1.bf16.msra.mxu0 %v4943
    %6245 = vmatprep.subr.bf16.mxu0 %v4936
    %6246 = vmatpush1.bf16.msra.mxu0 %v4935
    %6247 = vmatprep.subr.bf16.mxu0 %v4928
    %6248 = vmatpush1.bf16.msra.mxu0 %v4927
    %6249 = vmatprep.subr.bf16.mxu0 %v4920
    %6250 = vmatpush1.bf16.msra.mxu0 %v4919
    %6251 = vmatprep.subr.bf16.mxu0 %v4912
    %6252 = vmatpush1.bf16.msra.mxu0 %v4911
    %6253 = vmatprep.subr.bf16.mxu0 %v4904
    %6254 = vmatpush1.bf16.msra.mxu0 %v4903
    %6255 = vmatprep.subr.bf16.mxu0 %v5024
    %6256 = vmatpush2.bf16.msra.mxu0 %v5023
    %6257 = vmatprep.subr.bf16.mxu0 %v5016
    %6258 = vmatpush2.bf16.msra.mxu0 %v5015
    %6259 = vmatprep.subr.bf16.mxu0 %v5008
    %6260 = vmatpush2.bf16.msra.mxu0 %v5007
    %6261 = vmatprep.subr.bf16.mxu0 %v5000
    %6262 = vmatpush2.bf16.msra.mxu0 %v4999
    %6263 = vmatprep.subr.bf16.mxu0 %v4992
    %6264 = vmatpush2.bf16.msra.mxu0 %v4991
    %6265 = vmatprep.subr.bf16.mxu0 %v4984
    %6266 = vmatpush2.bf16.msra.mxu0 %v4983
    %6267 = vmatprep.subr.bf16.mxu0 %v4976
    %6268 = vmatpush2.bf16.msra.mxu0 %v4975
    %6269 = vmatprep.subr.bf16.mxu0 %v4968
    %6270 = vmatpush2.bf16.msra.mxu0 %v4967
    %6271 = vmatprep.mubr.bf16.mxu0 %v2544
    %6272 = vmatmul.mubr.bf16.gmra.mxu0 %v2543
    %v6273 = vpop.f32.mrf.mxu0
    %v6274 = vadd.f32 %v6233, %v6273
    %v6275 = vpop.f32.mrf.mxu0
    %v6276 = vadd.f32 %v6235, %v6275
    %v6277 = vpop.f32.mrf.mxu0
    %v6278 = vpop.f32.mrf.mxu0
    %6279 = vdwg.mxu0
    %6280 = vmatprep.subr.bf16.mxu0 %v5088
    %6281 = vmatpush1.bf16.msra.mxu0 %v5087
    %6282 = vmatprep.subr.bf16.mxu0 %v5080
    %6283 = vmatpush1.bf16.msra.mxu0 %v5079
    %6284 = vmatprep.subr.bf16.mxu0 %v5072
    %6285 = vmatpush1.bf16.msra.mxu0 %v5071
    %6286 = vmatprep.subr.bf16.mxu0 %v5064
    %6287 = vmatpush1.bf16.msra.mxu0 %v5063
    %6288 = vmatprep.subr.bf16.mxu0 %v5056
    %6289 = vmatpush1.bf16.msra.mxu0 %v5055
    %6290 = vmatprep.subr.bf16.mxu0 %v5048
    %6291 = vmatpush1.bf16.msra.mxu0 %v5047
    %6292 = vmatprep.subr.bf16.mxu0 %v5040
    %6293 = vmatpush1.bf16.msra.mxu0 %v5039
    %6294 = vmatprep.subr.bf16.mxu0 %v5032
    %6295 = vmatpush1.bf16.msra.mxu0 %v5031
    %6296 = vmatprep.subr.bf16.mxu0 %v5152
    %6297 = vmatpush2.bf16.msra.mxu0 %v5151
    %6298 = vmatprep.subr.bf16.mxu0 %v5144
    %6299 = vmatpush2.bf16.msra.mxu0 %v5143
    %6300 = vmatprep.subr.bf16.mxu0 %v5136
    %6301 = vmatpush2.bf16.msra.mxu0 %v5135
    %6302 = vmatprep.subr.bf16.mxu0 %v5128
    %6303 = vmatpush2.bf16.msra.mxu0 %v5127
    %6304 = vmatprep.subr.bf16.mxu0 %v5120
    %6305 = vmatpush2.bf16.msra.mxu0 %v5119
    %6306 = vmatprep.subr.bf16.mxu0 %v5112
    %6307 = vmatpush2.bf16.msra.mxu0 %v5111
    %6308 = vmatprep.subr.bf16.mxu0 %v5104
    %6309 = vmatpush2.bf16.msra.mxu0 %v5103
    %6310 = vmatprep.subr.bf16.mxu0 %v5096
    %6311 = vmatpush2.bf16.msra.mxu0 %v5095
    %6312 = vmatprep.mubr.bf16.mxu0 %v2546
    %6313 = vmatmul.mubr.bf16.gmra.mxu0 %v2545
    %v6314 = vpop.f32.mrf.mxu0
    %v6315 = vadd.f32 %v6274, %v6314
    %v6316 = vpop.f32.mrf.mxu0
    %v6317 = vadd.f32 %v6276, %v6316
    %v6318 = vpop.f32.mrf.mxu0
    %v6319 = vpop.f32.mrf.mxu0
    %6320 = vdwg.mxu0
    %vm6321 = vcmp.ge.f32.partialorder %v5823, 0.0
    %vm6322 = vcmp.ge.f32.partialorder %v5825, 0.0
    %vm6323 = vcmp.ge.f32.partialorder %v5987, 0.0
    %vm6324 = vcmp.ge.f32.partialorder %v5989, 0.0
    %vm6325 = vcmp.ge.f32.partialorder %v6151, 0.0
    %vm6326 = vcmp.ge.f32.partialorder %v6153, 0.0
    %vm6327 = vcmp.ge.f32.partialorder %v6315, 0.0
    %vm6328 = vcmp.ge.f32.partialorder %v6317, 0.0
    %v6329 = vmul.f32 %v5823, 0.01
    %v6330 = vmul.f32 %v5825, 0.01
    %v6331 = vmul.f32 %v5987, 0.01
    %v6332 = vmul.f32 %v5989, 0.01
    %v6333 = vmul.f32 %v6151, 0.01
    %v6334 = vmul.f32 %v6153, 0.01
    %v6335 = vmul.f32 %v6315, 0.01
    %v6336 = vmul.f32 %v6317, 0.01
    %v6337 = vsel %vm6321, %v5823, %v6329
    %v6338 = vsel %vm6322, %v5825, %v6330
    %v6339 = vsel %vm6323, %v5987, %v6331
    %v6340 = vsel %vm6324, %v5989, %v6332
    %v6341 = vsel %vm6325, %v6151, %v6333
    %v6342 = vsel %vm6326, %v6153, %v6334
    %v6343 = vsel %vm6327, %v6315, %v6335
    %v6344 = vsel %vm6328, %v6317, %v6336
    %v6345 = vmul.f32 %v6337, 0.5
    %v6346 = vmul.f32 %v6338, 0.5
    %v6347 = vmul.f32 %v6339, 0.5
    %v6348 = vmul.f32 %v6340, 0.5
    %v6349 = vmul.f32 %v6341, 0.5
    %v6350 = vmul.f32 %v6342, 0.5
    %v6351 = vmul.f32 %v6343, 0.5
    %v6352 = vmul.f32 %v6344, 0.5
    %v6353 = vxor.u32 %v6345, 2147483648
    %v6354 = vxor.u32 %v6346, 2147483648
    %v6355 = vxor.u32 %v6347, 2147483648
    %v6356 = vxor.u32 %v6348, 2147483648
    %v6357 = vxor.u32 %v6349, 2147483648
    %v6358 = vxor.u32 %v6350, 2147483648
    %v6359 = vxor.u32 %v6351, 2147483648
    %v6360 = vxor.u32 %v6352, 2147483648
    %v6361 = vmul.f32 %v6353, 1.442695
    %v6362 = vpow.pop %v6361
    %v6363 = vmul.f32 %v6354, 1.442695
    %v6364 = vpow.pop %v6363
    %v6365 = vmul.f32 %v6355, 1.442695
    %v6366 = vpow.pop %v6365
    %v6367 = vmul.f32 %v6356, 1.442695
    %v6368 = vpow.pop %v6367
    %v6369 = vmul.f32 %v6357, 1.442695
    %v6370 = vpow.pop %v6369
    %v6371 = vmul.f32 %v6358, 1.442695
    %v6372 = vpow.pop %v6371
    %v6373 = vmul.f32 %v6359, 1.442695
    %v6374 = vpow.pop %v6373
    %v6375 = vmul.f32 %v6360, 1.442695
    %v6376 = vpow.pop %v6375
    %v6377 = vadd.f32 %v6362, 1.0
    %v6378 = vadd.f32 %v6364, 1.0
    %v6379 = vadd.f32 %v6366, 1.0
    %v6380 = vadd.f32 %v6368, 1.0
    %v6381 = vadd.f32 %v6370, 1.0
    %v6382 = vadd.f32 %v6372, 1.0
    %v6383 = vadd.f32 %v6374, 1.0
    %v6384 = vadd.f32 %v6376, 1.0
    %v6385 = vrcp.pop %v6377
    %v6386 = vmul.f32 1.0, %v6385
    %v6387 = vrcp.pop %v6378
    %v6388 = vmul.f32 1.0, %v6387
    %v6389 = vrcp.pop %v6379
    %v6390 = vmul.f32 1.0, %v6389
    %v6391 = vrcp.pop %v6380
    %v6392 = vmul.f32 1.0, %v6391
    %v6393 = vrcp.pop %v6381
    %v6394 = vmul.f32 1.0, %v6393
    %v6395 = vrcp.pop %v6382
    %v6396 = vmul.f32 1.0, %v6395
    %v6397 = vrcp.pop %v6383
    %v6398 = vmul.f32 1.0, %v6397
    %v6399 = vrcp.pop %v6384
    %v6400 = vmul.f32 1.0, %v6399
    %6401 = vst [vmem:[%s7] sm:$0xff] %v6386
    %6402 = vst [vmem:[%s7 + $0x8] sm:$0xff] %v6388
    %6403 = vst [vmem:[%s7 + $0x10] sm:$0xff] %v6390
    %6404 = vst [vmem:[%s7 + $0x18] sm:$0xff] %v6392
    %6405 = vst [vmem:[%s7 + $0x20] sm:$0xff] %v6394
    %6406 = vst [vmem:[%s7 + $0x28] sm:$0xff] %v6396
    %6407 = vst [vmem:[%s7 + $0x30] sm:$0xff] %v6398
    %6408 = vst [vmem:[%s7 + $0x38] sm:$0xff] %v6400
    // Predicated region
    $region50: #{phase_retrieval_predictor_forward.1} parent=1 // pred_check
      _
    $region51: #{phase_retrieval_predictor_forward.1} parent=1 // pred_check_branch
      %6410 = sbr.rel (0) target = $region53
    $region52: #{phase_retrieval_predictor_forward.1} parent=1 // pred_region
      _
    $region53: #{phase_retrieval_predictor_forward.1} parent=1 // pred_fallthru
      _
    // Predicated region
    $region54: #{phase_retrieval_predictor_forward.1} parent=1 // pred_check
      _
    $region55: #{phase_retrieval_predictor_forward.1} parent=1 // pred_check_branch
      %6412 = sbr.rel (0) target = $region57
    $region56: #{phase_retrieval_predictor_forward.1} parent=1 // pred_region
      _
    $region57: #{phase_retrieval_predictor_forward.1} parent=1 // pred_fallthru
      _
    %6413 = vsyncpa [#allocation5], 1
    %6414 = vsyncpa [#allocation7], 1
    %6415 = vsyncpa [#allocation10], 1
  %6416 = vsyncmov [#allocation3]
  %s6417 = vpop.sfrf %6416
  %p6418 = scmp.eq.s32.totalorder %s6417, 0
  %p6419 = pneg %p6418
  %6421 = shalt.err (%p6419)

</llo_original>
